<compile_context>
chip_gen: v7x
topology: tpu7x:2x2x1
jax: 0.10.0
libtpu: 0.0.40
codegen_flags: <defaults>
</compile_context>

<pallas_src>
import jax
import jax.numpy as jnp
from jax.experimental import pallas as pl
from jax.experimental.pallas import tpu as pltpu

T = 8            # sequence length (max_len); src and trg share it
B = 1            # batch (DecoderRNN hard-codes batch 1 via .view(1, 1, -1))
H = 32           # hidden size (HIDDEN_SIZE, shrunk for the example)
INPUT_DIM = 50   # source vocab size
OUTPUT_DIM = 40  # target vocab size
EMB_ROWS = INPUT_DIM + OUTPUT_DIM   # packed embedding slab rows
G = 128          # lane-aligned gate width: r/z/n at lane offsets 0 / G / 2G
V_PAD = 128      # lane-dense padded output width

# Lane offsets inside the packed weight / bias slabs.
_ENC_WIH = 0 * G
_ENC_WHH = 3 * G
_DEC_WIH = 6 * G
_DEC_WHH = 9 * G
_OUT_W = 12 * G
W_SLAB_LANES = 12 * G + V_PAD        # 1664


def seq2seq_kernel(src_ids_ref, trg_ids_ref, emb_ref, w_ref, b_ref, out_ref):
    # ---- in-kernel embedding gather (exact; off the recurrent chain) ------
    table = emb_ref[...]                                       # (EMB_ROWS, H)
    row_ids = jax.lax.broadcasted_iota(jnp.int32, (EMB_ROWS, 1), 0)

    def gather(idx):
        sel = row_ids == idx                                   # (EMB_ROWS, 1)
        return jnp.sum(jnp.where(sel, table, 0.0), axis=0, keepdims=True)

    src_emb = jnp.concatenate([gather(src_ids_ref[t]) for t in range(T)],
                              axis=0)                          # (T, H)
    dec_x = jnp.maximum(
        jnp.concatenate([gather(trg_ids_ref[t] + INPUT_DIM) for t in range(T)],
                        axis=0), 0.0)                          # relu(embedding)

    # ---- input-side GRU matmuls, hoisted off the recurrence ----------------
    enc_gi = (jnp.dot(src_emb, w_ref[:, _ENC_WIH:_ENC_WIH + 3 * G],
                      preferred_element_type=jnp.float32)
              + b_ref[:, _ENC_WIH:_ENC_WIH + 3 * G])           # (T, 3G)
    dec_gi = (jnp.dot(dec_x, w_ref[:, _DEC_WIH:_DEC_WIH + 3 * G],
                      preferred_element_type=jnp.float32)
              + b_ref[:, _DEC_WIH:_DEC_WIH + 3 * G])           # (T, 3G)

    enc_whh = w_ref[:, _ENC_WHH:_ENC_WHH + 3 * G]
    dec_whh = w_ref[:, _DEC_WHH:_DEC_WHH + 3 * G]
    enc_bhh = b_ref[:, _ENC_WHH:_ENC_WHH + 3 * G]
    dec_bhh = b_ref[:, _DEC_WHH:_DEC_WHH + 3 * G]

    def gru_step(gi_t, h, whh, bhh):
        # Only h @ W_hh stays on the serial chain; gates are vreg-aligned.
        gh = jnp.dot(h, whh, preferred_element_type=jnp.float32) + bhh  # (1, 3G)
        rz = jax.nn.sigmoid(gi_t[:, :2 * G] + gh[:, :2 * G])   # fused r|z sigmoid
        r = rz[:, :H]                                          # lane offset 0
        z = rz[:, G:G + H]                                     # vreg boundary
        n = jnp.tanh(gi_t[:, 2 * G:2 * G + H] + r * gh[:, 2 * G:2 * G + H])
        return n + z * (h - n)                                 # == (1-z)*n + z*h

    # hidden = encoder.initHidden() -> zeros; carried in vregs.
    h = jnp.zeros((1, H), jnp.float32)
    hs = []
    for t in range(T):                                         # static unroll
        h = gru_step(enc_gi[t:t + 1, :], h, enc_whh, enc_bhh)  # encoder GRU
        h = gru_step(dec_gi[t:t + 1, :], h, dec_whh, dec_bhh)  # decoder GRU
        hs.append(h)
    h_all = jnp.concatenate(hs, axis=0)                        # (T, H), in vregs

    # ---- batched output projection + log-softmax ---------------------------
    logits = (jnp.dot(h_all, w_ref[:, _OUT_W:_OUT_W + V_PAD],
                      preferred_element_type=jnp.float32)
              + b_ref[:, _OUT_W:_OUT_W + V_PAD])               # (T, V_PAD)
    m = jnp.max(logits, axis=-1, keepdims=True)                # pad bias=-1e9 -> no effect
    shifted = logits - m
    lse = jnp.log(jnp.sum(jnp.exp(shifted), axis=-1, keepdims=True))
    out_ref[...] = (shifted - lse).astype(out_ref.dtype)       # lane-dense (T, 128)


@jax.jit
def seq2seq_forward(src, trg, p):
    src_ids = src.reshape(T).astype(jnp.int32)                 # (T,) -> SMEM
    trg_ids = trg.reshape(T).astype(jnp.int32)
    out_padded = pl.pallas_call(
        seq2seq_kernel,
        out_shape=jax.ShapeDtypeStruct((T, V_PAD), jnp.float32),
        in_specs=[
            pl.BlockSpec(memory_space=pltpu.MemorySpace.SMEM),   # src token ids
            pl.BlockSpec(memory_space=pltpu.MemorySpace.SMEM),   # trg token ids
            pl.BlockSpec(memory_space=pltpu.MemorySpace.VMEM),   # embedding slab
            pl.BlockSpec(memory_space=pltpu.MemorySpace.VMEM),   # weight slab
            pl.BlockSpec(memory_space=pltpu.MemorySpace.VMEM),   # bias slab
        ],
    )(src_ids, trg_ids, p["emb_slab"], p["w_slab"], p["b_slab"])
    # Drop the lane-padding columns; restore (T, B, V).
    return out_padded[:, :OUTPUT_DIM].reshape(T, B, OUTPUT_DIM)


def init_params(key):
    ks = jax.random.split(key, 12)
    s = 1.0 / jnp.sqrt(H)
    u = lambda k, shape: jax.random.uniform(k, shape, jnp.float32, -s, s)
    p = {}
    p["enc_emb"] = 0.1 * jax.random.normal(ks[0], (INPUT_DIM, H), jnp.float32)
    p["dec_emb"] = 0.1 * jax.random.normal(ks[1], (OUTPUT_DIM, H), jnp.float32)
    # PyTorch GRU layout: weight_ih (3H, H), rows ordered [r, z, n].
    p["enc_wih"] = u(ks[2], (3 * H, H)); p["enc_whh"] = u(ks[3], (3 * H, H))
    p["enc_bih"] = u(ks[4], (3 * H,));   p["enc_bhh"] = u(ks[5], (3 * H,))
    # TODO(synk): reference DecoderRNN sets self.gru = nn.GRU (the class, not an
    # instance), which cannot execute; we give the decoder its own GRU(H, H).
    p["dec_wih"] = u(ks[6], (3 * H, H)); p["dec_whh"] = u(ks[7], (3 * H, H))
    p["dec_bih"] = u(ks[8], (3 * H,));   p["dec_bhh"] = u(ks[9], (3 * H,))
    p["out_w"] = u(ks[10], (OUTPUT_DIM, H))
    p["out_b"] = u(ks[11], (OUTPUT_DIM,))

    # ---- kernel-friendly packed slabs (lane-aligned gates) -----------------
    def pad_gates_w(w):    # PyTorch (3H, H) -> lane-aligned (H, 3G)
        w_t = w.T
        return jnp.concatenate(
            [jnp.pad(w_t[:, g * H:(g + 1) * H], ((0, 0), (0, G - H)))
             for g in range(3)], axis=1)

    def pad_gates_b(b):    # (3H,) -> lane-aligned (1, 3G)
        return jnp.concatenate(
            [jnp.pad(b[g * H:(g + 1) * H], (0, G - H)) for g in range(3)]
        ).reshape(1, 3 * G)

    # Lane-dense padded output projection: zero weight columns, -1e9 bias so
    # the padded logits vanish from the log-softmax normalizer.
    out_w_pad = jnp.concatenate(
        [p["out_w"].T, jnp.zeros((H, V_PAD - OUTPUT_DIM), jnp.float32)], axis=1)
    out_b_pad = jnp.concatenate(
        [p["out_b"], jnp.full((V_PAD - OUTPUT_DIM,), -1e9, jnp.float32)]
    ).reshape(1, V_PAD)

    p["w_slab"] = jnp.concatenate(
        [pad_gates_w(p["enc_wih"]), pad_gates_w(p["enc_whh"]),
         pad_gates_w(p["dec_wih"]), pad_gates_w(p["dec_whh"]), out_w_pad],
        axis=1)                                   # (H, 1664)
    p["b_slab"] = jnp.concatenate(
        [pad_gates_b(p["enc_bih"]), pad_gates_b(p["enc_bhh"]),
         pad_gates_b(p["dec_bih"]), pad_gates_b(p["dec_bhh"]), out_b_pad],
        axis=1)                                   # (1, 1664)
    p["emb_slab"] = jnp.concatenate([p["enc_emb"], p["dec_emb"]], axis=0)  # (90, H)
    assert p["w_slab"].shape == (H, W_SLAB_LANES)
    return p


def reference_forward(src, trg, p):
    """Pure-JAX reference mirroring the PyTorch forward semantics."""
    def gru(x, h, wih, whh, bih, bhh):
        gi = x @ wih.T + bih
        gh = h @ whh.T + bhh
        r = jax.nn.sigmoid(gi[:, :H] + gh[:, :H])
        z = jax.nn.sigmoid(gi[:, H:2 * H] + gh[:, H:2 * H])
        n = jnp.tanh(gi[:, 2 * H:] + r * gh[:, 2 * H:])
        return (1.0 - z) * n + z * h

    h = jnp.zeros((1, H), jnp.float32)
    outs = []
    for i in range(T):
        x_e = p["enc_emb"][src[i]]                     # (1, H)
        h = gru(x_e, h, p["enc_wih"], p["enc_whh"], p["enc_bih"], p["enc_bhh"])
        x_d = jnp.maximum(p["dec_emb"][trg[i]], 0.0)   # (1, H)
        h = gru(x_d, h, p["dec_wih"], p["dec_whh"], p["dec_bih"], p["dec_bhh"])
        logits = h @ p["out_w"].T + p["out_b"]
        outs.append(jax.nn.log_softmax(logits, axis=-1))
    return jnp.stack(outs, axis=0)                     # (T, 1, V)


if __name__ == "__main__":
    key = jax.random.PRNGKey(0)
    kp, ksrc, ktrg = jax.random.split(key, 3)
    params = init_params(kp)

    src = jax.random.randint(ksrc, (T, B), 0, INPUT_DIM, dtype=jnp.int32)
    trg = jax.random.randint(ktrg, (T, B), 0, OUTPUT_DIM, dtype=jnp.int32)

    out = seq2seq_forward(src, trg, params)
    out = jax.block_until_ready(out)

    ref = reference_forward(src, trg, params)
    assert out.shape == (T, B, OUTPUT_DIM), out.shape
    assert jnp.allclose(out, ref, atol=3e-5, rtol=3e-5), \
        float(jnp.max(jnp.abs(out - ref)))
    print("KERNEL_OK")
</pallas_src>

<mosaic_0001>
module attributes {stable_mosaic.version = 11 : i64} {
  func.func @seq2seq_kernel(%arg0: memref<8xi32, #tpu.memory_space<smem>>, %arg1: memref<8xi32, #tpu.memory_space<smem>>, %arg2: memref<90x32xf32, #tpu.memory_space<vmem>>, %arg3: memref<32x1664xf32, #tpu.memory_space<vmem>>, %arg4: memref<1x1664xf32, #tpu.memory_space<vmem>>, %arg5: memref<8x128xf32, #tpu.memory_space<vmem>>) attributes {dimension_semantics = [], scalar_prefetch = 0 : i64, scratch_operands = 0 : i64, tpu.core_type = #tpu.core_type<tc>} {
    %c0 = arith.constant 0 : index
    %c0_0 = arith.constant 0 : index
    %0 = vector.load %arg2[%c0, %c0_0] : memref<90x32xf32, #tpu.memory_space<vmem>>, vector<90x32xf32>
    %1 = tpu.iota {dimensions = array<i32: 0>} : vector<90x1xi32>
    %c0_1 = arith.constant 0 : index
    %2 = memref.load %arg0[%c0_1] : memref<8xi32, #tpu.memory_space<smem>>
    %3 = vector.broadcast %2 : i32 to vector<90x1xi32>
    %4 = arith.cmpi eq, %1, %3 : vector<90x1xi32>
    %cst = arith.constant 0.000000e+00 : f32
    %5 = vector.shape_cast %4 : vector<90x1xi1> to vector<90x1xi1>
    %6 = vector.broadcast %5 : vector<90x1xi1> to vector<90x32xi1>
    %7 = vector.broadcast %cst : f32 to vector<90x32xf32>
    %8 = arith.select %6, %0, %7 : vector<90x32xi1>, vector<90x32xf32>
    %cst_2 = arith.constant dense<0.000000e+00> : vector<32xf32>
    %9 = vector.multi_reduction <add>, %8, %cst_2 [0] : vector<90x32xf32> to vector<32xf32>
    %10 = vector.shape_cast %9 : vector<32xf32> to vector<1x32xf32>
    %c1 = arith.constant 1 : index
    %11 = memref.load %arg0[%c1] : memref<8xi32, #tpu.memory_space<smem>>
    %12 = vector.broadcast %11 : i32 to vector<90x1xi32>
    %13 = arith.cmpi eq, %1, %12 : vector<90x1xi32>
    %cst_3 = arith.constant 0.000000e+00 : f32
    %14 = vector.shape_cast %13 : vector<90x1xi1> to vector<90x1xi1>
    %15 = vector.broadcast %14 : vector<90x1xi1> to vector<90x32xi1>
    %16 = vector.broadcast %cst_3 : f32 to vector<90x32xf32>
    %17 = arith.select %15, %0, %16 : vector<90x32xi1>, vector<90x32xf32>
    %cst_4 = arith.constant dense<0.000000e+00> : vector<32xf32>
    %18 = vector.multi_reduction <add>, %17, %cst_4 [0] : vector<90x32xf32> to vector<32xf32>
    %19 = vector.shape_cast %18 : vector<32xf32> to vector<1x32xf32>
    %c2 = arith.constant 2 : index
    %20 = memref.load %arg0[%c2] : memref<8xi32, #tpu.memory_space<smem>>
    %21 = vector.broadcast %20 : i32 to vector<90x1xi32>
    %22 = arith.cmpi eq, %1, %21 : vector<90x1xi32>
    %cst_5 = arith.constant 0.000000e+00 : f32
    %23 = vector.shape_cast %22 : vector<90x1xi1> to vector<90x1xi1>
    %24 = vector.broadcast %23 : vector<90x1xi1> to vector<90x32xi1>
    %25 = vector.broadcast %cst_5 : f32 to vector<90x32xf32>
    %26 = arith.select %24, %0, %25 : vector<90x32xi1>, vector<90x32xf32>
    %cst_6 = arith.constant dense<0.000000e+00> : vector<32xf32>
    %27 = vector.multi_reduction <add>, %26, %cst_6 [0] : vector<90x32xf32> to vector<32xf32>
    %28 = vector.shape_cast %27 : vector<32xf32> to vector<1x32xf32>
    %c3 = arith.constant 3 : index
    %29 = memref.load %arg0[%c3] : memref<8xi32, #tpu.memory_space<smem>>
    %30 = vector.broadcast %29 : i32 to vector<90x1xi32>
    %31 = arith.cmpi eq, %1, %30 : vector<90x1xi32>
    %cst_7 = arith.constant 0.000000e+00 : f32
    %32 = vector.shape_cast %31 : vector<90x1xi1> to vector<90x1xi1>
    %33 = vector.broadcast %32 : vector<90x1xi1> to vector<90x32xi1>
    %34 = vector.broadcast %cst_7 : f32 to vector<90x32xf32>
    %35 = arith.select %33, %0, %34 : vector<90x32xi1>, vector<90x32xf32>
    %cst_8 = arith.constant dense<0.000000e+00> : vector<32xf32>
    %36 = vector.multi_reduction <add>, %35, %cst_8 [0] : vector<90x32xf32> to vector<32xf32>
    %37 = vector.shape_cast %36 : vector<32xf32> to vector<1x32xf32>
    %c4 = arith.constant 4 : index
    %38 = memref.load %arg0[%c4] : memref<8xi32, #tpu.memory_space<smem>>
    %39 = vector.broadcast %38 : i32 to vector<90x1xi32>
    %40 = arith.cmpi eq, %1, %39 : vector<90x1xi32>
    %cst_9 = arith.constant 0.000000e+00 : f32
    %41 = vector.shape_cast %40 : vector<90x1xi1> to vector<90x1xi1>
    %42 = vector.broadcast %41 : vector<90x1xi1> to vector<90x32xi1>
    %43 = vector.broadcast %cst_9 : f32 to vector<90x32xf32>
    %44 = arith.select %42, %0, %43 : vector<90x32xi1>, vector<90x32xf32>
    %cst_10 = arith.constant dense<0.000000e+00> : vector<32xf32>
    %45 = vector.multi_reduction <add>, %44, %cst_10 [0] : vector<90x32xf32> to vector<32xf32>
    %46 = vector.shape_cast %45 : vector<32xf32> to vector<1x32xf32>
    %c5 = arith.constant 5 : index
    %47 = memref.load %arg0[%c5] : memref<8xi32, #tpu.memory_space<smem>>
    %48 = vector.broadcast %47 : i32 to vector<90x1xi32>
    %49 = arith.cmpi eq, %1, %48 : vector<90x1xi32>
    %cst_11 = arith.constant 0.000000e+00 : f32
    %50 = vector.shape_cast %49 : vector<90x1xi1> to vector<90x1xi1>
    %51 = vector.broadcast %50 : vector<90x1xi1> to vector<90x32xi1>
    %52 = vector.broadcast %cst_11 : f32 to vector<90x32xf32>
    %53 = arith.select %51, %0, %52 : vector<90x32xi1>, vector<90x32xf32>
    %cst_12 = arith.constant dense<0.000000e+00> : vector<32xf32>
    %54 = vector.multi_reduction <add>, %53, %cst_12 [0] : vector<90x32xf32> to vector<32xf32>
    %55 = vector.shape_cast %54 : vector<32xf32> to vector<1x32xf32>
    %c6 = arith.constant 6 : index
    %56 = memref.load %arg0[%c6] : memref<8xi32, #tpu.memory_space<smem>>
    %57 = vector.broadcast %56 : i32 to vector<90x1xi32>
    %58 = arith.cmpi eq, %1, %57 : vector<90x1xi32>
    %cst_13 = arith.constant 0.000000e+00 : f32
    %59 = vector.shape_cast %58 : vector<90x1xi1> to vector<90x1xi1>
    %60 = vector.broadcast %59 : vector<90x1xi1> to vector<90x32xi1>
    %61 = vector.broadcast %cst_13 : f32 to vector<90x32xf32>
    %62 = arith.select %60, %0, %61 : vector<90x32xi1>, vector<90x32xf32>
    %cst_14 = arith.constant dense<0.000000e+00> : vector<32xf32>
    %63 = vector.multi_reduction <add>, %62, %cst_14 [0] : vector<90x32xf32> to vector<32xf32>
    %64 = vector.shape_cast %63 : vector<32xf32> to vector<1x32xf32>
    %c7 = arith.constant 7 : index
    %65 = memref.load %arg0[%c7] : memref<8xi32, #tpu.memory_space<smem>>
    %66 = vector.broadcast %65 : i32 to vector<90x1xi32>
    %67 = arith.cmpi eq, %1, %66 : vector<90x1xi32>
    %cst_15 = arith.constant 0.000000e+00 : f32
    %68 = vector.shape_cast %67 : vector<90x1xi1> to vector<90x1xi1>
    %69 = vector.broadcast %68 : vector<90x1xi1> to vector<90x32xi1>
    %70 = vector.broadcast %cst_15 : f32 to vector<90x32xf32>
    %71 = arith.select %69, %0, %70 : vector<90x32xi1>, vector<90x32xf32>
    %cst_16 = arith.constant dense<0.000000e+00> : vector<32xf32>
    %72 = vector.multi_reduction <add>, %71, %cst_16 [0] : vector<90x32xf32> to vector<32xf32>
    %73 = vector.shape_cast %72 : vector<32xf32> to vector<1x32xf32>
    %74 = tpu.concatenate %10, %19, %28, %37, %46, %55, %64, %73 in 0 : vector<1x32xf32>, vector<1x32xf32>, vector<1x32xf32>, vector<1x32xf32>, vector<1x32xf32>, vector<1x32xf32>, vector<1x32xf32>, vector<1x32xf32> -> vector<8x32xf32>
    %c0_17 = arith.constant 0 : index
    %75 = memref.load %arg1[%c0_17] : memref<8xi32, #tpu.memory_space<smem>>
    %c50_i32 = arith.constant 50 : i32
    %76 = arith.addi %75, %c50_i32 : i32
    %77 = vector.broadcast %76 : i32 to vector<90x1xi32>
    %78 = arith.cmpi eq, %1, %77 : vector<90x1xi32>
    %cst_18 = arith.constant 0.000000e+00 : f32
    %79 = vector.shape_cast %78 : vector<90x1xi1> to vector<90x1xi1>
    %80 = vector.broadcast %79 : vector<90x1xi1> to vector<90x32xi1>
    %81 = vector.broadcast %cst_18 : f32 to vector<90x32xf32>
    %82 = arith.select %80, %0, %81 : vector<90x32xi1>, vector<90x32xf32>
    %cst_19 = arith.constant dense<0.000000e+00> : vector<32xf32>
    %83 = vector.multi_reduction <add>, %82, %cst_19 [0] : vector<90x32xf32> to vector<32xf32>
    %84 = vector.shape_cast %83 : vector<32xf32> to vector<1x32xf32>
    %c1_20 = arith.constant 1 : index
    %85 = memref.load %arg1[%c1_20] : memref<8xi32, #tpu.memory_space<smem>>
    %c50_i32_21 = arith.constant 50 : i32
    %86 = arith.addi %85, %c50_i32_21 : i32
    %87 = vector.broadcast %86 : i32 to vector<90x1xi32>
    %88 = arith.cmpi eq, %1, %87 : vector<90x1xi32>
    %cst_22 = arith.constant 0.000000e+00 : f32
    %89 = vector.shape_cast %88 : vector<90x1xi1> to vector<90x1xi1>
    %90 = vector.broadcast %89 : vector<90x1xi1> to vector<90x32xi1>
    %91 = vector.broadcast %cst_22 : f32 to vector<90x32xf32>
    %92 = arith.select %90, %0, %91 : vector<90x32xi1>, vector<90x32xf32>
    %cst_23 = arith.constant dense<0.000000e+00> : vector<32xf32>
    %93 = vector.multi_reduction <add>, %92, %cst_23 [0] : vector<90x32xf32> to vector<32xf32>
    %94 = vector.shape_cast %93 : vector<32xf32> to vector<1x32xf32>
    %c2_24 = arith.constant 2 : index
    %95 = memref.load %arg1[%c2_24] : memref<8xi32, #tpu.memory_space<smem>>
    %c50_i32_25 = arith.constant 50 : i32
    %96 = arith.addi %95, %c50_i32_25 : i32
    %97 = vector.broadcast %96 : i32 to vector<90x1xi32>
    %98 = arith.cmpi eq, %1, %97 : vector<90x1xi32>
    %cst_26 = arith.constant 0.000000e+00 : f32
    %99 = vector.shape_cast %98 : vector<90x1xi1> to vector<90x1xi1>
    %100 = vector.broadcast %99 : vector<90x1xi1> to vector<90x32xi1>
    %101 = vector.broadcast %cst_26 : f32 to vector<90x32xf32>
    %102 = arith.select %100, %0, %101 : vector<90x32xi1>, vector<90x32xf32>
    %cst_27 = arith.constant dense<0.000000e+00> : vector<32xf32>
    %103 = vector.multi_reduction <add>, %102, %cst_27 [0] : vector<90x32xf32> to vector<32xf32>
    %104 = vector.shape_cast %103 : vector<32xf32> to vector<1x32xf32>
    %c3_28 = arith.constant 3 : index
    %105 = memref.load %arg1[%c3_28] : memref<8xi32, #tpu.memory_space<smem>>
    %c50_i32_29 = arith.constant 50 : i32
    %106 = arith.addi %105, %c50_i32_29 : i32
    %107 = vector.broadcast %106 : i32 to vector<90x1xi32>
    %108 = arith.cmpi eq, %1, %107 : vector<90x1xi32>
    %cst_30 = arith.constant 0.000000e+00 : f32
    %109 = vector.shape_cast %108 : vector<90x1xi1> to vector<90x1xi1>
    %110 = vector.broadcast %109 : vector<90x1xi1> to vector<90x32xi1>
    %111 = vector.broadcast %cst_30 : f32 to vector<90x32xf32>
    %112 = arith.select %110, %0, %111 : vector<90x32xi1>, vector<90x32xf32>
    %cst_31 = arith.constant dense<0.000000e+00> : vector<32xf32>
    %113 = vector.multi_reduction <add>, %112, %cst_31 [0] : vector<90x32xf32> to vector<32xf32>
    %114 = vector.shape_cast %113 : vector<32xf32> to vector<1x32xf32>
    %c4_32 = arith.constant 4 : index
    %115 = memref.load %arg1[%c4_32] : memref<8xi32, #tpu.memory_space<smem>>
    %c50_i32_33 = arith.constant 50 : i32
    %116 = arith.addi %115, %c50_i32_33 : i32
    %117 = vector.broadcast %116 : i32 to vector<90x1xi32>
    %118 = arith.cmpi eq, %1, %117 : vector<90x1xi32>
    %cst_34 = arith.constant 0.000000e+00 : f32
    %119 = vector.shape_cast %118 : vector<90x1xi1> to vector<90x1xi1>
    %120 = vector.broadcast %119 : vector<90x1xi1> to vector<90x32xi1>
    %121 = vector.broadcast %cst_34 : f32 to vector<90x32xf32>
    %122 = arith.select %120, %0, %121 : vector<90x32xi1>, vector<90x32xf32>
    %cst_35 = arith.constant dense<0.000000e+00> : vector<32xf32>
    %123 = vector.multi_reduction <add>, %122, %cst_35 [0] : vector<90x32xf32> to vector<32xf32>
    %124 = vector.shape_cast %123 : vector<32xf32> to vector<1x32xf32>
    %c5_36 = arith.constant 5 : index
    %125 = memref.load %arg1[%c5_36] : memref<8xi32, #tpu.memory_space<smem>>
    %c50_i32_37 = arith.constant 50 : i32
    %126 = arith.addi %125, %c50_i32_37 : i32
    %127 = vector.broadcast %126 : i32 to vector<90x1xi32>
    %128 = arith.cmpi eq, %1, %127 : vector<90x1xi32>
    %cst_38 = arith.constant 0.000000e+00 : f32
    %129 = vector.shape_cast %128 : vector<90x1xi1> to vector<90x1xi1>
    %130 = vector.broadcast %129 : vector<90x1xi1> to vector<90x32xi1>
    %131 = vector.broadcast %cst_38 : f32 to vector<90x32xf32>
    %132 = arith.select %130, %0, %131 : vector<90x32xi1>, vector<90x32xf32>
    %cst_39 = arith.constant dense<0.000000e+00> : vector<32xf32>
    %133 = vector.multi_reduction <add>, %132, %cst_39 [0] : vector<90x32xf32> to vector<32xf32>
    %134 = vector.shape_cast %133 : vector<32xf32> to vector<1x32xf32>
    %c6_40 = arith.constant 6 : index
    %135 = memref.load %arg1[%c6_40] : memref<8xi32, #tpu.memory_space<smem>>
    %c50_i32_41 = arith.constant 50 : i32
    %136 = arith.addi %135, %c50_i32_41 : i32
    %137 = vector.broadcast %136 : i32 to vector<90x1xi32>
    %138 = arith.cmpi eq, %1, %137 : vector<90x1xi32>
    %cst_42 = arith.constant 0.000000e+00 : f32
    %139 = vector.shape_cast %138 : vector<90x1xi1> to vector<90x1xi1>
    %140 = vector.broadcast %139 : vector<90x1xi1> to vector<90x32xi1>
    %141 = vector.broadcast %cst_42 : f32 to vector<90x32xf32>
    %142 = arith.select %140, %0, %141 : vector<90x32xi1>, vector<90x32xf32>
    %cst_43 = arith.constant dense<0.000000e+00> : vector<32xf32>
    %143 = vector.multi_reduction <add>, %142, %cst_43 [0] : vector<90x32xf32> to vector<32xf32>
    %144 = vector.shape_cast %143 : vector<32xf32> to vector<1x32xf32>
    %c7_44 = arith.constant 7 : index
    %145 = memref.load %arg1[%c7_44] : memref<8xi32, #tpu.memory_space<smem>>
    %c50_i32_45 = arith.constant 50 : i32
    %146 = arith.addi %145, %c50_i32_45 : i32
    %147 = vector.broadcast %146 : i32 to vector<90x1xi32>
    %148 = arith.cmpi eq, %1, %147 : vector<90x1xi32>
    %cst_46 = arith.constant 0.000000e+00 : f32
    %149 = vector.shape_cast %148 : vector<90x1xi1> to vector<90x1xi1>
    %150 = vector.broadcast %149 : vector<90x1xi1> to vector<90x32xi1>
    %151 = vector.broadcast %cst_46 : f32 to vector<90x32xf32>
    %152 = arith.select %150, %0, %151 : vector<90x32xi1>, vector<90x32xf32>
    %cst_47 = arith.constant dense<0.000000e+00> : vector<32xf32>
    %153 = vector.multi_reduction <add>, %152, %cst_47 [0] : vector<90x32xf32> to vector<32xf32>
    %154 = vector.shape_cast %153 : vector<32xf32> to vector<1x32xf32>
    %155 = tpu.concatenate %84, %94, %104, %114, %124, %134, %144, %154 in 0 : vector<1x32xf32>, vector<1x32xf32>, vector<1x32xf32>, vector<1x32xf32>, vector<1x32xf32>, vector<1x32xf32>, vector<1x32xf32>, vector<1x32xf32> -> vector<8x32xf32>
    %cst_48 = arith.constant 0.000000e+00 : f32
    %156 = vector.broadcast %cst_48 : f32 to vector<8x32xf32>
    %157 = arith.maximumf %155, %156 : vector<8x32xf32>
    %c0_49 = arith.constant 0 : index
    %c0_50 = arith.constant 0 : index
    %158 = vector.load %arg3[%c0_49, %c0_50] : memref<32x1664xf32, #tpu.memory_space<vmem>>, vector<32x384xf32>
    %cst_51 = arith.constant dense<0.000000e+00> : vector<8x384xf32>
    %159 = tpu.matmul %74, %158, %cst_51 {dimension_numbers = #tpu.dot_dimension_numbers<[1], [0], [0], [1], [0, 0, 1, 1], [], []>} : vector<8x32xf32>, vector<32x384xf32>, vector<8x384xf32> -> vector<8x384xf32>
    %c0_52 = arith.constant 0 : index
    %c0_53 = arith.constant 0 : index
    %160 = vector.load %arg4[%c0_52, %c0_53] : memref<1x1664xf32, #tpu.memory_space<vmem>>, vector<1x384xf32>
    %161 = vector.broadcast %160 : vector<1x384xf32> to vector<8x384xf32>
    %162 = arith.addf %159, %161 : vector<8x384xf32>
    %c0_54 = arith.constant 0 : index
    %c768 = arith.constant 768 : index
    %163 = vector.load %arg3[%c0_54, %c768] : memref<32x1664xf32, #tpu.memory_space<vmem>>, vector<32x384xf32>
    %cst_55 = arith.constant dense<0.000000e+00> : vector<8x384xf32>
    %164 = tpu.matmul %157, %163, %cst_55 {dimension_numbers = #tpu.dot_dimension_numbers<[1], [0], [0], [1], [0, 0, 1, 1], [], []>} : vector<8x32xf32>, vector<32x384xf32>, vector<8x384xf32> -> vector<8x384xf32>
    %c0_56 = arith.constant 0 : index
    %c768_57 = arith.constant 768 : index
    %165 = vector.load %arg4[%c0_56, %c768_57] : memref<1x1664xf32, #tpu.memory_space<vmem>>, vector<1x384xf32>
    %166 = vector.broadcast %165 : vector<1x384xf32> to vector<8x384xf32>
    %167 = arith.addf %164, %166 : vector<8x384xf32>
    %c0_58 = arith.constant 0 : index
    %c384 = arith.constant 384 : index
    %168 = vector.load %arg3[%c0_58, %c384] : memref<32x1664xf32, #tpu.memory_space<vmem>>, vector<32x384xf32>
    %c0_59 = arith.constant 0 : index
    %c1152 = arith.constant 1152 : index
    %169 = vector.load %arg3[%c0_59, %c1152] : memref<32x1664xf32, #tpu.memory_space<vmem>>, vector<32x384xf32>
    %c0_60 = arith.constant 0 : index
    %c384_61 = arith.constant 384 : index
    %170 = vector.load %arg4[%c0_60, %c384_61] : memref<1x1664xf32, #tpu.memory_space<vmem>>, vector<1x384xf32>
    %c0_62 = arith.constant 0 : index
    %c1152_63 = arith.constant 1152 : index
    %171 = vector.load %arg4[%c0_62, %c1152_63] : memref<1x1664xf32, #tpu.memory_space<vmem>>, vector<1x384xf32>
    %cst_64 = arith.constant 0.000000e+00 : f32
    %172 = vector.broadcast %cst_64 : f32 to vector<1x32xf32>
    %173 = vector.extract_strided_slice %162 {offsets = [0, 0], sizes = [1, 384], strides = [1, 1]} : vector<8x384xf32> to vector<1x384xf32>
    %cst_65 = arith.constant dense<0.000000e+00> : vector<1x384xf32>
    %174 = tpu.matmul %172, %168, %cst_65 {dimension_numbers = #tpu.dot_dimension_numbers<[1], [0], [0], [1], [0, 0, 1, 1], [], []>} : vector<1x32xf32>, vector<32x384xf32>, vector<1x384xf32> -> vector<1x384xf32>
    %175 = arith.addf %174, %170 : vector<1x384xf32>
    %176 = vector.extract_strided_slice %173 {offsets = [0, 0], sizes = [1, 256], strides = [1, 1]} : vector<1x384xf32> to vector<1x256xf32>
    %177 = vector.extract_strided_slice %175 {offsets = [0, 0], sizes = [1, 256], strides = [1, 1]} : vector<1x384xf32> to vector<1x256xf32>
    %178 = arith.addf %176, %177 : vector<1x256xf32>
    %179 = arith.negf %178 : vector<1x256xf32>
    %180 = math.exp %179 : vector<1x256xf32>
    %cst_66 = arith.constant 1.000000e+00 : f32
    %181 = vector.broadcast %cst_66 : f32 to vector<1x256xf32>
    %182 = arith.addf %181, %180 : vector<1x256xf32>
    %183 = arith.divf %181, %182 : vector<1x256xf32>
    %184 = vector.extract_strided_slice %183 {offsets = [0, 0], sizes = [1, 32], strides = [1, 1]} : vector<1x256xf32> to vector<1x32xf32>
    %185 = vector.extract_strided_slice %183 {offsets = [0, 128], sizes = [1, 32], strides = [1, 1]} : vector<1x256xf32> to vector<1x32xf32>
    %186 = vector.extract_strided_slice %173 {offsets = [0, 256], sizes = [1, 32], strides = [1, 1]} : vector<1x384xf32> to vector<1x32xf32>
    %187 = vector.extract_strided_slice %175 {offsets = [0, 256], sizes = [1, 32], strides = [1, 1]} : vector<1x384xf32> to vector<1x32xf32>
    %188 = arith.mulf %184, %187 : vector<1x32xf32>
    %189 = arith.addf %186, %188 : vector<1x32xf32>
    %190 = math.tanh %189 : vector<1x32xf32>
    %191 = arith.subf %172, %190 : vector<1x32xf32>
    %192 = arith.mulf %185, %191 : vector<1x32xf32>
    %193 = arith.addf %190, %192 : vector<1x32xf32>
    %194 = vector.extract_strided_slice %167 {offsets = [0, 0], sizes = [1, 384], strides = [1, 1]} : vector<8x384xf32> to vector<1x384xf32>
    %cst_67 = arith.constant dense<0.000000e+00> : vector<1x384xf32>
    %195 = tpu.matmul %193, %169, %cst_67 {dimension_numbers = #tpu.dot_dimension_numbers<[1], [0], [0], [1], [0, 0, 1, 1], [], []>} : vector<1x32xf32>, vector<32x384xf32>, vector<1x384xf32> -> vector<1x384xf32>
    %196 = arith.addf %195, %171 : vector<1x384xf32>
    %197 = vector.extract_strided_slice %194 {offsets = [0, 0], sizes = [1, 256], strides = [1, 1]} : vector<1x384xf32> to vector<1x256xf32>
    %198 = vector.extract_strided_slice %196 {offsets = [0, 0], sizes = [1, 256], strides = [1, 1]} : vector<1x384xf32> to vector<1x256xf32>
    %199 = arith.addf %197, %198 : vector<1x256xf32>
    %200 = arith.negf %199 : vector<1x256xf32>
    %201 = math.exp %200 : vector<1x256xf32>
    %cst_68 = arith.constant 1.000000e+00 : f32
    %202 = vector.broadcast %cst_68 : f32 to vector<1x256xf32>
    %203 = arith.addf %202, %201 : vector<1x256xf32>
    %204 = arith.divf %202, %203 : vector<1x256xf32>
    %205 = vector.extract_strided_slice %204 {offsets = [0, 0], sizes = [1, 32], strides = [1, 1]} : vector<1x256xf32> to vector<1x32xf32>
    %206 = vector.extract_strided_slice %204 {offsets = [0, 128], sizes = [1, 32], strides = [1, 1]} : vector<1x256xf32> to vector<1x32xf32>
    %207 = vector.extract_strided_slice %194 {offsets = [0, 256], sizes = [1, 32], strides = [1, 1]} : vector<1x384xf32> to vector<1x32xf32>
    %208 = vector.extract_strided_slice %196 {offsets = [0, 256], sizes = [1, 32], strides = [1, 1]} : vector<1x384xf32> to vector<1x32xf32>
    %209 = arith.mulf %205, %208 : vector<1x32xf32>
    %210 = arith.addf %207, %209 : vector<1x32xf32>
    %211 = math.tanh %210 : vector<1x32xf32>
    %212 = arith.subf %193, %211 : vector<1x32xf32>
    %213 = arith.mulf %206, %212 : vector<1x32xf32>
    %214 = arith.addf %211, %213 : vector<1x32xf32>
    %215 = vector.extract_strided_slice %162 {offsets = [1, 0], sizes = [1, 384], strides = [1, 1]} : vector<8x384xf32> to vector<1x384xf32>
    %cst_69 = arith.constant dense<0.000000e+00> : vector<1x384xf32>
    %216 = tpu.matmul %214, %168, %cst_69 {dimension_numbers = #tpu.dot_dimension_numbers<[1], [0], [0], [1], [0, 0, 1, 1], [], []>} : vector<1x32xf32>, vector<32x384xf32>, vector<1x384xf32> -> vector<1x384xf32>
    %217 = arith.addf %216, %170 : vector<1x384xf32>
    %218 = vector.extract_strided_slice %215 {offsets = [0, 0], sizes = [1, 256], strides = [1, 1]} : vector<1x384xf32> to vector<1x256xf32>
    %219 = vector.extract_strided_slice %217 {offsets = [0, 0], sizes = [1, 256], strides = [1, 1]} : vector<1x384xf32> to vector<1x256xf32>
    %220 = arith.addf %218, %219 : vector<1x256xf32>
    %221 = arith.negf %220 : vector<1x256xf32>
    %222 = math.exp %221 : vector<1x256xf32>
    %cst_70 = arith.constant 1.000000e+00 : f32
    %223 = vector.broadcast %cst_70 : f32 to vector<1x256xf32>
    %224 = arith.addf %223, %222 : vector<1x256xf32>
    %225 = arith.divf %223, %224 : vector<1x256xf32>
    %226 = vector.extract_strided_slice %225 {offsets = [0, 0], sizes = [1, 32], strides = [1, 1]} : vector<1x256xf32> to vector<1x32xf32>
    %227 = vector.extract_strided_slice %225 {offsets = [0, 128], sizes = [1, 32], strides = [1, 1]} : vector<1x256xf32> to vector<1x32xf32>
    %228 = vector.extract_strided_slice %215 {offsets = [0, 256], sizes = [1, 32], strides = [1, 1]} : vector<1x384xf32> to vector<1x32xf32>
    %229 = vector.extract_strided_slice %217 {offsets = [0, 256], sizes = [1, 32], strides = [1, 1]} : vector<1x384xf32> to vector<1x32xf32>
    %230 = arith.mulf %226, %229 : vector<1x32xf32>
    %231 = arith.addf %228, %230 : vector<1x32xf32>
    %232 = math.tanh %231 : vector<1x32xf32>
    %233 = arith.subf %214, %232 : vector<1x32xf32>
    %234 = arith.mulf %227, %233 : vector<1x32xf32>
    %235 = arith.addf %232, %234 : vector<1x32xf32>
    %236 = vector.extract_strided_slice %167 {offsets = [1, 0], sizes = [1, 384], strides = [1, 1]} : vector<8x384xf32> to vector<1x384xf32>
    %cst_71 = arith.constant dense<0.000000e+00> : vector<1x384xf32>
    %237 = tpu.matmul %235, %169, %cst_71 {dimension_numbers = #tpu.dot_dimension_numbers<[1], [0], [0], [1], [0, 0, 1, 1], [], []>} : vector<1x32xf32>, vector<32x384xf32>, vector<1x384xf32> -> vector<1x384xf32>
    %238 = arith.addf %237, %171 : vector<1x384xf32>
    %239 = vector.extract_strided_slice %236 {offsets = [0, 0], sizes = [1, 256], strides = [1, 1]} : vector<1x384xf32> to vector<1x256xf32>
    %240 = vector.extract_strided_slice %238 {offsets = [0, 0], sizes = [1, 256], strides = [1, 1]} : vector<1x384xf32> to vector<1x256xf32>
    %241 = arith.addf %239, %240 : vector<1x256xf32>
    %242 = arith.negf %241 : vector<1x256xf32>
    %243 = math.exp %242 : vector<1x256xf32>
    %cst_72 = arith.constant 1.000000e+00 : f32
    %244 = vector.broadcast %cst_72 : f32 to vector<1x256xf32>
    %245 = arith.addf %244, %243 : vector<1x256xf32>
    %246 = arith.divf %244, %245 : vector<1x256xf32>
    %247 = vector.extract_strided_slice %246 {offsets = [0, 0], sizes = [1, 32], strides = [1, 1]} : vector<1x256xf32> to vector<1x32xf32>
    %248 = vector.extract_strided_slice %246 {offsets = [0, 128], sizes = [1, 32], strides = [1, 1]} : vector<1x256xf32> to vector<1x32xf32>
    %249 = vector.extract_strided_slice %236 {offsets = [0, 256], sizes = [1, 32], strides = [1, 1]} : vector<1x384xf32> to vector<1x32xf32>
    %250 = vector.extract_strided_slice %238 {offsets = [0, 256], sizes = [1, 32], strides = [1, 1]} : vector<1x384xf32> to vector<1x32xf32>
    %251 = arith.mulf %247, %250 : vector<1x32xf32>
    %252 = arith.addf %249, %251 : vector<1x32xf32>
    %253 = math.tanh %252 : vector<1x32xf32>
    %254 = arith.subf %235, %253 : vector<1x32xf32>
    %255 = arith.mulf %248, %254 : vector<1x32xf32>
    %256 = arith.addf %253, %255 : vector<1x32xf32>
    %257 = vector.extract_strided_slice %162 {offsets = [2, 0], sizes = [1, 384], strides = [1, 1]} : vector<8x384xf32> to vector<1x384xf32>
    %cst_73 = arith.constant dense<0.000000e+00> : vector<1x384xf32>
    %258 = tpu.matmul %256, %168, %cst_73 {dimension_numbers = #tpu.dot_dimension_numbers<[1], [0], [0], [1], [0, 0, 1, 1], [], []>} : vector<1x32xf32>, vector<32x384xf32>, vector<1x384xf32> -> vector<1x384xf32>
    %259 = arith.addf %258, %170 : vector<1x384xf32>
    %260 = vector.extract_strided_slice %257 {offsets = [0, 0], sizes = [1, 256], strides = [1, 1]} : vector<1x384xf32> to vector<1x256xf32>
    %261 = vector.extract_strided_slice %259 {offsets = [0, 0], sizes = [1, 256], strides = [1, 1]} : vector<1x384xf32> to vector<1x256xf32>
    %262 = arith.addf %260, %261 : vector<1x256xf32>
    %263 = arith.negf %262 : vector<1x256xf32>
    %264 = math.exp %263 : vector<1x256xf32>
    %cst_74 = arith.constant 1.000000e+00 : f32
    %265 = vector.broadcast %cst_74 : f32 to vector<1x256xf32>
    %266 = arith.addf %265, %264 : vector<1x256xf32>
    %267 = arith.divf %265, %266 : vector<1x256xf32>
    %268 = vector.extract_strided_slice %267 {offsets = [0, 0], sizes = [1, 32], strides = [1, 1]} : vector<1x256xf32> to vector<1x32xf32>
    %269 = vector.extract_strided_slice %267 {offsets = [0, 128], sizes = [1, 32], strides = [1, 1]} : vector<1x256xf32> to vector<1x32xf32>
    %270 = vector.extract_strided_slice %257 {offsets = [0, 256], sizes = [1, 32], strides = [1, 1]} : vector<1x384xf32> to vector<1x32xf32>
    %271 = vector.extract_strided_slice %259 {offsets = [0, 256], sizes = [1, 32], strides = [1, 1]} : vector<1x384xf32> to vector<1x32xf32>
    %272 = arith.mulf %268, %271 : vector<1x32xf32>
    %273 = arith.addf %270, %272 : vector<1x32xf32>
    %274 = math.tanh %273 : vector<1x32xf32>
    %275 = arith.subf %256, %274 : vector<1x32xf32>
    %276 = arith.mulf %269, %275 : vector<1x32xf32>
    %277 = arith.addf %274, %276 : vector<1x32xf32>
    %278 = vector.extract_strided_slice %167 {offsets = [2, 0], sizes = [1, 384], strides = [1, 1]} : vector<8x384xf32> to vector<1x384xf32>
    %cst_75 = arith.constant dense<0.000000e+00> : vector<1x384xf32>
    %279 = tpu.matmul %277, %169, %cst_75 {dimension_numbers = #tpu.dot_dimension_numbers<[1], [0], [0], [1], [0, 0, 1, 1], [], []>} : vector<1x32xf32>, vector<32x384xf32>, vector<1x384xf32> -> vector<1x384xf32>
    %280 = arith.addf %279, %171 : vector<1x384xf32>
    %281 = vector.extract_strided_slice %278 {offsets = [0, 0], sizes = [1, 256], strides = [1, 1]} : vector<1x384xf32> to vector<1x256xf32>
    %282 = vector.extract_strided_slice %280 {offsets = [0, 0], sizes = [1, 256], strides = [1, 1]} : vector<1x384xf32> to vector<1x256xf32>
    %283 = arith.addf %281, %282 : vector<1x256xf32>
    %284 = arith.negf %283 : vector<1x256xf32>
    %285 = math.exp %284 : vector<1x256xf32>
    %cst_76 = arith.constant 1.000000e+00 : f32
    %286 = vector.broadcast %cst_76 : f32 to vector<1x256xf32>
    %287 = arith.addf %286, %285 : vector<1x256xf32>
    %288 = arith.divf %286, %287 : vector<1x256xf32>
    %289 = vector.extract_strided_slice %288 {offsets = [0, 0], sizes = [1, 32], strides = [1, 1]} : vector<1x256xf32> to vector<1x32xf32>
    %290 = vector.extract_strided_slice %288 {offsets = [0, 128], sizes = [1, 32], strides = [1, 1]} : vector<1x256xf32> to vector<1x32xf32>
    %291 = vector.extract_strided_slice %278 {offsets = [0, 256], sizes = [1, 32], strides = [1, 1]} : vector<1x384xf32> to vector<1x32xf32>
    %292 = vector.extract_strided_slice %280 {offsets = [0, 256], sizes = [1, 32], strides = [1, 1]} : vector<1x384xf32> to vector<1x32xf32>
    %293 = arith.mulf %289, %292 : vector<1x32xf32>
    %294 = arith.addf %291, %293 : vector<1x32xf32>
    %295 = math.tanh %294 : vector<1x32xf32>
    %296 = arith.subf %277, %295 : vector<1x32xf32>
    %297 = arith.mulf %290, %296 : vector<1x32xf32>
    %298 = arith.addf %295, %297 : vector<1x32xf32>
    %299 = vector.extract_strided_slice %162 {offsets = [3, 0], sizes = [1, 384], strides = [1, 1]} : vector<8x384xf32> to vector<1x384xf32>
    %cst_77 = arith.constant dense<0.000000e+00> : vector<1x384xf32>
    %300 = tpu.matmul %298, %168, %cst_77 {dimension_numbers = #tpu.dot_dimension_numbers<[1], [0], [0], [1], [0, 0, 1, 1], [], []>} : vector<1x32xf32>, vector<32x384xf32>, vector<1x384xf32> -> vector<1x384xf32>
    %301 = arith.addf %300, %170 : vector<1x384xf32>
    %302 = vector.extract_strided_slice %299 {offsets = [0, 0], sizes = [1, 256], strides = [1, 1]} : vector<1x384xf32> to vector<1x256xf32>
    %303 = vector.extract_strided_slice %301 {offsets = [0, 0], sizes = [1, 256], strides = [1, 1]} : vector<1x384xf32> to vector<1x256xf32>
    %304 = arith.addf %302, %303 : vector<1x256xf32>
    %305 = arith.negf %304 : vector<1x256xf32>
    %306 = math.exp %305 : vector<1x256xf32>
    %cst_78 = arith.constant 1.000000e+00 : f32
    %307 = vector.broadcast %cst_78 : f32 to vector<1x256xf32>
    %308 = arith.addf %307, %306 : vector<1x256xf32>
    %309 = arith.divf %307, %308 : vector<1x256xf32>
    %310 = vector.extract_strided_slice %309 {offsets = [0, 0], sizes = [1, 32], strides = [1, 1]} : vector<1x256xf32> to vector<1x32xf32>
    %311 = vector.extract_strided_slice %309 {offsets = [0, 128], sizes = [1, 32], strides = [1, 1]} : vector<1x256xf32> to vector<1x32xf32>
    %312 = vector.extract_strided_slice %299 {offsets = [0, 256], sizes = [1, 32], strides = [1, 1]} : vector<1x384xf32> to vector<1x32xf32>
    %313 = vector.extract_strided_slice %301 {offsets = [0, 256], sizes = [1, 32], strides = [1, 1]} : vector<1x384xf32> to vector<1x32xf32>
    %314 = arith.mulf %310, %313 : vector<1x32xf32>
    %315 = arith.addf %312, %314 : vector<1x32xf32>
    %316 = math.tanh %315 : vector<1x32xf32>
    %317 = arith.subf %298, %316 : vector<1x32xf32>
    %318 = arith.mulf %311, %317 : vector<1x32xf32>
    %319 = arith.addf %316, %318 : vector<1x32xf32>
    %320 = vector.extract_strided_slice %167 {offsets = [3, 0], sizes = [1, 384], strides = [1, 1]} : vector<8x384xf32> to vector<1x384xf32>
    %cst_79 = arith.constant dense<0.000000e+00> : vector<1x384xf32>
    %321 = tpu.matmul %319, %169, %cst_79 {dimension_numbers = #tpu.dot_dimension_numbers<[1], [0], [0], [1], [0, 0, 1, 1], [], []>} : vector<1x32xf32>, vector<32x384xf32>, vector<1x384xf32> -> vector<1x384xf32>
    %322 = arith.addf %321, %171 : vector<1x384xf32>
    %323 = vector.extract_strided_slice %320 {offsets = [0, 0], sizes = [1, 256], strides = [1, 1]} : vector<1x384xf32> to vector<1x256xf32>
    %324 = vector.extract_strided_slice %322 {offsets = [0, 0], sizes = [1, 256], strides = [1, 1]} : vector<1x384xf32> to vector<1x256xf32>
    %325 = arith.addf %323, %324 : vector<1x256xf32>
    %326 = arith.negf %325 : vector<1x256xf32>
    %327 = math.exp %326 : vector<1x256xf32>
    %cst_80 = arith.constant 1.000000e+00 : f32
    %328 = vector.broadcast %cst_80 : f32 to vector<1x256xf32>
    %329 = arith.addf %328, %327 : vector<1x256xf32>
    %330 = arith.divf %328, %329 : vector<1x256xf32>
    %331 = vector.extract_strided_slice %330 {offsets = [0, 0], sizes = [1, 32], strides = [1, 1]} : vector<1x256xf32> to vector<1x32xf32>
    %332 = vector.extract_strided_slice %330 {offsets = [0, 128], sizes = [1, 32], strides = [1, 1]} : vector<1x256xf32> to vector<1x32xf32>
    %333 = vector.extract_strided_slice %320 {offsets = [0, 256], sizes = [1, 32], strides = [1, 1]} : vector<1x384xf32> to vector<1x32xf32>
    %334 = vector.extract_strided_slice %322 {offsets = [0, 256], sizes = [1, 32], strides = [1, 1]} : vector<1x384xf32> to vector<1x32xf32>
    %335 = arith.mulf %331, %334 : vector<1x32xf32>
    %336 = arith.addf %333, %335 : vector<1x32xf32>
    %337 = math.tanh %336 : vector<1x32xf32>
    %338 = arith.subf %319, %337 : vector<1x32xf32>
    %339 = arith.mulf %332, %338 : vector<1x32xf32>
    %340 = arith.addf %337, %339 : vector<1x32xf32>
    %341 = vector.extract_strided_slice %162 {offsets = [4, 0], sizes = [1, 384], strides = [1, 1]} : vector<8x384xf32> to vector<1x384xf32>
    %cst_81 = arith.constant dense<0.000000e+00> : vector<1x384xf32>
    %342 = tpu.matmul %340, %168, %cst_81 {dimension_numbers = #tpu.dot_dimension_numbers<[1], [0], [0], [1], [0, 0, 1, 1], [], []>} : vector<1x32xf32>, vector<32x384xf32>, vector<1x384xf32> -> vector<1x384xf32>
    %343 = arith.addf %342, %170 : vector<1x384xf32>
    %344 = vector.extract_strided_slice %341 {offsets = [0, 0], sizes = [1, 256], strides = [1, 1]} : vector<1x384xf32> to vector<1x256xf32>
    %345 = vector.extract_strided_slice %343 {offsets = [0, 0], sizes = [1, 256], strides = [1, 1]} : vector<1x384xf32> to vector<1x256xf32>
    %346 = arith.addf %344, %345 : vector<1x256xf32>
    %347 = arith.negf %346 : vector<1x256xf32>
    %348 = math.exp %347 : vector<1x256xf32>
    %cst_82 = arith.constant 1.000000e+00 : f32
    %349 = vector.broadcast %cst_82 : f32 to vector<1x256xf32>
    %350 = arith.addf %349, %348 : vector<1x256xf32>
    %351 = arith.divf %349, %350 : vector<1x256xf32>
    %352 = vector.extract_strided_slice %351 {offsets = [0, 0], sizes = [1, 32], strides = [1, 1]} : vector<1x256xf32> to vector<1x32xf32>
    %353 = vector.extract_strided_slice %351 {offsets = [0, 128], sizes = [1, 32], strides = [1, 1]} : vector<1x256xf32> to vector<1x32xf32>
    %354 = vector.extract_strided_slice %341 {offsets = [0, 256], sizes = [1, 32], strides = [1, 1]} : vector<1x384xf32> to vector<1x32xf32>
    %355 = vector.extract_strided_slice %343 {offsets = [0, 256], sizes = [1, 32], strides = [1, 1]} : vector<1x384xf32> to vector<1x32xf32>
    %356 = arith.mulf %352, %355 : vector<1x32xf32>
    %357 = arith.addf %354, %356 : vector<1x32xf32>
    %358 = math.tanh %357 : vector<1x32xf32>
    %359 = arith.subf %340, %358 : vector<1x32xf32>
    %360 = arith.mulf %353, %359 : vector<1x32xf32>
    %361 = arith.addf %358, %360 : vector<1x32xf32>
    %362 = vector.extract_strided_slice %167 {offsets = [4, 0], sizes = [1, 384], strides = [1, 1]} : vector<8x384xf32> to vector<1x384xf32>
    %cst_83 = arith.constant dense<0.000000e+00> : vector<1x384xf32>
    %363 = tpu.matmul %361, %169, %cst_83 {dimension_numbers = #tpu.dot_dimension_numbers<[1], [0], [0], [1], [0, 0, 1, 1], [], []>} : vector<1x32xf32>, vector<32x384xf32>, vector<1x384xf32> -> vector<1x384xf32>
    %364 = arith.addf %363, %171 : vector<1x384xf32>
    %365 = vector.extract_strided_slice %362 {offsets = [0, 0], sizes = [1, 256], strides = [1, 1]} : vector<1x384xf32> to vector<1x256xf32>
    %366 = vector.extract_strided_slice %364 {offsets = [0, 0], sizes = [1, 256], strides = [1, 1]} : vector<1x384xf32> to vector<1x256xf32>
    %367 = arith.addf %365, %366 : vector<1x256xf32>
    %368 = arith.negf %367 : vector<1x256xf32>
    %369 = math.exp %368 : vector<1x256xf32>
    %cst_84 = arith.constant 1.000000e+00 : f32
    %370 = vector.broadcast %cst_84 : f32 to vector<1x256xf32>
    %371 = arith.addf %370, %369 : vector<1x256xf32>
    %372 = arith.divf %370, %371 : vector<1x256xf32>
    %373 = vector.extract_strided_slice %372 {offsets = [0, 0], sizes = [1, 32], strides = [1, 1]} : vector<1x256xf32> to vector<1x32xf32>
    %374 = vector.extract_strided_slice %372 {offsets = [0, 128], sizes = [1, 32], strides = [1, 1]} : vector<1x256xf32> to vector<1x32xf32>
    %375 = vector.extract_strided_slice %362 {offsets = [0, 256], sizes = [1, 32], strides = [1, 1]} : vector<1x384xf32> to vector<1x32xf32>
    %376 = vector.extract_strided_slice %364 {offsets = [0, 256], sizes = [1, 32], strides = [1, 1]} : vector<1x384xf32> to vector<1x32xf32>
    %377 = arith.mulf %373, %376 : vector<1x32xf32>
    %378 = arith.addf %375, %377 : vector<1x32xf32>
    %379 = math.tanh %378 : vector<1x32xf32>
    %380 = arith.subf %361, %379 : vector<1x32xf32>
    %381 = arith.mulf %374, %380 : vector<1x32xf32>
    %382 = arith.addf %379, %381 : vector<1x32xf32>
    %383 = vector.extract_strided_slice %162 {offsets = [5, 0], sizes = [1, 384], strides = [1, 1]} : vector<8x384xf32> to vector<1x384xf32>
    %cst_85 = arith.constant dense<0.000000e+00> : vector<1x384xf32>
    %384 = tpu.matmul %382, %168, %cst_85 {dimension_numbers = #tpu.dot_dimension_numbers<[1], [0], [0], [1], [0, 0, 1, 1], [], []>} : vector<1x32xf32>, vector<32x384xf32>, vector<1x384xf32> -> vector<1x384xf32>
    %385 = arith.addf %384, %170 : vector<1x384xf32>
    %386 = vector.extract_strided_slice %383 {offsets = [0, 0], sizes = [1, 256], strides = [1, 1]} : vector<1x384xf32> to vector<1x256xf32>
    %387 = vector.extract_strided_slice %385 {offsets = [0, 0], sizes = [1, 256], strides = [1, 1]} : vector<1x384xf32> to vector<1x256xf32>
    %388 = arith.addf %386, %387 : vector<1x256xf32>
    %389 = arith.negf %388 : vector<1x256xf32>
    %390 = math.exp %389 : vector<1x256xf32>
    %cst_86 = arith.constant 1.000000e+00 : f32
    %391 = vector.broadcast %cst_86 : f32 to vector<1x256xf32>
    %392 = arith.addf %391, %390 : vector<1x256xf32>
    %393 = arith.divf %391, %392 : vector<1x256xf32>
    %394 = vector.extract_strided_slice %393 {offsets = [0, 0], sizes = [1, 32], strides = [1, 1]} : vector<1x256xf32> to vector<1x32xf32>
    %395 = vector.extract_strided_slice %393 {offsets = [0, 128], sizes = [1, 32], strides = [1, 1]} : vector<1x256xf32> to vector<1x32xf32>
    %396 = vector.extract_strided_slice %383 {offsets = [0, 256], sizes = [1, 32], strides = [1, 1]} : vector<1x384xf32> to vector<1x32xf32>
    %397 = vector.extract_strided_slice %385 {offsets = [0, 256], sizes = [1, 32], strides = [1, 1]} : vector<1x384xf32> to vector<1x32xf32>
    %398 = arith.mulf %394, %397 : vector<1x32xf32>
    %399 = arith.addf %396, %398 : vector<1x32xf32>
    %400 = math.tanh %399 : vector<1x32xf32>
    %401 = arith.subf %382, %400 : vector<1x32xf32>
    %402 = arith.mulf %395, %401 : vector<1x32xf32>
    %403 = arith.addf %400, %402 : vector<1x32xf32>
    %404 = vector.extract_strided_slice %167 {offsets = [5, 0], sizes = [1, 384], strides = [1, 1]} : vector<8x384xf32> to vector<1x384xf32>
    %cst_87 = arith.constant dense<0.000000e+00> : vector<1x384xf32>
    %405 = tpu.matmul %403, %169, %cst_87 {dimension_numbers = #tpu.dot_dimension_numbers<[1], [0], [0], [1], [0, 0, 1, 1], [], []>} : vector<1x32xf32>, vector<32x384xf32>, vector<1x384xf32> -> vector<1x384xf32>
    %406 = arith.addf %405, %171 : vector<1x384xf32>
    %407 = vector.extract_strided_slice %404 {offsets = [0, 0], sizes = [1, 256], strides = [1, 1]} : vector<1x384xf32> to vector<1x256xf32>
    %408 = vector.extract_strided_slice %406 {offsets = [0, 0], sizes = [1, 256], strides = [1, 1]} : vector<1x384xf32> to vector<1x256xf32>
    %409 = arith.addf %407, %408 : vector<1x256xf32>
    %410 = arith.negf %409 : vector<1x256xf32>
    %411 = math.exp %410 : vector<1x256xf32>
    %cst_88 = arith.constant 1.000000e+00 : f32
    %412 = vector.broadcast %cst_88 : f32 to vector<1x256xf32>
    %413 = arith.addf %412, %411 : vector<1x256xf32>
    %414 = arith.divf %412, %413 : vector<1x256xf32>
    %415 = vector.extract_strided_slice %414 {offsets = [0, 0], sizes = [1, 32], strides = [1, 1]} : vector<1x256xf32> to vector<1x32xf32>
    %416 = vector.extract_strided_slice %414 {offsets = [0, 128], sizes = [1, 32], strides = [1, 1]} : vector<1x256xf32> to vector<1x32xf32>
    %417 = vector.extract_strided_slice %404 {offsets = [0, 256], sizes = [1, 32], strides = [1, 1]} : vector<1x384xf32> to vector<1x32xf32>
    %418 = vector.extract_strided_slice %406 {offsets = [0, 256], sizes = [1, 32], strides = [1, 1]} : vector<1x384xf32> to vector<1x32xf32>
    %419 = arith.mulf %415, %418 : vector<1x32xf32>
    %420 = arith.addf %417, %419 : vector<1x32xf32>
    %421 = math.tanh %420 : vector<1x32xf32>
    %422 = arith.subf %403, %421 : vector<1x32xf32>
    %423 = arith.mulf %416, %422 : vector<1x32xf32>
    %424 = arith.addf %421, %423 : vector<1x32xf32>
    %425 = vector.extract_strided_slice %162 {offsets = [6, 0], sizes = [1, 384], strides = [1, 1]} : vector<8x384xf32> to vector<1x384xf32>
    %cst_89 = arith.constant dense<0.000000e+00> : vector<1x384xf32>
    %426 = tpu.matmul %424, %168, %cst_89 {dimension_numbers = #tpu.dot_dimension_numbers<[1], [0], [0], [1], [0, 0, 1, 1], [], []>} : vector<1x32xf32>, vector<32x384xf32>, vector<1x384xf32> -> vector<1x384xf32>
    %427 = arith.addf %426, %170 : vector<1x384xf32>
    %428 = vector.extract_strided_slice %425 {offsets = [0, 0], sizes = [1, 256], strides = [1, 1]} : vector<1x384xf32> to vector<1x256xf32>
    %429 = vector.extract_strided_slice %427 {offsets = [0, 0], sizes = [1, 256], strides = [1, 1]} : vector<1x384xf32> to vector<1x256xf32>
    %430 = arith.addf %428, %429 : vector<1x256xf32>
    %431 = arith.negf %430 : vector<1x256xf32>
    %432 = math.exp %431 : vector<1x256xf32>
    %cst_90 = arith.constant 1.000000e+00 : f32
    %433 = vector.broadcast %cst_90 : f32 to vector<1x256xf32>
    %434 = arith.addf %433, %432 : vector<1x256xf32>
    %435 = arith.divf %433, %434 : vector<1x256xf32>
    %436 = vector.extract_strided_slice %435 {offsets = [0, 0], sizes = [1, 32], strides = [1, 1]} : vector<1x256xf32> to vector<1x32xf32>
    %437 = vector.extract_strided_slice %435 {offsets = [0, 128], sizes = [1, 32], strides = [1, 1]} : vector<1x256xf32> to vector<1x32xf32>
    %438 = vector.extract_strided_slice %425 {offsets = [0, 256], sizes = [1, 32], strides = [1, 1]} : vector<1x384xf32> to vector<1x32xf32>
    %439 = vector.extract_strided_slice %427 {offsets = [0, 256], sizes = [1, 32], strides = [1, 1]} : vector<1x384xf32> to vector<1x32xf32>
    %440 = arith.mulf %436, %439 : vector<1x32xf32>
    %441 = arith.addf %438, %440 : vector<1x32xf32>
    %442 = math.tanh %441 : vector<1x32xf32>
    %443 = arith.subf %424, %442 : vector<1x32xf32>
    %444 = arith.mulf %437, %443 : vector<1x32xf32>
    %445 = arith.addf %442, %444 : vector<1x32xf32>
    %446 = vector.extract_strided_slice %167 {offsets = [6, 0], sizes = [1, 384], strides = [1, 1]} : vector<8x384xf32> to vector<1x384xf32>
    %cst_91 = arith.constant dense<0.000000e+00> : vector<1x384xf32>
    %447 = tpu.matmul %445, %169, %cst_91 {dimension_numbers = #tpu.dot_dimension_numbers<[1], [0], [0], [1], [0, 0, 1, 1], [], []>} : vector<1x32xf32>, vector<32x384xf32>, vector<1x384xf32> -> vector<1x384xf32>
    %448 = arith.addf %447, %171 : vector<1x384xf32>
    %449 = vector.extract_strided_slice %446 {offsets = [0, 0], sizes = [1, 256], strides = [1, 1]} : vector<1x384xf32> to vector<1x256xf32>
    %450 = vector.extract_strided_slice %448 {offsets = [0, 0], sizes = [1, 256], strides = [1, 1]} : vector<1x384xf32> to vector<1x256xf32>
    %451 = arith.addf %449, %450 : vector<1x256xf32>
    %452 = arith.negf %451 : vector<1x256xf32>
    %453 = math.exp %452 : vector<1x256xf32>
    %cst_92 = arith.constant 1.000000e+00 : f32
    %454 = vector.broadcast %cst_92 : f32 to vector<1x256xf32>
    %455 = arith.addf %454, %453 : vector<1x256xf32>
    %456 = arith.divf %454, %455 : vector<1x256xf32>
    %457 = vector.extract_strided_slice %456 {offsets = [0, 0], sizes = [1, 32], strides = [1, 1]} : vector<1x256xf32> to vector<1x32xf32>
    %458 = vector.extract_strided_slice %456 {offsets = [0, 128], sizes = [1, 32], strides = [1, 1]} : vector<1x256xf32> to vector<1x32xf32>
    %459 = vector.extract_strided_slice %446 {offsets = [0, 256], sizes = [1, 32], strides = [1, 1]} : vector<1x384xf32> to vector<1x32xf32>
    %460 = vector.extract_strided_slice %448 {offsets = [0, 256], sizes = [1, 32], strides = [1, 1]} : vector<1x384xf32> to vector<1x32xf32>
    %461 = arith.mulf %457, %460 : vector<1x32xf32>
    %462 = arith.addf %459, %461 : vector<1x32xf32>
    %463 = math.tanh %462 : vector<1x32xf32>
    %464 = arith.subf %445, %463 : vector<1x32xf32>
    %465 = arith.mulf %458, %464 : vector<1x32xf32>
    %466 = arith.addf %463, %465 : vector<1x32xf32>
    %467 = vector.extract_strided_slice %162 {offsets = [7, 0], sizes = [1, 384], strides = [1, 1]} : vector<8x384xf32> to vector<1x384xf32>
    %cst_93 = arith.constant dense<0.000000e+00> : vector<1x384xf32>
    %468 = tpu.matmul %466, %168, %cst_93 {dimension_numbers = #tpu.dot_dimension_numbers<[1], [0], [0], [1], [0, 0, 1, 1], [], []>} : vector<1x32xf32>, vector<32x384xf32>, vector<1x384xf32> -> vector<1x384xf32>
    %469 = arith.addf %468, %170 : vector<1x384xf32>
    %470 = vector.extract_strided_slice %467 {offsets = [0, 0], sizes = [1, 256], strides = [1, 1]} : vector<1x384xf32> to vector<1x256xf32>
    %471 = vector.extract_strided_slice %469 {offsets = [0, 0], sizes = [1, 256], strides = [1, 1]} : vector<1x384xf32> to vector<1x256xf32>
    %472 = arith.addf %470, %471 : vector<1x256xf32>
    %473 = arith.negf %472 : vector<1x256xf32>
    %474 = math.exp %473 : vector<1x256xf32>
    %cst_94 = arith.constant 1.000000e+00 : f32
    %475 = vector.broadcast %cst_94 : f32 to vector<1x256xf32>
    %476 = arith.addf %475, %474 : vector<1x256xf32>
    %477 = arith.divf %475, %476 : vector<1x256xf32>
    %478 = vector.extract_strided_slice %477 {offsets = [0, 0], sizes = [1, 32], strides = [1, 1]} : vector<1x256xf32> to vector<1x32xf32>
    %479 = vector.extract_strided_slice %477 {offsets = [0, 128], sizes = [1, 32], strides = [1, 1]} : vector<1x256xf32> to vector<1x32xf32>
    %480 = vector.extract_strided_slice %467 {offsets = [0, 256], sizes = [1, 32], strides = [1, 1]} : vector<1x384xf32> to vector<1x32xf32>
    %481 = vector.extract_strided_slice %469 {offsets = [0, 256], sizes = [1, 32], strides = [1, 1]} : vector<1x384xf32> to vector<1x32xf32>
    %482 = arith.mulf %478, %481 : vector<1x32xf32>
    %483 = arith.addf %480, %482 : vector<1x32xf32>
    %484 = math.tanh %483 : vector<1x32xf32>
    %485 = arith.subf %466, %484 : vector<1x32xf32>
    %486 = arith.mulf %479, %485 : vector<1x32xf32>
    %487 = arith.addf %484, %486 : vector<1x32xf32>
    %488 = vector.extract_strided_slice %167 {offsets = [7, 0], sizes = [1, 384], strides = [1, 1]} : vector<8x384xf32> to vector<1x384xf32>
    %cst_95 = arith.constant dense<0.000000e+00> : vector<1x384xf32>
    %489 = tpu.matmul %487, %169, %cst_95 {dimension_numbers = #tpu.dot_dimension_numbers<[1], [0], [0], [1], [0, 0, 1, 1], [], []>} : vector<1x32xf32>, vector<32x384xf32>, vector<1x384xf32> -> vector<1x384xf32>
    %490 = arith.addf %489, %171 : vector<1x384xf32>
    %491 = vector.extract_strided_slice %488 {offsets = [0, 0], sizes = [1, 256], strides = [1, 1]} : vector<1x384xf32> to vector<1x256xf32>
    %492 = vector.extract_strided_slice %490 {offsets = [0, 0], sizes = [1, 256], strides = [1, 1]} : vector<1x384xf32> to vector<1x256xf32>
    %493 = arith.addf %491, %492 : vector<1x256xf32>
    %494 = arith.negf %493 : vector<1x256xf32>
    %495 = math.exp %494 : vector<1x256xf32>
    %cst_96 = arith.constant 1.000000e+00 : f32
    %496 = vector.broadcast %cst_96 : f32 to vector<1x256xf32>
    %497 = arith.addf %496, %495 : vector<1x256xf32>
    %498 = arith.divf %496, %497 : vector<1x256xf32>
    %499 = vector.extract_strided_slice %498 {offsets = [0, 0], sizes = [1, 32], strides = [1, 1]} : vector<1x256xf32> to vector<1x32xf32>
    %500 = vector.extract_strided_slice %498 {offsets = [0, 128], sizes = [1, 32], strides = [1, 1]} : vector<1x256xf32> to vector<1x32xf32>
    %501 = vector.extract_strided_slice %488 {offsets = [0, 256], sizes = [1, 32], strides = [1, 1]} : vector<1x384xf32> to vector<1x32xf32>
    %502 = vector.extract_strided_slice %490 {offsets = [0, 256], sizes = [1, 32], strides = [1, 1]} : vector<1x384xf32> to vector<1x32xf32>
    %503 = arith.mulf %499, %502 : vector<1x32xf32>
    %504 = arith.addf %501, %503 : vector<1x32xf32>
    %505 = math.tanh %504 : vector<1x32xf32>
    %506 = arith.subf %487, %505 : vector<1x32xf32>
    %507 = arith.mulf %500, %506 : vector<1x32xf32>
    %508 = arith.addf %505, %507 : vector<1x32xf32>
    %509 = tpu.concatenate %214, %256, %298, %340, %382, %424, %466, %508 in 0 : vector<1x32xf32>, vector<1x32xf32>, vector<1x32xf32>, vector<1x32xf32>, vector<1x32xf32>, vector<1x32xf32>, vector<1x32xf32>, vector<1x32xf32> -> vector<8x32xf32>
    %c0_97 = arith.constant 0 : index
    %c1536 = arith.constant 1536 : index
    %510 = vector.load %arg3[%c0_97, %c1536] : memref<32x1664xf32, #tpu.memory_space<vmem>>, vector<32x128xf32>
    %cst_98 = arith.constant dense<0.000000e+00> : vector<8x128xf32>
    %511 = tpu.matmul %509, %510, %cst_98 {dimension_numbers = #tpu.dot_dimension_numbers<[1], [0], [0], [1], [0, 0, 1, 1], [], []>} : vector<8x32xf32>, vector<32x128xf32>, vector<8x128xf32> -> vector<8x128xf32>
    %c0_99 = arith.constant 0 : index
    %c1536_100 = arith.constant 1536 : index
    %512 = vector.load %arg4[%c0_99, %c1536_100] : memref<1x1664xf32, #tpu.memory_space<vmem>>, vector<1x128xf32>
    %513 = vector.broadcast %512 : vector<1x128xf32> to vector<8x128xf32>
    %514 = arith.addf %511, %513 : vector<8x128xf32>
    %cst_101 = arith.constant dense<0xFF800000> : vector<8xf32>
    %515 = vector.multi_reduction <maximumf>, %514, %cst_101 [1] : vector<8x128xf32> to vector<8xf32>
    %516 = vector.shape_cast %515 : vector<8xf32> to vector<8x1xf32>
    %517 = vector.broadcast %516 : vector<8x1xf32> to vector<8x128xf32>
    %518 = arith.subf %514, %517 : vector<8x128xf32>
    %519 = math.exp %518 : vector<8x128xf32>
    %cst_102 = arith.constant dense<0.000000e+00> : vector<8xf32>
    %520 = vector.multi_reduction <add>, %519, %cst_102 [1] : vector<8x128xf32> to vector<8xf32>
    %521 = vector.shape_cast %520 : vector<8xf32> to vector<8x1xf32>
    %522 = math.log %521 : vector<8x1xf32>
    %523 = vector.broadcast %522 : vector<8x1xf32> to vector<8x128xf32>
    %524 = arith.subf %518, %523 : vector<8x128xf32>
    %c0_103 = arith.constant 0 : index
    %c0_104 = arith.constant 0 : index
    %525 = vector.load %arg5[%c0_103, %c0_104] : memref<8x128xf32, #tpu.memory_space<vmem>>, vector<8x128xf32>
    tpu.vector_store %arg5[%c0_103, %c0_104], %524 {strides = array<i32>} : memref<8x128xf32, #tpu.memory_space<vmem>>, vector<8x128xf32>,
    return
  }
}

</mosaic_0001>

<llo_original>
// kernel: seq2seq_forward.1
$region0: #{seq2seq_forward.1}
  #allocation0 [shape = 'u32[]', space=smem, size = 0x4, offset = 0x4, fixed_abs, tag = 'smem constant byte address 0x4 - core index']
  #allocation1 [shape = 'u32[144,128]{1,0:T(1,128)}', space=vmem, size = 0x12000, scoped, tag = 'internal scratch']
  %s0 = inlined_call_operand.vmem [shape: s32[8], index: 0, kind: input, shape index: {}]
  %s1 = inlined_call_operand.vmem [shape: s32[8], index: 1, kind: input, shape index: {}]
  %s2 = inlined_call_operand.vmem [shape: f32[90,32], index: 2, kind: input, shape index: {}]
  %s3 = inlined_call_operand.hbm [shape: f32[32,1664], index: 3, kind: input, shape index: {}]
  %s4 = inlined_call_operand.vmem [shape: f32[1,1664], index: 4, kind: input, shape index: {}]
  %s5 = inlined_call_operand.hbm [shape: f32[8,128], index: 5, kind: output, shape index: {}]
  %s6 = sld [smem:[#allocation0]]
  $region42: #{seq2seq_forward.1} parent=0
    _
  %s8 = ssub.s32 1, %s6
  %s9 = scalar_select 0, %s8, %s6
  $region1: #{seq2seq_forward.1} parent=0
    #allocation2 [shape = 'u8[512]{0}', space=smem, size = 0x200, scoped, tag = 'input window, operand 0, single buffered']
    #allocation3 [shape = 's32[1]{0}', space=sflag, size = 0x4, scoped, tag = 'scoped memory for seq2seq_forward.1']
    #allocation4 [shape = 's32[1]{0}', space=sflag, size = 0x4, scoped, tag = 'scoped memory for seq2seq_forward.1']
    #allocation5 [shape = 's32[1]{0}', space=sflag, size = 0x4, scoped, tag = 'scoped memory for seq2seq_forward.1']
    #allocation6 [shape = 'u8[512]{0}', space=smem, size = 0x200, scoped, tag = 'input window, operand 1, single buffered']
    #allocation7 [shape = 's32[1]{0}', space=sflag, size = 0x4, scoped, tag = 'scoped memory for seq2seq_forward.1']
    #allocation8 [shape = 'u8[212992]{0}', space=vmem, size = 0x34000, scoped, tag = 'input window, operand 3, single buffered']
    #allocation9 [shape = 'u8[4096]{0}', space=vmem, size = 0x1000, scoped, tag = 'output window, operand 0, single buffered']
    %10 = vsyncpa [#allocation5], 0
    %11 = vsyncpa [#allocation7], 0
    %12 = vsyncpa [#allocation3], 0
    %13 = vsyncpa [#allocation4], 0
    // Predicated region
    $region2: #{seq2seq_forward.1} parent=1 // pred_check
      _
    $region3: #{seq2seq_forward.1} parent=1 // pred_check_branch
      %15 = sbr.rel (0) target = $region5
    $region4: #{seq2seq_forward.1} parent=1 // pred_region
      %s17 = ssub.s32 16, 16
      %18 = vsyncadd [#allocation5], %s17
      %s20 = sshll.u32 %s0, 4
      %s21 = int_to_ptr.vmem [resolvable:$true] %s20
      %23 = dma.vmem_to_smem %s21, 16, [#allocation2], [#allocation5]
    $region5: #{seq2seq_forward.1} parent=1 // pred_fallthru
      _
    // Predicated region
    $region6: #{seq2seq_forward.1} parent=1 // pred_check
      _
    $region7: #{seq2seq_forward.1} parent=1 // pred_check_branch
      %25 = sbr.rel (0) target = $region9
    $region8: #{seq2seq_forward.1} parent=1 // pred_region
      %s27 = ssub.s32 16, 16
      %28 = vsyncadd [#allocation7], %s27
      %s30 = sshll.u32 %s1, 4
      %s31 = int_to_ptr.vmem [resolvable:$true] %s30
      %33 = dma.vmem_to_smem %s31, 16, [#allocation6], [#allocation7]
    $region9: #{seq2seq_forward.1} parent=1 // pred_fallthru
      _
    // Predicated region
    $region10: #{seq2seq_forward.1} parent=1 // pred_check
      _
    $region11: #{seq2seq_forward.1} parent=1 // pred_check_branch
      %35 = sbr.rel (0) target = $region13
    $region12: #{seq2seq_forward.1} parent=1 // pred_region
      _
    $region13: #{seq2seq_forward.1} parent=1 // pred_fallthru
      _
    // Predicated region
    $region14: #{seq2seq_forward.1} parent=1 // pred_check
      _
    $region15: #{seq2seq_forward.1} parent=1 // pred_check_branch
      %37 = sbr.rel (0) target = $region17
    $region16: #{seq2seq_forward.1} parent=1 // pred_region
      %s39 = ssub.s32 6656, 6656
      %40 = vsyncadd [#allocation3], %s39
      %s41 = sshll.u32 [#allocation8], 4
      %s42 = int_to_ptr.vmem [resolvable:$true] %s41
      %47 = dma.hbm_to_vmem [thread:$0]  %s3, 6656, %s42, [#allocation3], 1664, 1664, 104
    $region17: #{seq2seq_forward.1} parent=1 // pred_fallthru
      _
    // Predicated region
    $region18: #{seq2seq_forward.1} parent=1 // pred_check
      _
    $region19: #{seq2seq_forward.1} parent=1 // pred_check_branch
      %49 = sbr.rel (0) target = $region21
    $region20: #{seq2seq_forward.1} parent=1 // pred_region
      _
    $region21: #{seq2seq_forward.1} parent=1 // pred_fallthru
      _
    // Predicated region
    $region22: #{seq2seq_forward.1} parent=1 // pred_check
      _
    $region23: #{seq2seq_forward.1} parent=1 // pred_check_branch
      %51 = sbr.rel (0) target = $region25
    $region24: #{seq2seq_forward.1} parent=1 // pred_region
      %52 = dma.done [#allocation5], 16
    $region25: #{seq2seq_forward.1} parent=1 // pred_fallthru
      _
    // Predicated region
    $region26: #{seq2seq_forward.1} parent=1 // pred_check
      _
    $region27: #{seq2seq_forward.1} parent=1 // pred_check_branch
      %54 = sbr.rel (0) target = $region29
    $region28: #{seq2seq_forward.1} parent=1 // pred_region
      %55 = dma.done [#allocation7], 16
    $region29: #{seq2seq_forward.1} parent=1 // pred_fallthru
      _
    // Predicated region
    $region30: #{seq2seq_forward.1} parent=1 // pred_check
      _
    $region31: #{seq2seq_forward.1} parent=1 // pred_check_branch
      %57 = sbr.rel (0) target = $region33
    $region32: #{seq2seq_forward.1} parent=1 // pred_region
      %58 = dma.done [#allocation3], 6656
    $region33: #{seq2seq_forward.1} parent=1 // pred_fallthru
      _
    %59 = sfence
    %v60 = vld [vmem:[%s2] sm:$0xff]
    %v61 = vld [vmem:[%s2 + $0x8] sm:$0xff]
    %v62 = vld [vmem:[%s2 + $0x10] sm:$0xff]
    %v63 = vld [vmem:[%s2 + $0x18] sm:$0xff]
    %v64 = vld [vmem:[%s2 + $0x20] sm:$0xff]
    %v65 = vld [vmem:[%s2 + $0x28] sm:$0xff]
    %v66 = vld [vmem:[%s2 + $0x30] sm:$0xff]
    %v67 = vld [vmem:[%s2 + $0x38] sm:$0xff]
    %v68 = vld [vmem:[%s2 + $0x40] sm:$0xff]
    %v69 = vld [vmem:[%s2 + $0x48] sm:$0xff]
    %v70 = vld [vmem:[%s2 + $0x50] sm:$0xff]
    %v71 = vld [vmem:[%s2 + $0x58] sm:$0x3]
    %v72 = vlaneseq
    %v73 = vshrl.u32 %v72, 7
    %v74 = vadd.s32 %v73, 8
    %v75 = vadd.s32 %v73, 16
    %v76 = vadd.s32 %v73, 24
    %v77 = vadd.s32 %v73, 32
    %v78 = vadd.s32 %v73, 40
    %v79 = vadd.s32 %v73, 48
    %v80 = vadd.s32 %v73, 56
    %v81 = vadd.s32 %v73, 64
    %v82 = vadd.s32 %v73, 72
    %v83 = vadd.s32 %v73, 80
    %v84 = vadd.s32 %v73, 88
    %s85 = sld [smem:[#allocation2]]
    %v86 = vstv %s85
    %vm87 = vcmp.eq.s32.totalorder %v73, %v86
    %vm88 = vcmp.eq.s32.totalorder %v74, %v86
    %vm89 = vcmp.eq.s32.totalorder %v75, %v86
    %vm90 = vcmp.eq.s32.totalorder %v76, %v86
    %vm91 = vcmp.eq.s32.totalorder %v77, %v86
    %vm92 = vcmp.eq.s32.totalorder %v78, %v86
    %vm93 = vcmp.eq.s32.totalorder %v79, %v86
    %vm94 = vcmp.eq.s32.totalorder %v80, %v86
    %vm95 = vcmp.eq.s32.totalorder %v81, %v86
    %vm96 = vcmp.eq.s32.totalorder %v82, %v86
    %vm97 = vcmp.eq.s32.totalorder %v83, %v86
    %vm98 = vcmp.eq.s32.totalorder %v84, %v86
    %v99 = vsel %vm87, 1, 0
    %v100 = vsel %vm88, 1, 0
    %v101 = vsel %vm89, 1, 0
    %v102 = vsel %vm90, 1, 0
    %v103 = vsel %vm91, 1, 0
    %v104 = vsel %vm92, 1, 0
    %v105 = vsel %vm93, 1, 0
    %v106 = vsel %vm94, 1, 0
    %v107 = vsel %vm95, 1, 0
    %v108 = vsel %vm96, 1, 0
    %v109 = vsel %vm97, 1, 0
    %v110 = vsel %vm98, 1, 0
    %vm111 = vcmp.eq.s32.totalorder %v99, 1
    %vm112 = vcmp.eq.s32.totalorder %v100, 1
    %vm113 = vcmp.eq.s32.totalorder %v101, 1
    %vm114 = vcmp.eq.s32.totalorder %v102, 1
    %vm115 = vcmp.eq.s32.totalorder %v103, 1
    %vm116 = vcmp.eq.s32.totalorder %v104, 1
    %vm117 = vcmp.eq.s32.totalorder %v105, 1
    %vm118 = vcmp.eq.s32.totalorder %v106, 1
    %vm119 = vcmp.eq.s32.totalorder %v107, 1
    %vm120 = vcmp.eq.s32.totalorder %v108, 1
    %vm121 = vcmp.eq.s32.totalorder %v109, 1
    %vm122 = vcmp.eq.s32.totalorder %v110, 1
    %v123 = vsel %vm111, %v60, 0.0
    %v124 = vsel %vm112, %v61, 0.0
    %v125 = vsel %vm113, %v62, 0.0
    %v126 = vsel %vm114, %v63, 0.0
    %v127 = vsel %vm115, %v64, 0.0
    %v128 = vsel %vm116, %v65, 0.0
    %v129 = vsel %vm117, %v66, 0.0
    %v130 = vsel %vm118, %v67, 0.0
    %v131 = vsel %vm119, %v68, 0.0
    %v132 = vsel %vm120, %v69, 0.0
    %v133 = vsel %vm121, %v70, 0.0
    %v134 = vsel %vm122, %v71, 0.0
    %vm135 = vcmask 261120
    %v136 = vsel %vm135, %v123, 0.0
    %v137 = vsel %vm135, %v124, 0.0
    %v138 = vadd.f32 %v136, %v137
    %v139 = vsel %vm135, %v125, 0.0
    %v140 = vadd.f32 %v138, %v139
    %v141 = vsel %vm135, %v126, 0.0
    %v142 = vadd.f32 %v140, %v141
    %v143 = vsel %vm135, %v127, 0.0
    %v144 = vadd.f32 %v142, %v143
    %v145 = vsel %vm135, %v128, 0.0
    %v146 = vadd.f32 %v144, %v145
    %v147 = vsel %vm135, %v129, 0.0
    %v148 = vadd.f32 %v146, %v147
    %v149 = vsel %vm135, %v130, 0.0
    %v150 = vadd.f32 %v148, %v149
    %v151 = vsel %vm135, %v131, 0.0
    %v152 = vadd.f32 %v150, %v151
    %v153 = vsel %vm135, %v132, 0.0
    %v154 = vadd.f32 %v152, %v153
    %v155 = vsel %vm135, %v133, 0.0
    %v156 = vadd.f32 %v154, %v155
    %vm157 = vcmask 254976
    %v158 = vsel %vm157, %v134, 0.0
    %v159 = vadd.f32 %v156, %v158
    %v160 = vrot.slane %v159, 4
    %v161 = vadd.f32 %v159, %v160
    %v162 = vrot.slane %v161, 2
    %v163 = vadd.f32 %v161, %v162
    %v164 = vrot.slane %v163, 1
    %v165 = vadd.f32 %v163, %v164
    %s166 = sld [smem:[#allocation2 + $0x1]]
    %v167 = vstv %s166
    %vm168 = vcmp.eq.s32.totalorder %v73, %v167
    %vm169 = vcmp.eq.s32.totalorder %v74, %v167
    %vm170 = vcmp.eq.s32.totalorder %v75, %v167
    %vm171 = vcmp.eq.s32.totalorder %v76, %v167
    %vm172 = vcmp.eq.s32.totalorder %v77, %v167
    %vm173 = vcmp.eq.s32.totalorder %v78, %v167
    %vm174 = vcmp.eq.s32.totalorder %v79, %v167
    %vm175 = vcmp.eq.s32.totalorder %v80, %v167
    %vm176 = vcmp.eq.s32.totalorder %v81, %v167
    %vm177 = vcmp.eq.s32.totalorder %v82, %v167
    %vm178 = vcmp.eq.s32.totalorder %v83, %v167
    %vm179 = vcmp.eq.s32.totalorder %v84, %v167
    %v180 = vsel %vm168, 1, 0
    %v181 = vsel %vm169, 1, 0
    %v182 = vsel %vm170, 1, 0
    %v183 = vsel %vm171, 1, 0
    %v184 = vsel %vm172, 1, 0
    %v185 = vsel %vm173, 1, 0
    %v186 = vsel %vm174, 1, 0
    %v187 = vsel %vm175, 1, 0
    %v188 = vsel %vm176, 1, 0
    %v189 = vsel %vm177, 1, 0
    %v190 = vsel %vm178, 1, 0
    %v191 = vsel %vm179, 1, 0
    %vm192 = vcmp.eq.s32.totalorder %v180, 1
    %vm193 = vcmp.eq.s32.totalorder %v181, 1
    %vm194 = vcmp.eq.s32.totalorder %v182, 1
    %vm195 = vcmp.eq.s32.totalorder %v183, 1
    %vm196 = vcmp.eq.s32.totalorder %v184, 1
    %vm197 = vcmp.eq.s32.totalorder %v185, 1
    %vm198 = vcmp.eq.s32.totalorder %v186, 1
    %vm199 = vcmp.eq.s32.totalorder %v187, 1
    %vm200 = vcmp.eq.s32.totalorder %v188, 1
    %vm201 = vcmp.eq.s32.totalorder %v189, 1
    %vm202 = vcmp.eq.s32.totalorder %v190, 1
    %vm203 = vcmp.eq.s32.totalorder %v191, 1
    %v204 = vsel %vm192, %v60, 0.0
    %v205 = vsel %vm193, %v61, 0.0
    %v206 = vsel %vm194, %v62, 0.0
    %v207 = vsel %vm195, %v63, 0.0
    %v208 = vsel %vm196, %v64, 0.0
    %v209 = vsel %vm197, %v65, 0.0
    %v210 = vsel %vm198, %v66, 0.0
    %v211 = vsel %vm199, %v67, 0.0
    %v212 = vsel %vm200, %v68, 0.0
    %v213 = vsel %vm201, %v69, 0.0
    %v214 = vsel %vm202, %v70, 0.0
    %v215 = vsel %vm203, %v71, 0.0
    %v216 = vsel %vm135, %v204, 0.0
    %v217 = vsel %vm135, %v205, 0.0
    %v218 = vadd.f32 %v216, %v217
    %v219 = vsel %vm135, %v206, 0.0
    %v220 = vadd.f32 %v218, %v219
    %v221 = vsel %vm135, %v207, 0.0
    %v222 = vadd.f32 %v220, %v221
    %v223 = vsel %vm135, %v208, 0.0
    %v224 = vadd.f32 %v222, %v223
    %v225 = vsel %vm135, %v209, 0.0
    %v226 = vadd.f32 %v224, %v225
    %v227 = vsel %vm135, %v210, 0.0
    %v228 = vadd.f32 %v226, %v227
    %v229 = vsel %vm135, %v211, 0.0
    %v230 = vadd.f32 %v228, %v229
    %v231 = vsel %vm135, %v212, 0.0
    %v232 = vadd.f32 %v230, %v231
    %v233 = vsel %vm135, %v213, 0.0
    %v234 = vadd.f32 %v232, %v233
    %v235 = vsel %vm135, %v214, 0.0
    %v236 = vadd.f32 %v234, %v235
    %v237 = vsel %vm157, %v215, 0.0
    %v238 = vadd.f32 %v236, %v237
    %v239 = vrot.slane %v238, 4
    %v240 = vadd.f32 %v238, %v239
    %v241 = vrot.slane %v240, 2
    %v242 = vadd.f32 %v240, %v241
    %v243 = vrot.slane %v242, 1
    %v244 = vadd.f32 %v242, %v243
    %s245 = sld [smem:[#allocation2 + $0x2]]
    %v246 = vstv %s245
    %vm247 = vcmp.eq.s32.totalorder %v73, %v246
    %vm248 = vcmp.eq.s32.totalorder %v74, %v246
    %vm249 = vcmp.eq.s32.totalorder %v75, %v246
    %vm250 = vcmp.eq.s32.totalorder %v76, %v246
    %vm251 = vcmp.eq.s32.totalorder %v77, %v246
    %vm252 = vcmp.eq.s32.totalorder %v78, %v246
    %vm253 = vcmp.eq.s32.totalorder %v79, %v246
    %vm254 = vcmp.eq.s32.totalorder %v80, %v246
    %vm255 = vcmp.eq.s32.totalorder %v81, %v246
    %vm256 = vcmp.eq.s32.totalorder %v82, %v246
    %vm257 = vcmp.eq.s32.totalorder %v83, %v246
    %vm258 = vcmp.eq.s32.totalorder %v84, %v246
    %v259 = vsel %vm247, 1, 0
    %v260 = vsel %vm248, 1, 0
    %v261 = vsel %vm249, 1, 0
    %v262 = vsel %vm250, 1, 0
    %v263 = vsel %vm251, 1, 0
    %v264 = vsel %vm252, 1, 0
    %v265 = vsel %vm253, 1, 0
    %v266 = vsel %vm254, 1, 0
    %v267 = vsel %vm255, 1, 0
    %v268 = vsel %vm256, 1, 0
    %v269 = vsel %vm257, 1, 0
    %v270 = vsel %vm258, 1, 0
    %vm271 = vcmp.eq.s32.totalorder %v259, 1
    %vm272 = vcmp.eq.s32.totalorder %v260, 1
    %vm273 = vcmp.eq.s32.totalorder %v261, 1
    %vm274 = vcmp.eq.s32.totalorder %v262, 1
    %vm275 = vcmp.eq.s32.totalorder %v263, 1
    %vm276 = vcmp.eq.s32.totalorder %v264, 1
    %vm277 = vcmp.eq.s32.totalorder %v265, 1
    %vm278 = vcmp.eq.s32.totalorder %v266, 1
    %vm279 = vcmp.eq.s32.totalorder %v267, 1
    %vm280 = vcmp.eq.s32.totalorder %v268, 1
    %vm281 = vcmp.eq.s32.totalorder %v269, 1
    %vm282 = vcmp.eq.s32.totalorder %v270, 1
    %v283 = vsel %vm271, %v60, 0.0
    %v284 = vsel %vm272, %v61, 0.0
    %v285 = vsel %vm273, %v62, 0.0
    %v286 = vsel %vm274, %v63, 0.0
    %v287 = vsel %vm275, %v64, 0.0
    %v288 = vsel %vm276, %v65, 0.0
    %v289 = vsel %vm277, %v66, 0.0
    %v290 = vsel %vm278, %v67, 0.0
    %v291 = vsel %vm279, %v68, 0.0
    %v292 = vsel %vm280, %v69, 0.0
    %v293 = vsel %vm281, %v70, 0.0
    %v294 = vsel %vm282, %v71, 0.0
    %v295 = vsel %vm135, %v283, 0.0
    %v296 = vsel %vm135, %v284, 0.0
    %v297 = vadd.f32 %v295, %v296
    %v298 = vsel %vm135, %v285, 0.0
    %v299 = vadd.f32 %v297, %v298
    %v300 = vsel %vm135, %v286, 0.0
    %v301 = vadd.f32 %v299, %v300
    %v302 = vsel %vm135, %v287, 0.0
    %v303 = vadd.f32 %v301, %v302
    %v304 = vsel %vm135, %v288, 0.0
    %v305 = vadd.f32 %v303, %v304
    %v306 = vsel %vm135, %v289, 0.0
    %v307 = vadd.f32 %v305, %v306
    %v308 = vsel %vm135, %v290, 0.0
    %v309 = vadd.f32 %v307, %v308
    %v310 = vsel %vm135, %v291, 0.0
    %v311 = vadd.f32 %v309, %v310
    %v312 = vsel %vm135, %v292, 0.0
    %v313 = vadd.f32 %v311, %v312
    %v314 = vsel %vm135, %v293, 0.0
    %v315 = vadd.f32 %v313, %v314
    %v316 = vsel %vm157, %v294, 0.0
    %v317 = vadd.f32 %v315, %v316
    %v318 = vrot.slane %v317, 4
    %v319 = vadd.f32 %v317, %v318
    %v320 = vrot.slane %v319, 2
    %v321 = vadd.f32 %v319, %v320
    %v322 = vrot.slane %v321, 1
    %v323 = vadd.f32 %v321, %v322
    %s324 = sld [smem:[#allocation2 + $0x3]]
    %v325 = vstv %s324
    %vm326 = vcmp.eq.s32.totalorder %v73, %v325
    %vm327 = vcmp.eq.s32.totalorder %v74, %v325
    %vm328 = vcmp.eq.s32.totalorder %v75, %v325
    %vm329 = vcmp.eq.s32.totalorder %v76, %v325
    %vm330 = vcmp.eq.s32.totalorder %v77, %v325
    %vm331 = vcmp.eq.s32.totalorder %v78, %v325
    %vm332 = vcmp.eq.s32.totalorder %v79, %v325
    %vm333 = vcmp.eq.s32.totalorder %v80, %v325
    %vm334 = vcmp.eq.s32.totalorder %v81, %v325
    %vm335 = vcmp.eq.s32.totalorder %v82, %v325
    %vm336 = vcmp.eq.s32.totalorder %v83, %v325
    %vm337 = vcmp.eq.s32.totalorder %v84, %v325
    %v338 = vsel %vm326, 1, 0
    %v339 = vsel %vm327, 1, 0
    %v340 = vsel %vm328, 1, 0
    %v341 = vsel %vm329, 1, 0
    %v342 = vsel %vm330, 1, 0
    %v343 = vsel %vm331, 1, 0
    %v344 = vsel %vm332, 1, 0
    %v345 = vsel %vm333, 1, 0
    %v346 = vsel %vm334, 1, 0
    %v347 = vsel %vm335, 1, 0
    %v348 = vsel %vm336, 1, 0
    %v349 = vsel %vm337, 1, 0
    %vm350 = vcmp.eq.s32.totalorder %v338, 1
    %vm351 = vcmp.eq.s32.totalorder %v339, 1
    %vm352 = vcmp.eq.s32.totalorder %v340, 1
    %vm353 = vcmp.eq.s32.totalorder %v341, 1
    %vm354 = vcmp.eq.s32.totalorder %v342, 1
    %vm355 = vcmp.eq.s32.totalorder %v343, 1
    %vm356 = vcmp.eq.s32.totalorder %v344, 1
    %vm357 = vcmp.eq.s32.totalorder %v345, 1
    %vm358 = vcmp.eq.s32.totalorder %v346, 1
    %vm359 = vcmp.eq.s32.totalorder %v347, 1
    %vm360 = vcmp.eq.s32.totalorder %v348, 1
    %vm361 = vcmp.eq.s32.totalorder %v349, 1
    %v362 = vsel %vm350, %v60, 0.0
    %v363 = vsel %vm351, %v61, 0.0
    %v364 = vsel %vm352, %v62, 0.0
    %v365 = vsel %vm353, %v63, 0.0
    %v366 = vsel %vm354, %v64, 0.0
    %v367 = vsel %vm355, %v65, 0.0
    %v368 = vsel %vm356, %v66, 0.0
    %v369 = vsel %vm357, %v67, 0.0
    %v370 = vsel %vm358, %v68, 0.0
    %v371 = vsel %vm359, %v69, 0.0
    %v372 = vsel %vm360, %v70, 0.0
    %v373 = vsel %vm361, %v71, 0.0
    %v374 = vsel %vm135, %v362, 0.0
    %v375 = vsel %vm135, %v363, 0.0
    %v376 = vadd.f32 %v374, %v375
    %v377 = vsel %vm135, %v364, 0.0
    %v378 = vadd.f32 %v376, %v377
    %v379 = vsel %vm135, %v365, 0.0
    %v380 = vadd.f32 %v378, %v379
    %v381 = vsel %vm135, %v366, 0.0
    %v382 = vadd.f32 %v380, %v381
    %v383 = vsel %vm135, %v367, 0.0
    %v384 = vadd.f32 %v382, %v383
    %v385 = vsel %vm135, %v368, 0.0
    %v386 = vadd.f32 %v384, %v385
    %v387 = vsel %vm135, %v369, 0.0
    %v388 = vadd.f32 %v386, %v387
    %v389 = vsel %vm135, %v370, 0.0
    %v390 = vadd.f32 %v388, %v389
    %v391 = vsel %vm135, %v371, 0.0
    %v392 = vadd.f32 %v390, %v391
    %v393 = vsel %vm135, %v372, 0.0
    %v394 = vadd.f32 %v392, %v393
    %v395 = vsel %vm157, %v373, 0.0
    %v396 = vadd.f32 %v394, %v395
    %v397 = vrot.slane %v396, 4
    %v398 = vadd.f32 %v396, %v397
    %v399 = vrot.slane %v398, 2
    %v400 = vadd.f32 %v398, %v399
    %v401 = vrot.slane %v400, 1
    %v402 = vadd.f32 %v400, %v401
    %s403 = sld [smem:[#allocation2 + $0x4]]
    %v404 = vstv %s403
    %vm405 = vcmp.eq.s32.totalorder %v73, %v404
    %vm406 = vcmp.eq.s32.totalorder %v74, %v404
    %vm407 = vcmp.eq.s32.totalorder %v75, %v404
    %vm408 = vcmp.eq.s32.totalorder %v76, %v404
    %vm409 = vcmp.eq.s32.totalorder %v77, %v404
    %vm410 = vcmp.eq.s32.totalorder %v78, %v404
    %vm411 = vcmp.eq.s32.totalorder %v79, %v404
    %vm412 = vcmp.eq.s32.totalorder %v80, %v404
    %vm413 = vcmp.eq.s32.totalorder %v81, %v404
    %vm414 = vcmp.eq.s32.totalorder %v82, %v404
    %vm415 = vcmp.eq.s32.totalorder %v83, %v404
    %vm416 = vcmp.eq.s32.totalorder %v84, %v404
    %v417 = vsel %vm405, 1, 0
    %v418 = vsel %vm406, 1, 0
    %v419 = vsel %vm407, 1, 0
    %v420 = vsel %vm408, 1, 0
    %v421 = vsel %vm409, 1, 0
    %v422 = vsel %vm410, 1, 0
    %v423 = vsel %vm411, 1, 0
    %v424 = vsel %vm412, 1, 0
    %v425 = vsel %vm413, 1, 0
    %v426 = vsel %vm414, 1, 0
    %v427 = vsel %vm415, 1, 0
    %v428 = vsel %vm416, 1, 0
    %vm429 = vcmp.eq.s32.totalorder %v417, 1
    %vm430 = vcmp.eq.s32.totalorder %v418, 1
    %vm431 = vcmp.eq.s32.totalorder %v419, 1
    %vm432 = vcmp.eq.s32.totalorder %v420, 1
    %vm433 = vcmp.eq.s32.totalorder %v421, 1
    %vm434 = vcmp.eq.s32.totalorder %v422, 1
    %vm435 = vcmp.eq.s32.totalorder %v423, 1
    %vm436 = vcmp.eq.s32.totalorder %v424, 1
    %vm437 = vcmp.eq.s32.totalorder %v425, 1
    %vm438 = vcmp.eq.s32.totalorder %v426, 1
    %vm439 = vcmp.eq.s32.totalorder %v427, 1
    %vm440 = vcmp.eq.s32.totalorder %v428, 1
    %v441 = vsel %vm429, %v60, 0.0
    %v442 = vsel %vm430, %v61, 0.0
    %v443 = vsel %vm431, %v62, 0.0
    %v444 = vsel %vm432, %v63, 0.0
    %v445 = vsel %vm433, %v64, 0.0
    %v446 = vsel %vm434, %v65, 0.0
    %v447 = vsel %vm435, %v66, 0.0
    %v448 = vsel %vm436, %v67, 0.0
    %v449 = vsel %vm437, %v68, 0.0
    %v450 = vsel %vm438, %v69, 0.0
    %v451 = vsel %vm439, %v70, 0.0
    %v452 = vsel %vm440, %v71, 0.0
    %v453 = vsel %vm135, %v441, 0.0
    %v454 = vsel %vm135, %v442, 0.0
    %v455 = vadd.f32 %v453, %v454
    %v456 = vsel %vm135, %v443, 0.0
    %v457 = vadd.f32 %v455, %v456
    %v458 = vsel %vm135, %v444, 0.0
    %v459 = vadd.f32 %v457, %v458
    %v460 = vsel %vm135, %v445, 0.0
    %v461 = vadd.f32 %v459, %v460
    %v462 = vsel %vm135, %v446, 0.0
    %v463 = vadd.f32 %v461, %v462
    %v464 = vsel %vm135, %v447, 0.0
    %v465 = vadd.f32 %v463, %v464
    %v466 = vsel %vm135, %v448, 0.0
    %v467 = vadd.f32 %v465, %v466
    %v468 = vsel %vm135, %v449, 0.0
    %v469 = vadd.f32 %v467, %v468
    %v470 = vsel %vm135, %v450, 0.0
    %v471 = vadd.f32 %v469, %v470
    %v472 = vsel %vm135, %v451, 0.0
    %v473 = vadd.f32 %v471, %v472
    %v474 = vsel %vm157, %v452, 0.0
    %v475 = vadd.f32 %v473, %v474
    %v476 = vrot.slane %v475, 4
    %v477 = vadd.f32 %v475, %v476
    %v478 = vrot.slane %v477, 2
    %v479 = vadd.f32 %v477, %v478
    %v480 = vrot.slane %v479, 1
    %v481 = vadd.f32 %v479, %v480
    %s482 = sld [smem:[#allocation2 + $0x5]]
    %v483 = vstv %s482
    %vm484 = vcmp.eq.s32.totalorder %v73, %v483
    %vm485 = vcmp.eq.s32.totalorder %v74, %v483
    %vm486 = vcmp.eq.s32.totalorder %v75, %v483
    %vm487 = vcmp.eq.s32.totalorder %v76, %v483
    %vm488 = vcmp.eq.s32.totalorder %v77, %v483
    %vm489 = vcmp.eq.s32.totalorder %v78, %v483
    %vm490 = vcmp.eq.s32.totalorder %v79, %v483
    %vm491 = vcmp.eq.s32.totalorder %v80, %v483
    %vm492 = vcmp.eq.s32.totalorder %v81, %v483
    %vm493 = vcmp.eq.s32.totalorder %v82, %v483
    %vm494 = vcmp.eq.s32.totalorder %v83, %v483
    %vm495 = vcmp.eq.s32.totalorder %v84, %v483
    %v496 = vsel %vm484, 1, 0
    %v497 = vsel %vm485, 1, 0
    %v498 = vsel %vm486, 1, 0
    %v499 = vsel %vm487, 1, 0
    %v500 = vsel %vm488, 1, 0
    %v501 = vsel %vm489, 1, 0
    %v502 = vsel %vm490, 1, 0
    %v503 = vsel %vm491, 1, 0
    %v504 = vsel %vm492, 1, 0
    %v505 = vsel %vm493, 1, 0
    %v506 = vsel %vm494, 1, 0
    %v507 = vsel %vm495, 1, 0
    %vm508 = vcmp.eq.s32.totalorder %v496, 1
    %vm509 = vcmp.eq.s32.totalorder %v497, 1
    %vm510 = vcmp.eq.s32.totalorder %v498, 1
    %vm511 = vcmp.eq.s32.totalorder %v499, 1
    %vm512 = vcmp.eq.s32.totalorder %v500, 1
    %vm513 = vcmp.eq.s32.totalorder %v501, 1
    %vm514 = vcmp.eq.s32.totalorder %v502, 1
    %vm515 = vcmp.eq.s32.totalorder %v503, 1
    %vm516 = vcmp.eq.s32.totalorder %v504, 1
    %vm517 = vcmp.eq.s32.totalorder %v505, 1
    %vm518 = vcmp.eq.s32.totalorder %v506, 1
    %vm519 = vcmp.eq.s32.totalorder %v507, 1
    %v520 = vsel %vm508, %v60, 0.0
    %v521 = vsel %vm509, %v61, 0.0
    %v522 = vsel %vm510, %v62, 0.0
    %v523 = vsel %vm511, %v63, 0.0
    %v524 = vsel %vm512, %v64, 0.0
    %v525 = vsel %vm513, %v65, 0.0
    %v526 = vsel %vm514, %v66, 0.0
    %v527 = vsel %vm515, %v67, 0.0
    %v528 = vsel %vm516, %v68, 0.0
    %v529 = vsel %vm517, %v69, 0.0
    %v530 = vsel %vm518, %v70, 0.0
    %v531 = vsel %vm519, %v71, 0.0
    %v532 = vsel %vm135, %v520, 0.0
    %v533 = vsel %vm135, %v521, 0.0
    %v534 = vadd.f32 %v532, %v533
    %v535 = vsel %vm135, %v522, 0.0
    %v536 = vadd.f32 %v534, %v535
    %v537 = vsel %vm135, %v523, 0.0
    %v538 = vadd.f32 %v536, %v537
    %v539 = vsel %vm135, %v524, 0.0
    %v540 = vadd.f32 %v538, %v539
    %v541 = vsel %vm135, %v525, 0.0
    %v542 = vadd.f32 %v540, %v541
    %v543 = vsel %vm135, %v526, 0.0
    %v544 = vadd.f32 %v542, %v543
    %v545 = vsel %vm135, %v527, 0.0
    %v546 = vadd.f32 %v544, %v545
    %v547 = vsel %vm135, %v528, 0.0
    %v548 = vadd.f32 %v546, %v547
    %v549 = vsel %vm135, %v529, 0.0
    %v550 = vadd.f32 %v548, %v549
    %v551 = vsel %vm135, %v530, 0.0
    %v552 = vadd.f32 %v550, %v551
    %v553 = vsel %vm157, %v531, 0.0
    %v554 = vadd.f32 %v552, %v553
    %v555 = vrot.slane %v554, 4
    %v556 = vadd.f32 %v554, %v555
    %v557 = vrot.slane %v556, 2
    %v558 = vadd.f32 %v556, %v557
    %v559 = vrot.slane %v558, 1
    %v560 = vadd.f32 %v558, %v559
    %s561 = sld [smem:[#allocation2 + $0x6]]
    %v562 = vstv %s561
    %vm563 = vcmp.eq.s32.totalorder %v73, %v562
    %vm564 = vcmp.eq.s32.totalorder %v74, %v562
    %vm565 = vcmp.eq.s32.totalorder %v75, %v562
    %vm566 = vcmp.eq.s32.totalorder %v76, %v562
    %vm567 = vcmp.eq.s32.totalorder %v77, %v562
    %vm568 = vcmp.eq.s32.totalorder %v78, %v562
    %vm569 = vcmp.eq.s32.totalorder %v79, %v562
    %vm570 = vcmp.eq.s32.totalorder %v80, %v562
    %vm571 = vcmp.eq.s32.totalorder %v81, %v562
    %vm572 = vcmp.eq.s32.totalorder %v82, %v562
    %vm573 = vcmp.eq.s32.totalorder %v83, %v562
    %vm574 = vcmp.eq.s32.totalorder %v84, %v562
    %v575 = vsel %vm563, 1, 0
    %v576 = vsel %vm564, 1, 0
    %v577 = vsel %vm565, 1, 0
    %v578 = vsel %vm566, 1, 0
    %v579 = vsel %vm567, 1, 0
    %v580 = vsel %vm568, 1, 0
    %v581 = vsel %vm569, 1, 0
    %v582 = vsel %vm570, 1, 0
    %v583 = vsel %vm571, 1, 0
    %v584 = vsel %vm572, 1, 0
    %v585 = vsel %vm573, 1, 0
    %v586 = vsel %vm574, 1, 0
    %vm587 = vcmp.eq.s32.totalorder %v575, 1
    %vm588 = vcmp.eq.s32.totalorder %v576, 1
    %vm589 = vcmp.eq.s32.totalorder %v577, 1
    %vm590 = vcmp.eq.s32.totalorder %v578, 1
    %vm591 = vcmp.eq.s32.totalorder %v579, 1
    %vm592 = vcmp.eq.s32.totalorder %v580, 1
    %vm593 = vcmp.eq.s32.totalorder %v581, 1
    %vm594 = vcmp.eq.s32.totalorder %v582, 1
    %vm595 = vcmp.eq.s32.totalorder %v583, 1
    %vm596 = vcmp.eq.s32.totalorder %v584, 1
    %vm597 = vcmp.eq.s32.totalorder %v585, 1
    %vm598 = vcmp.eq.s32.totalorder %v586, 1
    %v599 = vsel %vm587, %v60, 0.0
    %v600 = vsel %vm588, %v61, 0.0
    %v601 = vsel %vm589, %v62, 0.0
    %v602 = vsel %vm590, %v63, 0.0
    %v603 = vsel %vm591, %v64, 0.0
    %v604 = vsel %vm592, %v65, 0.0
    %v605 = vsel %vm593, %v66, 0.0
    %v606 = vsel %vm594, %v67, 0.0
    %v607 = vsel %vm595, %v68, 0.0
    %v608 = vsel %vm596, %v69, 0.0
    %v609 = vsel %vm597, %v70, 0.0
    %v610 = vsel %vm598, %v71, 0.0
    %v611 = vsel %vm135, %v599, 0.0
    %v612 = vsel %vm135, %v600, 0.0
    %v613 = vadd.f32 %v611, %v612
    %v614 = vsel %vm135, %v601, 0.0
    %v615 = vadd.f32 %v613, %v614
    %v616 = vsel %vm135, %v602, 0.0
    %v617 = vadd.f32 %v615, %v616
    %v618 = vsel %vm135, %v603, 0.0
    %v619 = vadd.f32 %v617, %v618
    %v620 = vsel %vm135, %v604, 0.0
    %v621 = vadd.f32 %v619, %v620
    %v622 = vsel %vm135, %v605, 0.0
    %v623 = vadd.f32 %v621, %v622
    %v624 = vsel %vm135, %v606, 0.0
    %v625 = vadd.f32 %v623, %v624
    %v626 = vsel %vm135, %v607, 0.0
    %v627 = vadd.f32 %v625, %v626
    %v628 = vsel %vm135, %v608, 0.0
    %v629 = vadd.f32 %v627, %v628
    %v630 = vsel %vm135, %v609, 0.0
    %v631 = vadd.f32 %v629, %v630
    %v632 = vsel %vm157, %v610, 0.0
    %v633 = vadd.f32 %v631, %v632
    %v634 = vrot.slane %v633, 4
    %v635 = vadd.f32 %v633, %v634
    %v636 = vrot.slane %v635, 2
    %v637 = vadd.f32 %v635, %v636
    %v638 = vrot.slane %v637, 1
    %v639 = vadd.f32 %v637, %v638
    %s640 = sld [smem:[#allocation2 + $0x7]]
    %v641 = vstv %s640
    %vm642 = vcmp.eq.s32.totalorder %v73, %v641
    %vm643 = vcmp.eq.s32.totalorder %v74, %v641
    %vm644 = vcmp.eq.s32.totalorder %v75, %v641
    %vm645 = vcmp.eq.s32.totalorder %v76, %v641
    %vm646 = vcmp.eq.s32.totalorder %v77, %v641
    %vm647 = vcmp.eq.s32.totalorder %v78, %v641
    %vm648 = vcmp.eq.s32.totalorder %v79, %v641
    %vm649 = vcmp.eq.s32.totalorder %v80, %v641
    %vm650 = vcmp.eq.s32.totalorder %v81, %v641
    %vm651 = vcmp.eq.s32.totalorder %v82, %v641
    %vm652 = vcmp.eq.s32.totalorder %v83, %v641
    %vm653 = vcmp.eq.s32.totalorder %v84, %v641
    %v654 = vsel %vm642, 1, 0
    %v655 = vsel %vm643, 1, 0
    %v656 = vsel %vm644, 1, 0
    %v657 = vsel %vm645, 1, 0
    %v658 = vsel %vm646, 1, 0
    %v659 = vsel %vm647, 1, 0
    %v660 = vsel %vm648, 1, 0
    %v661 = vsel %vm649, 1, 0
    %v662 = vsel %vm650, 1, 0
    %v663 = vsel %vm651, 1, 0
    %v664 = vsel %vm652, 1, 0
    %v665 = vsel %vm653, 1, 0
    %vm666 = vcmp.eq.s32.totalorder %v654, 1
    %vm667 = vcmp.eq.s32.totalorder %v655, 1
    %vm668 = vcmp.eq.s32.totalorder %v656, 1
    %vm669 = vcmp.eq.s32.totalorder %v657, 1
    %vm670 = vcmp.eq.s32.totalorder %v658, 1
    %vm671 = vcmp.eq.s32.totalorder %v659, 1
    %vm672 = vcmp.eq.s32.totalorder %v660, 1
    %vm673 = vcmp.eq.s32.totalorder %v661, 1
    %vm674 = vcmp.eq.s32.totalorder %v662, 1
    %vm675 = vcmp.eq.s32.totalorder %v663, 1
    %vm676 = vcmp.eq.s32.totalorder %v664, 1
    %vm677 = vcmp.eq.s32.totalorder %v665, 1
    %v678 = vsel %vm666, %v60, 0.0
    %v679 = vsel %vm667, %v61, 0.0
    %v680 = vsel %vm668, %v62, 0.0
    %v681 = vsel %vm669, %v63, 0.0
    %v682 = vsel %vm670, %v64, 0.0
    %v683 = vsel %vm671, %v65, 0.0
    %v684 = vsel %vm672, %v66, 0.0
    %v685 = vsel %vm673, %v67, 0.0
    %v686 = vsel %vm674, %v68, 0.0
    %v687 = vsel %vm675, %v69, 0.0
    %v688 = vsel %vm676, %v70, 0.0
    %v689 = vsel %vm677, %v71, 0.0
    %v690 = vsel %vm135, %v678, 0.0
    %v691 = vsel %vm135, %v679, 0.0
    %v692 = vadd.f32 %v690, %v691
    %v693 = vsel %vm135, %v680, 0.0
    %v694 = vadd.f32 %v692, %v693
    %v695 = vsel %vm135, %v681, 0.0
    %v696 = vadd.f32 %v694, %v695
    %v697 = vsel %vm135, %v682, 0.0
    %v698 = vadd.f32 %v696, %v697
    %v699 = vsel %vm135, %v683, 0.0
    %v700 = vadd.f32 %v698, %v699
    %v701 = vsel %vm135, %v684, 0.0
    %v702 = vadd.f32 %v700, %v701
    %v703 = vsel %vm135, %v685, 0.0
    %v704 = vadd.f32 %v702, %v703
    %v705 = vsel %vm135, %v686, 0.0
    %v706 = vadd.f32 %v704, %v705
    %v707 = vsel %vm135, %v687, 0.0
    %v708 = vadd.f32 %v706, %v707
    %v709 = vsel %vm135, %v688, 0.0
    %v710 = vadd.f32 %v708, %v709
    %v711 = vsel %vm157, %v689, 0.0
    %v712 = vadd.f32 %v710, %v711
    %v713 = vrot.slane %v712, 4
    %v714 = vadd.f32 %v712, %v713
    %v715 = vrot.slane %v714, 2
    %v716 = vadd.f32 %v714, %v715
    %v717 = vrot.slane %v716, 1
    %v718 = vadd.f32 %v716, %v717
    %vm719 = vcmask 1040384
    %v720 = vsel %vm719, %v165, %v244
    %vm721 = vcmask 1041408
    %v722 = vsel %vm721, %v720, %v323
    %vm723 = vcmask 1042432
    %v724 = vsel %vm723, %v722, %v402
    %vm725 = vcmask 1043456
    %v726 = vsel %vm725, %v724, %v481
    %vm727 = vcmask 1044480
    %v728 = vsel %vm727, %v726, %v560
    %vm729 = vcmask 1045504
    %v730 = vsel %vm729, %v728, %v639
    %vm731 = vcmask 1046528
    %v732 = vsel %vm731, %v730, %v718
    %s733 = sld [smem:[#allocation6]]
    %s734 = sadd.s32 %s733, 50
    %v735 = vstv %s734
    %vm736 = vcmp.eq.s32.totalorder %v73, %v735
    %vm737 = vcmp.eq.s32.totalorder %v74, %v735
    %vm738 = vcmp.eq.s32.totalorder %v75, %v735
    %vm739 = vcmp.eq.s32.totalorder %v76, %v735
    %vm740 = vcmp.eq.s32.totalorder %v77, %v735
    %vm741 = vcmp.eq.s32.totalorder %v78, %v735
    %vm742 = vcmp.eq.s32.totalorder %v79, %v735
    %vm743 = vcmp.eq.s32.totalorder %v80, %v735
    %vm744 = vcmp.eq.s32.totalorder %v81, %v735
    %vm745 = vcmp.eq.s32.totalorder %v82, %v735
    %vm746 = vcmp.eq.s32.totalorder %v83, %v735
    %vm747 = vcmp.eq.s32.totalorder %v84, %v735
    %v748 = vsel %vm736, 1, 0
    %v749 = vsel %vm737, 1, 0
    %v750 = vsel %vm738, 1, 0
    %v751 = vsel %vm739, 1, 0
    %v752 = vsel %vm740, 1, 0
    %v753 = vsel %vm741, 1, 0
    %v754 = vsel %vm742, 1, 0
    %v755 = vsel %vm743, 1, 0
    %v756 = vsel %vm744, 1, 0
    %v757 = vsel %vm745, 1, 0
    %v758 = vsel %vm746, 1, 0
    %v759 = vsel %vm747, 1, 0
    %vm760 = vcmp.eq.s32.totalorder %v748, 1
    %vm761 = vcmp.eq.s32.totalorder %v749, 1
    %vm762 = vcmp.eq.s32.totalorder %v750, 1
    %vm763 = vcmp.eq.s32.totalorder %v751, 1
    %vm764 = vcmp.eq.s32.totalorder %v752, 1
    %vm765 = vcmp.eq.s32.totalorder %v753, 1
    %vm766 = vcmp.eq.s32.totalorder %v754, 1
    %vm767 = vcmp.eq.s32.totalorder %v755, 1
    %vm768 = vcmp.eq.s32.totalorder %v756, 1
    %vm769 = vcmp.eq.s32.totalorder %v757, 1
    %vm770 = vcmp.eq.s32.totalorder %v758, 1
    %vm771 = vcmp.eq.s32.totalorder %v759, 1
    %v772 = vsel %vm760, %v60, 0.0
    %v773 = vsel %vm761, %v61, 0.0
    %v774 = vsel %vm762, %v62, 0.0
    %v775 = vsel %vm763, %v63, 0.0
    %v776 = vsel %vm764, %v64, 0.0
    %v777 = vsel %vm765, %v65, 0.0
    %v778 = vsel %vm766, %v66, 0.0
    %v779 = vsel %vm767, %v67, 0.0
    %v780 = vsel %vm768, %v68, 0.0
    %v781 = vsel %vm769, %v69, 0.0
    %v782 = vsel %vm770, %v70, 0.0
    %v783 = vsel %vm771, %v71, 0.0
    %v784 = vsel %vm135, %v772, 0.0
    %v785 = vsel %vm135, %v773, 0.0
    %v786 = vadd.f32 %v784, %v785
    %v787 = vsel %vm135, %v774, 0.0
    %v788 = vadd.f32 %v786, %v787
    %v789 = vsel %vm135, %v775, 0.0
    %v790 = vadd.f32 %v788, %v789
    %v791 = vsel %vm135, %v776, 0.0
    %v792 = vadd.f32 %v790, %v791
    %v793 = vsel %vm135, %v777, 0.0
    %v794 = vadd.f32 %v792, %v793
    %v795 = vsel %vm135, %v778, 0.0
    %v796 = vadd.f32 %v794, %v795
    %v797 = vsel %vm135, %v779, 0.0
    %v798 = vadd.f32 %v796, %v797
    %v799 = vsel %vm135, %v780, 0.0
    %v800 = vadd.f32 %v798, %v799
    %v801 = vsel %vm135, %v781, 0.0
    %v802 = vadd.f32 %v800, %v801
    %v803 = vsel %vm135, %v782, 0.0
    %v804 = vadd.f32 %v802, %v803
    %v805 = vsel %vm157, %v783, 0.0
    %v806 = vadd.f32 %v804, %v805
    %v807 = vrot.slane %v806, 4
    %v808 = vadd.f32 %v806, %v807
    %v809 = vrot.slane %v808, 2
    %v810 = vadd.f32 %v808, %v809
    %v811 = vrot.slane %v810, 1
    %v812 = vadd.f32 %v810, %v811
    %s813 = sld [smem:[#allocation6 + $0x1]]
    %s814 = sadd.s32 %s813, 50
    %v815 = vstv %s814
    %vm816 = vcmp.eq.s32.totalorder %v73, %v815
    %vm817 = vcmp.eq.s32.totalorder %v74, %v815
    %vm818 = vcmp.eq.s32.totalorder %v75, %v815
    %vm819 = vcmp.eq.s32.totalorder %v76, %v815
    %vm820 = vcmp.eq.s32.totalorder %v77, %v815
    %vm821 = vcmp.eq.s32.totalorder %v78, %v815
    %vm822 = vcmp.eq.s32.totalorder %v79, %v815
    %vm823 = vcmp.eq.s32.totalorder %v80, %v815
    %vm824 = vcmp.eq.s32.totalorder %v81, %v815
    %vm825 = vcmp.eq.s32.totalorder %v82, %v815
    %vm826 = vcmp.eq.s32.totalorder %v83, %v815
    %vm827 = vcmp.eq.s32.totalorder %v84, %v815
    %v828 = vsel %vm816, 1, 0
    %v829 = vsel %vm817, 1, 0
    %v830 = vsel %vm818, 1, 0
    %v831 = vsel %vm819, 1, 0
    %v832 = vsel %vm820, 1, 0
    %v833 = vsel %vm821, 1, 0
    %v834 = vsel %vm822, 1, 0
    %v835 = vsel %vm823, 1, 0
    %v836 = vsel %vm824, 1, 0
    %v837 = vsel %vm825, 1, 0
    %v838 = vsel %vm826, 1, 0
    %v839 = vsel %vm827, 1, 0
    %vm840 = vcmp.eq.s32.totalorder %v828, 1
    %vm841 = vcmp.eq.s32.totalorder %v829, 1
    %vm842 = vcmp.eq.s32.totalorder %v830, 1
    %vm843 = vcmp.eq.s32.totalorder %v831, 1
    %vm844 = vcmp.eq.s32.totalorder %v832, 1
    %vm845 = vcmp.eq.s32.totalorder %v833, 1
    %vm846 = vcmp.eq.s32.totalorder %v834, 1
    %vm847 = vcmp.eq.s32.totalorder %v835, 1
    %vm848 = vcmp.eq.s32.totalorder %v836, 1
    %vm849 = vcmp.eq.s32.totalorder %v837, 1
    %vm850 = vcmp.eq.s32.totalorder %v838, 1
    %vm851 = vcmp.eq.s32.totalorder %v839, 1
    %v852 = vsel %vm840, %v60, 0.0
    %v853 = vsel %vm841, %v61, 0.0
    %v854 = vsel %vm842, %v62, 0.0
    %v855 = vsel %vm843, %v63, 0.0
    %v856 = vsel %vm844, %v64, 0.0
    %v857 = vsel %vm845, %v65, 0.0
    %v858 = vsel %vm846, %v66, 0.0
    %v859 = vsel %vm847, %v67, 0.0
    %v860 = vsel %vm848, %v68, 0.0
    %v861 = vsel %vm849, %v69, 0.0
    %v862 = vsel %vm850, %v70, 0.0
    %v863 = vsel %vm851, %v71, 0.0
    %v864 = vsel %vm135, %v852, 0.0
    %v865 = vsel %vm135, %v853, 0.0
    %v866 = vadd.f32 %v864, %v865
    %v867 = vsel %vm135, %v854, 0.0
    %v868 = vadd.f32 %v866, %v867
    %v869 = vsel %vm135, %v855, 0.0
    %v870 = vadd.f32 %v868, %v869
    %v871 = vsel %vm135, %v856, 0.0
    %v872 = vadd.f32 %v870, %v871
    %v873 = vsel %vm135, %v857, 0.0
    %v874 = vadd.f32 %v872, %v873
    %v875 = vsel %vm135, %v858, 0.0
    %v876 = vadd.f32 %v874, %v875
    %v877 = vsel %vm135, %v859, 0.0
    %v878 = vadd.f32 %v876, %v877
    %v879 = vsel %vm135, %v860, 0.0
    %v880 = vadd.f32 %v878, %v879
    %v881 = vsel %vm135, %v861, 0.0
    %v882 = vadd.f32 %v880, %v881
    %v883 = vsel %vm135, %v862, 0.0
    %v884 = vadd.f32 %v882, %v883
    %v885 = vsel %vm157, %v863, 0.0
    %v886 = vadd.f32 %v884, %v885
    %v887 = vrot.slane %v886, 4
    %v888 = vadd.f32 %v886, %v887
    %v889 = vrot.slane %v888, 2
    %v890 = vadd.f32 %v888, %v889
    %v891 = vrot.slane %v890, 1
    %v892 = vadd.f32 %v890, %v891
    %s893 = sld [smem:[#allocation6 + $0x2]]
    %s894 = sadd.s32 %s893, 50
    %v895 = vstv %s894
    %vm896 = vcmp.eq.s32.totalorder %v73, %v895
    %vm897 = vcmp.eq.s32.totalorder %v74, %v895
    %vm898 = vcmp.eq.s32.totalorder %v75, %v895
    %vm899 = vcmp.eq.s32.totalorder %v76, %v895
    %vm900 = vcmp.eq.s32.totalorder %v77, %v895
    %vm901 = vcmp.eq.s32.totalorder %v78, %v895
    %vm902 = vcmp.eq.s32.totalorder %v79, %v895
    %vm903 = vcmp.eq.s32.totalorder %v80, %v895
    %vm904 = vcmp.eq.s32.totalorder %v81, %v895
    %vm905 = vcmp.eq.s32.totalorder %v82, %v895
    %vm906 = vcmp.eq.s32.totalorder %v83, %v895
    %vm907 = vcmp.eq.s32.totalorder %v84, %v895
    %v908 = vsel %vm896, 1, 0
    %v909 = vsel %vm897, 1, 0
    %v910 = vsel %vm898, 1, 0
    %v911 = vsel %vm899, 1, 0
    %v912 = vsel %vm900, 1, 0
    %v913 = vsel %vm901, 1, 0
    %v914 = vsel %vm902, 1, 0
    %v915 = vsel %vm903, 1, 0
    %v916 = vsel %vm904, 1, 0
    %v917 = vsel %vm905, 1, 0
    %v918 = vsel %vm906, 1, 0
    %v919 = vsel %vm907, 1, 0
    %vm920 = vcmp.eq.s32.totalorder %v908, 1
    %vm921 = vcmp.eq.s32.totalorder %v909, 1
    %vm922 = vcmp.eq.s32.totalorder %v910, 1
    %vm923 = vcmp.eq.s32.totalorder %v911, 1
    %vm924 = vcmp.eq.s32.totalorder %v912, 1
    %vm925 = vcmp.eq.s32.totalorder %v913, 1
    %vm926 = vcmp.eq.s32.totalorder %v914, 1
    %vm927 = vcmp.eq.s32.totalorder %v915, 1
    %vm928 = vcmp.eq.s32.totalorder %v916, 1
    %vm929 = vcmp.eq.s32.totalorder %v917, 1
    %vm930 = vcmp.eq.s32.totalorder %v918, 1
    %vm931 = vcmp.eq.s32.totalorder %v919, 1
    %v932 = vsel %vm920, %v60, 0.0
    %v933 = vsel %vm921, %v61, 0.0
    %v934 = vsel %vm922, %v62, 0.0
    %v935 = vsel %vm923, %v63, 0.0
    %v936 = vsel %vm924, %v64, 0.0
    %v937 = vsel %vm925, %v65, 0.0
    %v938 = vsel %vm926, %v66, 0.0
    %v939 = vsel %vm927, %v67, 0.0
    %v940 = vsel %vm928, %v68, 0.0
    %v941 = vsel %vm929, %v69, 0.0
    %v942 = vsel %vm930, %v70, 0.0
    %v943 = vsel %vm931, %v71, 0.0
    %v944 = vsel %vm135, %v932, 0.0
    %v945 = vsel %vm135, %v933, 0.0
    %v946 = vadd.f32 %v944, %v945
    %v947 = vsel %vm135, %v934, 0.0
    %v948 = vadd.f32 %v946, %v947
    %v949 = vsel %vm135, %v935, 0.0
    %v950 = vadd.f32 %v948, %v949
    %v951 = vsel %vm135, %v936, 0.0
    %v952 = vadd.f32 %v950, %v951
    %v953 = vsel %vm135, %v937, 0.0
    %v954 = vadd.f32 %v952, %v953
    %v955 = vsel %vm135, %v938, 0.0
    %v956 = vadd.f32 %v954, %v955
    %v957 = vsel %vm135, %v939, 0.0
    %v958 = vadd.f32 %v956, %v957
    %v959 = vsel %vm135, %v940, 0.0
    %v960 = vadd.f32 %v958, %v959
    %v961 = vsel %vm135, %v941, 0.0
    %v962 = vadd.f32 %v960, %v961
    %v963 = vsel %vm135, %v942, 0.0
    %v964 = vadd.f32 %v962, %v963
    %v965 = vsel %vm157, %v943, 0.0
    %v966 = vadd.f32 %v964, %v965
    %v967 = vrot.slane %v966, 4
    %v968 = vadd.f32 %v966, %v967
    %v969 = vrot.slane %v968, 2
    %v970 = vadd.f32 %v968, %v969
    %v971 = vrot.slane %v970, 1
    %v972 = vadd.f32 %v970, %v971
    %s973 = sld [smem:[#allocation6 + $0x3]]
    %s974 = sadd.s32 %s973, 50
    %v975 = vstv %s974
    %vm976 = vcmp.eq.s32.totalorder %v73, %v975
    %vm977 = vcmp.eq.s32.totalorder %v74, %v975
    %vm978 = vcmp.eq.s32.totalorder %v75, %v975
    %vm979 = vcmp.eq.s32.totalorder %v76, %v975
    %vm980 = vcmp.eq.s32.totalorder %v77, %v975
    %vm981 = vcmp.eq.s32.totalorder %v78, %v975
    %vm982 = vcmp.eq.s32.totalorder %v79, %v975
    %vm983 = vcmp.eq.s32.totalorder %v80, %v975
    %vm984 = vcmp.eq.s32.totalorder %v81, %v975
    %vm985 = vcmp.eq.s32.totalorder %v82, %v975
    %vm986 = vcmp.eq.s32.totalorder %v83, %v975
    %vm987 = vcmp.eq.s32.totalorder %v84, %v975
    %v988 = vsel %vm976, 1, 0
    %v989 = vsel %vm977, 1, 0
    %v990 = vsel %vm978, 1, 0
    %v991 = vsel %vm979, 1, 0
    %v992 = vsel %vm980, 1, 0
    %v993 = vsel %vm981, 1, 0
    %v994 = vsel %vm982, 1, 0
    %v995 = vsel %vm983, 1, 0
    %v996 = vsel %vm984, 1, 0
    %v997 = vsel %vm985, 1, 0
    %v998 = vsel %vm986, 1, 0
    %v999 = vsel %vm987, 1, 0
    %vm1000 = vcmp.eq.s32.totalorder %v988, 1
    %vm1001 = vcmp.eq.s32.totalorder %v989, 1
    %vm1002 = vcmp.eq.s32.totalorder %v990, 1
    %vm1003 = vcmp.eq.s32.totalorder %v991, 1
    %vm1004 = vcmp.eq.s32.totalorder %v992, 1
    %vm1005 = vcmp.eq.s32.totalorder %v993, 1
    %vm1006 = vcmp.eq.s32.totalorder %v994, 1
    %vm1007 = vcmp.eq.s32.totalorder %v995, 1
    %vm1008 = vcmp.eq.s32.totalorder %v996, 1
    %vm1009 = vcmp.eq.s32.totalorder %v997, 1
    %vm1010 = vcmp.eq.s32.totalorder %v998, 1
    %vm1011 = vcmp.eq.s32.totalorder %v999, 1
    %v1012 = vsel %vm1000, %v60, 0.0
    %v1013 = vsel %vm1001, %v61, 0.0
    %v1014 = vsel %vm1002, %v62, 0.0
    %v1015 = vsel %vm1003, %v63, 0.0
    %v1016 = vsel %vm1004, %v64, 0.0
    %v1017 = vsel %vm1005, %v65, 0.0
    %v1018 = vsel %vm1006, %v66, 0.0
    %v1019 = vsel %vm1007, %v67, 0.0
    %v1020 = vsel %vm1008, %v68, 0.0
    %v1021 = vsel %vm1009, %v69, 0.0
    %v1022 = vsel %vm1010, %v70, 0.0
    %v1023 = vsel %vm1011, %v71, 0.0
    %v1024 = vsel %vm135, %v1012, 0.0
    %v1025 = vsel %vm135, %v1013, 0.0
    %v1026 = vadd.f32 %v1024, %v1025
    %v1027 = vsel %vm135, %v1014, 0.0
    %v1028 = vadd.f32 %v1026, %v1027
    %v1029 = vsel %vm135, %v1015, 0.0
    %v1030 = vadd.f32 %v1028, %v1029
    %v1031 = vsel %vm135, %v1016, 0.0
    %v1032 = vadd.f32 %v1030, %v1031
    %v1033 = vsel %vm135, %v1017, 0.0
    %v1034 = vadd.f32 %v1032, %v1033
    %v1035 = vsel %vm135, %v1018, 0.0
    %v1036 = vadd.f32 %v1034, %v1035
    %v1037 = vsel %vm135, %v1019, 0.0
    %v1038 = vadd.f32 %v1036, %v1037
    %v1039 = vsel %vm135, %v1020, 0.0
    %v1040 = vadd.f32 %v1038, %v1039
    %v1041 = vsel %vm135, %v1021, 0.0
    %v1042 = vadd.f32 %v1040, %v1041
    %v1043 = vsel %vm135, %v1022, 0.0
    %v1044 = vadd.f32 %v1042, %v1043
    %v1045 = vsel %vm157, %v1023, 0.0
    %v1046 = vadd.f32 %v1044, %v1045
    %v1047 = vrot.slane %v1046, 4
    %v1048 = vadd.f32 %v1046, %v1047
    %v1049 = vrot.slane %v1048, 2
    %v1050 = vadd.f32 %v1048, %v1049
    %v1051 = vrot.slane %v1050, 1
    %v1052 = vadd.f32 %v1050, %v1051
    %s1053 = sld [smem:[#allocation6 + $0x4]]
    %s1054 = sadd.s32 %s1053, 50
    %v1055 = vstv %s1054
    %vm1056 = vcmp.eq.s32.totalorder %v73, %v1055
    %vm1057 = vcmp.eq.s32.totalorder %v74, %v1055
    %vm1058 = vcmp.eq.s32.totalorder %v75, %v1055
    %vm1059 = vcmp.eq.s32.totalorder %v76, %v1055
    %vm1060 = vcmp.eq.s32.totalorder %v77, %v1055
    %vm1061 = vcmp.eq.s32.totalorder %v78, %v1055
    %vm1062 = vcmp.eq.s32.totalorder %v79, %v1055
    %vm1063 = vcmp.eq.s32.totalorder %v80, %v1055
    %vm1064 = vcmp.eq.s32.totalorder %v81, %v1055
    %vm1065 = vcmp.eq.s32.totalorder %v82, %v1055
    %vm1066 = vcmp.eq.s32.totalorder %v83, %v1055
    %vm1067 = vcmp.eq.s32.totalorder %v84, %v1055
    %v1068 = vsel %vm1056, 1, 0
    %v1069 = vsel %vm1057, 1, 0
    %v1070 = vsel %vm1058, 1, 0
    %v1071 = vsel %vm1059, 1, 0
    %v1072 = vsel %vm1060, 1, 0
    %v1073 = vsel %vm1061, 1, 0
    %v1074 = vsel %vm1062, 1, 0
    %v1075 = vsel %vm1063, 1, 0
    %v1076 = vsel %vm1064, 1, 0
    %v1077 = vsel %vm1065, 1, 0
    %v1078 = vsel %vm1066, 1, 0
    %v1079 = vsel %vm1067, 1, 0
    %vm1080 = vcmp.eq.s32.totalorder %v1068, 1
    %vm1081 = vcmp.eq.s32.totalorder %v1069, 1
    %vm1082 = vcmp.eq.s32.totalorder %v1070, 1
    %vm1083 = vcmp.eq.s32.totalorder %v1071, 1
    %vm1084 = vcmp.eq.s32.totalorder %v1072, 1
    %vm1085 = vcmp.eq.s32.totalorder %v1073, 1
    %vm1086 = vcmp.eq.s32.totalorder %v1074, 1
    %vm1087 = vcmp.eq.s32.totalorder %v1075, 1
    %vm1088 = vcmp.eq.s32.totalorder %v1076, 1
    %vm1089 = vcmp.eq.s32.totalorder %v1077, 1
    %vm1090 = vcmp.eq.s32.totalorder %v1078, 1
    %vm1091 = vcmp.eq.s32.totalorder %v1079, 1
    %v1092 = vsel %vm1080, %v60, 0.0
    %v1093 = vsel %vm1081, %v61, 0.0
    %v1094 = vsel %vm1082, %v62, 0.0
    %v1095 = vsel %vm1083, %v63, 0.0
    %v1096 = vsel %vm1084, %v64, 0.0
    %v1097 = vsel %vm1085, %v65, 0.0
    %v1098 = vsel %vm1086, %v66, 0.0
    %v1099 = vsel %vm1087, %v67, 0.0
    %v1100 = vsel %vm1088, %v68, 0.0
    %v1101 = vsel %vm1089, %v69, 0.0
    %v1102 = vsel %vm1090, %v70, 0.0
    %v1103 = vsel %vm1091, %v71, 0.0
    %v1104 = vsel %vm135, %v1092, 0.0
    %v1105 = vsel %vm135, %v1093, 0.0
    %v1106 = vadd.f32 %v1104, %v1105
    %v1107 = vsel %vm135, %v1094, 0.0
    %v1108 = vadd.f32 %v1106, %v1107
    %v1109 = vsel %vm135, %v1095, 0.0
    %v1110 = vadd.f32 %v1108, %v1109
    %v1111 = vsel %vm135, %v1096, 0.0
    %v1112 = vadd.f32 %v1110, %v1111
    %v1113 = vsel %vm135, %v1097, 0.0
    %v1114 = vadd.f32 %v1112, %v1113
    %v1115 = vsel %vm135, %v1098, 0.0
    %v1116 = vadd.f32 %v1114, %v1115
    %v1117 = vsel %vm135, %v1099, 0.0
    %v1118 = vadd.f32 %v1116, %v1117
    %v1119 = vsel %vm135, %v1100, 0.0
    %v1120 = vadd.f32 %v1118, %v1119
    %v1121 = vsel %vm135, %v1101, 0.0
    %v1122 = vadd.f32 %v1120, %v1121
    %v1123 = vsel %vm135, %v1102, 0.0
    %v1124 = vadd.f32 %v1122, %v1123
    %v1125 = vsel %vm157, %v1103, 0.0
    %v1126 = vadd.f32 %v1124, %v1125
    %v1127 = vrot.slane %v1126, 4
    %v1128 = vadd.f32 %v1126, %v1127
    %v1129 = vrot.slane %v1128, 2
    %v1130 = vadd.f32 %v1128, %v1129
    %v1131 = vrot.slane %v1130, 1
    %v1132 = vadd.f32 %v1130, %v1131
    %s1133 = sld [smem:[#allocation6 + $0x5]]
    %s1134 = sadd.s32 %s1133, 50
    %v1135 = vstv %s1134
    %vm1136 = vcmp.eq.s32.totalorder %v73, %v1135
    %vm1137 = vcmp.eq.s32.totalorder %v74, %v1135
    %vm1138 = vcmp.eq.s32.totalorder %v75, %v1135
    %vm1139 = vcmp.eq.s32.totalorder %v76, %v1135
    %vm1140 = vcmp.eq.s32.totalorder %v77, %v1135
    %vm1141 = vcmp.eq.s32.totalorder %v78, %v1135
    %vm1142 = vcmp.eq.s32.totalorder %v79, %v1135
    %vm1143 = vcmp.eq.s32.totalorder %v80, %v1135
    %vm1144 = vcmp.eq.s32.totalorder %v81, %v1135
    %vm1145 = vcmp.eq.s32.totalorder %v82, %v1135
    %vm1146 = vcmp.eq.s32.totalorder %v83, %v1135
    %vm1147 = vcmp.eq.s32.totalorder %v84, %v1135
    %v1148 = vsel %vm1136, 1, 0
    %v1149 = vsel %vm1137, 1, 0
    %v1150 = vsel %vm1138, 1, 0
    %v1151 = vsel %vm1139, 1, 0
    %v1152 = vsel %vm1140, 1, 0
    %v1153 = vsel %vm1141, 1, 0
    %v1154 = vsel %vm1142, 1, 0
    %v1155 = vsel %vm1143, 1, 0
    %v1156 = vsel %vm1144, 1, 0
    %v1157 = vsel %vm1145, 1, 0
    %v1158 = vsel %vm1146, 1, 0
    %v1159 = vsel %vm1147, 1, 0
    %vm1160 = vcmp.eq.s32.totalorder %v1148, 1
    %vm1161 = vcmp.eq.s32.totalorder %v1149, 1
    %vm1162 = vcmp.eq.s32.totalorder %v1150, 1
    %vm1163 = vcmp.eq.s32.totalorder %v1151, 1
    %vm1164 = vcmp.eq.s32.totalorder %v1152, 1
    %vm1165 = vcmp.eq.s32.totalorder %v1153, 1
    %vm1166 = vcmp.eq.s32.totalorder %v1154, 1
    %vm1167 = vcmp.eq.s32.totalorder %v1155, 1
    %vm1168 = vcmp.eq.s32.totalorder %v1156, 1
    %vm1169 = vcmp.eq.s32.totalorder %v1157, 1
    %vm1170 = vcmp.eq.s32.totalorder %v1158, 1
    %vm1171 = vcmp.eq.s32.totalorder %v1159, 1
    %v1172 = vsel %vm1160, %v60, 0.0
    %v1173 = vsel %vm1161, %v61, 0.0
    %v1174 = vsel %vm1162, %v62, 0.0
    %v1175 = vsel %vm1163, %v63, 0.0
    %v1176 = vsel %vm1164, %v64, 0.0
    %v1177 = vsel %vm1165, %v65, 0.0
    %v1178 = vsel %vm1166, %v66, 0.0
    %v1179 = vsel %vm1167, %v67, 0.0
    %v1180 = vsel %vm1168, %v68, 0.0
    %v1181 = vsel %vm1169, %v69, 0.0
    %v1182 = vsel %vm1170, %v70, 0.0
    %v1183 = vsel %vm1171, %v71, 0.0
    %v1184 = vsel %vm135, %v1172, 0.0
    %v1185 = vsel %vm135, %v1173, 0.0
    %v1186 = vadd.f32 %v1184, %v1185
    %v1187 = vsel %vm135, %v1174, 0.0
    %v1188 = vadd.f32 %v1186, %v1187
    %v1189 = vsel %vm135, %v1175, 0.0
    %v1190 = vadd.f32 %v1188, %v1189
    %v1191 = vsel %vm135, %v1176, 0.0
    %v1192 = vadd.f32 %v1190, %v1191
    %v1193 = vsel %vm135, %v1177, 0.0
    %v1194 = vadd.f32 %v1192, %v1193
    %v1195 = vsel %vm135, %v1178, 0.0
    %v1196 = vadd.f32 %v1194, %v1195
    %v1197 = vsel %vm135, %v1179, 0.0
    %v1198 = vadd.f32 %v1196, %v1197
    %v1199 = vsel %vm135, %v1180, 0.0
    %v1200 = vadd.f32 %v1198, %v1199
    %v1201 = vsel %vm135, %v1181, 0.0
    %v1202 = vadd.f32 %v1200, %v1201
    %v1203 = vsel %vm135, %v1182, 0.0
    %v1204 = vadd.f32 %v1202, %v1203
    %v1205 = vsel %vm157, %v1183, 0.0
    %v1206 = vadd.f32 %v1204, %v1205
    %v1207 = vrot.slane %v1206, 4
    %v1208 = vadd.f32 %v1206, %v1207
    %v1209 = vrot.slane %v1208, 2
    %v1210 = vadd.f32 %v1208, %v1209
    %v1211 = vrot.slane %v1210, 1
    %v1212 = vadd.f32 %v1210, %v1211
    %s1213 = sld [smem:[#allocation6 + $0x6]]
    %s1214 = sadd.s32 %s1213, 50
    %v1215 = vstv %s1214
    %vm1216 = vcmp.eq.s32.totalorder %v73, %v1215
    %vm1217 = vcmp.eq.s32.totalorder %v74, %v1215
    %vm1218 = vcmp.eq.s32.totalorder %v75, %v1215
    %vm1219 = vcmp.eq.s32.totalorder %v76, %v1215
    %vm1220 = vcmp.eq.s32.totalorder %v77, %v1215
    %vm1221 = vcmp.eq.s32.totalorder %v78, %v1215
    %vm1222 = vcmp.eq.s32.totalorder %v79, %v1215
    %vm1223 = vcmp.eq.s32.totalorder %v80, %v1215
    %vm1224 = vcmp.eq.s32.totalorder %v81, %v1215
    %vm1225 = vcmp.eq.s32.totalorder %v82, %v1215
    %vm1226 = vcmp.eq.s32.totalorder %v83, %v1215
    %vm1227 = vcmp.eq.s32.totalorder %v84, %v1215
    %v1228 = vsel %vm1216, 1, 0
    %v1229 = vsel %vm1217, 1, 0
    %v1230 = vsel %vm1218, 1, 0
    %v1231 = vsel %vm1219, 1, 0
    %v1232 = vsel %vm1220, 1, 0
    %v1233 = vsel %vm1221, 1, 0
    %v1234 = vsel %vm1222, 1, 0
    %v1235 = vsel %vm1223, 1, 0
    %v1236 = vsel %vm1224, 1, 0
    %v1237 = vsel %vm1225, 1, 0
    %v1238 = vsel %vm1226, 1, 0
    %v1239 = vsel %vm1227, 1, 0
    %vm1240 = vcmp.eq.s32.totalorder %v1228, 1
    %vm1241 = vcmp.eq.s32.totalorder %v1229, 1
    %vm1242 = vcmp.eq.s32.totalorder %v1230, 1
    %vm1243 = vcmp.eq.s32.totalorder %v1231, 1
    %vm1244 = vcmp.eq.s32.totalorder %v1232, 1
    %vm1245 = vcmp.eq.s32.totalorder %v1233, 1
    %vm1246 = vcmp.eq.s32.totalorder %v1234, 1
    %vm1247 = vcmp.eq.s32.totalorder %v1235, 1
    %vm1248 = vcmp.eq.s32.totalorder %v1236, 1
    %vm1249 = vcmp.eq.s32.totalorder %v1237, 1
    %vm1250 = vcmp.eq.s32.totalorder %v1238, 1
    %vm1251 = vcmp.eq.s32.totalorder %v1239, 1
    %v1252 = vsel %vm1240, %v60, 0.0
    %v1253 = vsel %vm1241, %v61, 0.0
    %v1254 = vsel %vm1242, %v62, 0.0
    %v1255 = vsel %vm1243, %v63, 0.0
    %v1256 = vsel %vm1244, %v64, 0.0
    %v1257 = vsel %vm1245, %v65, 0.0
    %v1258 = vsel %vm1246, %v66, 0.0
    %v1259 = vsel %vm1247, %v67, 0.0
    %v1260 = vsel %vm1248, %v68, 0.0
    %v1261 = vsel %vm1249, %v69, 0.0
    %v1262 = vsel %vm1250, %v70, 0.0
    %v1263 = vsel %vm1251, %v71, 0.0
    %v1264 = vsel %vm135, %v1252, 0.0
    %v1265 = vsel %vm135, %v1253, 0.0
    %v1266 = vadd.f32 %v1264, %v1265
    %v1267 = vsel %vm135, %v1254, 0.0
    %v1268 = vadd.f32 %v1266, %v1267
    %v1269 = vsel %vm135, %v1255, 0.0
    %v1270 = vadd.f32 %v1268, %v1269
    %v1271 = vsel %vm135, %v1256, 0.0
    %v1272 = vadd.f32 %v1270, %v1271
    %v1273 = vsel %vm135, %v1257, 0.0
    %v1274 = vadd.f32 %v1272, %v1273
    %v1275 = vsel %vm135, %v1258, 0.0
    %v1276 = vadd.f32 %v1274, %v1275
    %v1277 = vsel %vm135, %v1259, 0.0
    %v1278 = vadd.f32 %v1276, %v1277
    %v1279 = vsel %vm135, %v1260, 0.0
    %v1280 = vadd.f32 %v1278, %v1279
    %v1281 = vsel %vm135, %v1261, 0.0
    %v1282 = vadd.f32 %v1280, %v1281
    %v1283 = vsel %vm135, %v1262, 0.0
    %v1284 = vadd.f32 %v1282, %v1283
    %v1285 = vsel %vm157, %v1263, 0.0
    %v1286 = vadd.f32 %v1284, %v1285
    %v1287 = vrot.slane %v1286, 4
    %v1288 = vadd.f32 %v1286, %v1287
    %v1289 = vrot.slane %v1288, 2
    %v1290 = vadd.f32 %v1288, %v1289
    %v1291 = vrot.slane %v1290, 1
    %v1292 = vadd.f32 %v1290, %v1291
    %s1293 = sld [smem:[#allocation6 + $0x7]]
    %s1294 = sadd.s32 %s1293, 50
    %v1295 = vstv %s1294
    %vm1296 = vcmp.eq.s32.totalorder %v73, %v1295
    %vm1297 = vcmp.eq.s32.totalorder %v74, %v1295
    %vm1298 = vcmp.eq.s32.totalorder %v75, %v1295
    %vm1299 = vcmp.eq.s32.totalorder %v76, %v1295
    %vm1300 = vcmp.eq.s32.totalorder %v77, %v1295
    %vm1301 = vcmp.eq.s32.totalorder %v78, %v1295
    %vm1302 = vcmp.eq.s32.totalorder %v79, %v1295
    %vm1303 = vcmp.eq.s32.totalorder %v80, %v1295
    %vm1304 = vcmp.eq.s32.totalorder %v81, %v1295
    %vm1305 = vcmp.eq.s32.totalorder %v82, %v1295
    %vm1306 = vcmp.eq.s32.totalorder %v83, %v1295
    %vm1307 = vcmp.eq.s32.totalorder %v84, %v1295
    %v1308 = vsel %vm1296, 1, 0
    %v1309 = vsel %vm1297, 1, 0
    %v1310 = vsel %vm1298, 1, 0
    %v1311 = vsel %vm1299, 1, 0
    %v1312 = vsel %vm1300, 1, 0
    %v1313 = vsel %vm1301, 1, 0
    %v1314 = vsel %vm1302, 1, 0
    %v1315 = vsel %vm1303, 1, 0
    %v1316 = vsel %vm1304, 1, 0
    %v1317 = vsel %vm1305, 1, 0
    %v1318 = vsel %vm1306, 1, 0
    %v1319 = vsel %vm1307, 1, 0
    %vm1320 = vcmp.eq.s32.totalorder %v1308, 1
    %vm1321 = vcmp.eq.s32.totalorder %v1309, 1
    %vm1322 = vcmp.eq.s32.totalorder %v1310, 1
    %vm1323 = vcmp.eq.s32.totalorder %v1311, 1
    %vm1324 = vcmp.eq.s32.totalorder %v1312, 1
    %vm1325 = vcmp.eq.s32.totalorder %v1313, 1
    %vm1326 = vcmp.eq.s32.totalorder %v1314, 1
    %vm1327 = vcmp.eq.s32.totalorder %v1315, 1
    %vm1328 = vcmp.eq.s32.totalorder %v1316, 1
    %vm1329 = vcmp.eq.s32.totalorder %v1317, 1
    %vm1330 = vcmp.eq.s32.totalorder %v1318, 1
    %vm1331 = vcmp.eq.s32.totalorder %v1319, 1
    %v1332 = vsel %vm1320, %v60, 0.0
    %v1333 = vsel %vm1321, %v61, 0.0
    %v1334 = vsel %vm1322, %v62, 0.0
    %v1335 = vsel %vm1323, %v63, 0.0
    %v1336 = vsel %vm1324, %v64, 0.0
    %v1337 = vsel %vm1325, %v65, 0.0
    %v1338 = vsel %vm1326, %v66, 0.0
    %v1339 = vsel %vm1327, %v67, 0.0
    %v1340 = vsel %vm1328, %v68, 0.0
    %v1341 = vsel %vm1329, %v69, 0.0
    %v1342 = vsel %vm1330, %v70, 0.0
    %v1343 = vsel %vm1331, %v71, 0.0
    %v1344 = vsel %vm135, %v1332, 0.0
    %v1345 = vsel %vm135, %v1333, 0.0
    %v1346 = vadd.f32 %v1344, %v1345
    %v1347 = vsel %vm135, %v1334, 0.0
    %v1348 = vadd.f32 %v1346, %v1347
    %v1349 = vsel %vm135, %v1335, 0.0
    %v1350 = vadd.f32 %v1348, %v1349
    %v1351 = vsel %vm135, %v1336, 0.0
    %v1352 = vadd.f32 %v1350, %v1351
    %v1353 = vsel %vm135, %v1337, 0.0
    %v1354 = vadd.f32 %v1352, %v1353
    %v1355 = vsel %vm135, %v1338, 0.0
    %v1356 = vadd.f32 %v1354, %v1355
    %v1357 = vsel %vm135, %v1339, 0.0
    %v1358 = vadd.f32 %v1356, %v1357
    %v1359 = vsel %vm135, %v1340, 0.0
    %v1360 = vadd.f32 %v1358, %v1359
    %v1361 = vsel %vm135, %v1341, 0.0
    %v1362 = vadd.f32 %v1360, %v1361
    %v1363 = vsel %vm135, %v1342, 0.0
    %v1364 = vadd.f32 %v1362, %v1363
    %v1365 = vsel %vm157, %v1343, 0.0
    %v1366 = vadd.f32 %v1364, %v1365
    %v1367 = vrot.slane %v1366, 4
    %v1368 = vadd.f32 %v1366, %v1367
    %v1369 = vrot.slane %v1368, 2
    %v1370 = vadd.f32 %v1368, %v1369
    %v1371 = vrot.slane %v1370, 1
    %v1372 = vadd.f32 %v1370, %v1371
    %v1373 = vsel %vm719, %v812, %v892
    %v1374 = vsel %vm721, %v1373, %v972
    %v1375 = vsel %vm723, %v1374, %v1052
    %v1376 = vsel %vm725, %v1375, %v1132
    %v1377 = vsel %vm727, %v1376, %v1212
    %v1378 = vsel %vm729, %v1377, %v1292
    %v1379 = vsel %vm731, %v1378, %v1372
    %v1380 = vmax.f32 %v1379, 0.0
    %v1381 = vld [vmem:[#allocation8] sm:$0xff]
    %v1382 = vld [vmem:[#allocation8 + $0x8] sm:$0xff]
    %v1383 = vld [vmem:[#allocation8 + $0x10] sm:$0xff]
    %v1384 = vld [vmem:[#allocation8 + $0x68] sm:$0xff]
    %v1385 = vld [vmem:[#allocation8 + $0x70] sm:$0xff]
    %v1386 = vld [vmem:[#allocation8 + $0x78] sm:$0xff]
    %v1387 = vld [vmem:[#allocation8 + $0xd0] sm:$0xff]
    %v1388 = vld [vmem:[#allocation8 + $0xd8] sm:$0xff]
    %v1389 = vld [vmem:[#allocation8 + $0xe0] sm:$0xff]
    %v1390 = vld [vmem:[#allocation8 + $0x138] sm:$0xff]
    %v1391 = vld [vmem:[#allocation8 + $0x140] sm:$0xff]
    %v1392 = vld [vmem:[#allocation8 + $0x148] sm:$0xff]
    %v1393 = vld [vmem:[%s4] sm:$0x7]
    %v1395 = vlaneseq
    %v1396 = vshrl.u32 %v1395, 7
    %v1397 = vsub.s32 0, %v1396
    %v1398 = vrot.slane %v1393, %v1397
    %v1399 = vlaneseq
    %v1400 = vshrl.u32 %v1399, 7
    %v1401 = vsub.s32 1, %v1400
    %v1402 = vrot.slane %v1393, %v1401
    %v1403 = vlaneseq
    %v1404 = vshrl.u32 %v1403, 7
    %v1405 = vsub.s32 2, %v1404
    %v1406 = vrot.slane %v1393, %v1405
    %v1411 = vsel %vm135, %v732, 0
    %1413 = vmatprep.subr.mxu0 %v1382
    %1414 = vmatpush1.msra.mxu0 %v1381
    %1415 = vmatprep.subr.mxu0 %v1385
    %1416 = vmatpush1.msra.mxu0 %v1384
    %1417 = vmatprep.subr.mxu0 %v1388
    %1418 = vmatpush1.msra.mxu0 %v1387
    %1419 = vmatprep.subr.mxu0 %v1391
    %1420 = vmatpush1.msra.mxu0 %v1390
    %1421 = vmatprep.subr.mxu0 0.0
    %1422 = vmatpush1.msra.mxu0 0.0
    %1423 = vmatprep.subr.mxu0 0.0
    %1424 = vmatpush1.msra.mxu0 0.0
    %1425 = vmatprep.subr.mxu0 0.0
    %1426 = vmatpush1.msra.mxu0 0.0
    %1427 = vmatprep.subr.mxu0 0.0
    %1428 = vmatpush1.msra.mxu0 0.0
    %1429 = vmatprep.subr.mxu0 0.0
    %1430 = vmatpush1.msra.mxu0 0.0
    %1431 = vmatprep.subr.mxu0 0.0
    %1432 = vmatpush1.msra.mxu0 0.0
    %1433 = vmatprep.subr.mxu0 0.0
    %1434 = vmatpush1.msra.mxu0 0.0
    %1435 = vmatprep.subr.mxu0 0.0
    %1436 = vmatpush1.msra.mxu0 0.0
    %1437 = vmatprep.subr.mxu0 0.0
    %1438 = vmatpush1.msra.mxu0 0.0
    %1439 = vmatprep.subr.mxu0 0.0
    %1440 = vmatpush1.msra.mxu0 0.0
    %1441 = vmatprep.subr.mxu0 0.0
    %1442 = vmatpush1.msra.mxu0 0.0
    %1443 = vmatprep.subr.mxu0 0.0
    %1444 = vmatpush1.msra.mxu0 0.0
    %1445 = vmatprep.subr.mxu0 0.0
    %1446 = vmatpush1.msra.mxu0 0.0
    %1447 = vmatprep.subr.mxu0 0.0
    %1448 = vmatpush1.msra.mxu0 0.0
    %1449 = vmatprep.subr.mxu0 0.0
    %1450 = vmatpush1.msra.mxu0 0.0
    %1451 = vmatprep.subr.mxu0 0.0
    %1452 = vmatpush1.msra.mxu0 0.0
    %1453 = vmatprep.subr.mxu0 0.0
    %1454 = vmatpush1.msra.mxu0 0.0
    %1455 = vmatprep.subr.mxu0 0.0
    %1456 = vmatpush1.msra.mxu0 0.0
    %1457 = vmatprep.subr.mxu0 0.0
    %1458 = vmatpush1.msra.mxu0 0.0
    %1459 = vmatprep.subr.mxu0 0.0
    %1460 = vmatpush1.msra.mxu0 0.0
    %1461 = vmatprep.subr.mxu0 0.0
    %1462 = vmatpush1.msra.mxu0 0.0
    %1463 = vmatprep.subr.mxu0 0.0
    %1464 = vmatpush1.msra.mxu0 0.0
    %1465 = vmatprep.subr.mxu0 0.0
    %1466 = vmatpush1.msra.mxu0 0.0
    %1467 = vmatprep.subr.mxu0 0.0
    %1468 = vmatpush1.msra.mxu0 0.0
    %1469 = vmatprep.subr.mxu0 0.0
    %1470 = vmatpush1.msra.mxu0 0.0
    %1471 = vmatprep.subr.mxu0 0.0
    %1472 = vmatpush1.msra.mxu0 0.0
    %1473 = vmatprep.subr.mxu0 0.0
    %1474 = vmatpush1.msra.mxu0 0.0
    %1475 = vmatprep.subr.mxu0 0.0
    %1476 = vmatpush1.msra.mxu0 0.0
    %1477 = vmatprep.mubr.f32.mxu0 0.0
    %1478 = vmatmul.mubr.f32.gmra.mrb[0].mxu0 %v1411
    %v1479 = vpop.f32.mrb[0].mxu0
    %v1480 = vadd.f32 %v1398, %v1479
    %v1481 = vpop.f32.mrb[0].mxu0
    %v1482 = vadd.f32 %v1402, %v1481
    %1483 = vdwg.mxu0
    %1484 = vmatprep.subr.mxu0 0.0
    %1485 = vmatpush1.msra.mxu0 %v1383
    %1486 = vmatprep.subr.mxu0 0.0
    %1487 = vmatpush1.msra.mxu0 %v1386
    %1488 = vmatprep.subr.mxu0 0.0
    %1489 = vmatpush1.msra.mxu0 %v1389
    %1490 = vmatprep.subr.mxu0 0.0
    %1491 = vmatpush1.msra.mxu0 %v1392
    %1492 = vmatprep.subr.mxu0 0.0
    %1493 = vmatpush1.msra.mxu0 0.0
    %1494 = vmatprep.subr.mxu0 0.0
    %1495 = vmatpush1.msra.mxu0 0.0
    %1496 = vmatprep.subr.mxu0 0.0
    %1497 = vmatpush1.msra.mxu0 0.0
    %1498 = vmatprep.subr.mxu0 0.0
    %1499 = vmatpush1.msra.mxu0 0.0
    %1500 = vmatprep.subr.mxu0 0.0
    %1501 = vmatpush1.msra.mxu0 0.0
    %1502 = vmatprep.subr.mxu0 0.0
    %1503 = vmatpush1.msra.mxu0 0.0
    %1504 = vmatprep.subr.mxu0 0.0
    %1505 = vmatpush1.msra.mxu0 0.0
    %1506 = vmatprep.subr.mxu0 0.0
    %1507 = vmatpush1.msra.mxu0 0.0
    %1508 = vmatprep.subr.mxu0 0.0
    %1509 = vmatpush1.msra.mxu0 0.0
    %1510 = vmatprep.subr.mxu0 0.0
    %1511 = vmatpush1.msra.mxu0 0.0
    %1512 = vmatprep.subr.mxu0 0.0
    %1513 = vmatpush1.msra.mxu0 0.0
    %1514 = vmatprep.subr.mxu0 0.0
    %1515 = vmatpush1.msra.mxu0 0.0
    %1516 = vmatprep.subr.mxu0 0.0
    %1517 = vmatpush1.msra.mxu0 0.0
    %1518 = vmatprep.subr.mxu0 0.0
    %1519 = vmatpush1.msra.mxu0 0.0
    %1520 = vmatprep.subr.mxu0 0.0
    %1521 = vmatpush1.msra.mxu0 0.0
    %1522 = vmatprep.subr.mxu0 0.0
    %1523 = vmatpush1.msra.mxu0 0.0
    %1524 = vmatprep.subr.mxu0 0.0
    %1525 = vmatpush1.msra.mxu0 0.0
    %1526 = vmatprep.subr.mxu0 0.0
    %1527 = vmatpush1.msra.mxu0 0.0
    %1528 = vmatprep.subr.mxu0 0.0
    %1529 = vmatpush1.msra.mxu0 0.0
    %1530 = vmatprep.subr.mxu0 0.0
    %1531 = vmatpush1.msra.mxu0 0.0
    %1532 = vmatprep.subr.mxu0 0.0
    %1533 = vmatpush1.msra.mxu0 0.0
    %1534 = vmatprep.subr.mxu0 0.0
    %1535 = vmatpush1.msra.mxu0 0.0
    %1536 = vmatprep.subr.mxu0 0.0
    %1537 = vmatpush1.msra.mxu0 0.0
    %1538 = vmatprep.subr.mxu0 0.0
    %1539 = vmatpush1.msra.mxu0 0.0
    %1540 = vmatprep.subr.mxu0 0.0
    %1541 = vmatpush1.msra.mxu0 0.0
    %1542 = vmatprep.subr.mxu0 0.0
    %1543 = vmatpush1.msra.mxu0 0.0
    %1544 = vmatprep.subr.mxu0 0.0
    %1545 = vmatpush1.msra.mxu0 0.0
    %1546 = vmatprep.subr.mxu0 0.0
    %1547 = vmatpush1.msra.mxu0 0.0
    %1548 = vmatprep.mubr.f32.mxu0 0.0
    %1549 = vmatmul.mubr.f32.gmra.mrb[0].mxu0 %v1411
    %v1550 = vpop.f32.mrb[0].mxu0
    %v1551 = vadd.f32 %v1406, %v1550
    %v1552 = vpop.f32.mrb[0].mxu0
    %1553 = vdwg.mxu0
    %v1554 = vld [vmem:[#allocation8 + $0x30] sm:$0xff]
    %v1555 = vld [vmem:[#allocation8 + $0x38] sm:$0xff]
    %v1556 = vld [vmem:[#allocation8 + $0x40] sm:$0xff]
    %v1557 = vld [vmem:[#allocation8 + $0x98] sm:$0xff]
    %v1558 = vld [vmem:[#allocation8 + $0xa0] sm:$0xff]
    %v1559 = vld [vmem:[#allocation8 + $0xa8] sm:$0xff]
    %v1560 = vld [vmem:[#allocation8 + $0x100] sm:$0xff]
    %v1561 = vld [vmem:[#allocation8 + $0x108] sm:$0xff]
    %v1562 = vld [vmem:[#allocation8 + $0x110] sm:$0xff]
    %v1563 = vld [vmem:[#allocation8 + $0x168] sm:$0xff]
    %v1564 = vld [vmem:[#allocation8 + $0x170] sm:$0xff]
    %v1565 = vld [vmem:[#allocation8 + $0x178] sm:$0xff]
    %v1566 = vld [vmem:[%s4 + $0x6] sm:$0x7]
    %v1568 = vlaneseq
    %v1569 = vshrl.u32 %v1568, 7
    %v1570 = vsub.s32 0, %v1569
    %v1571 = vrot.slane %v1566, %v1570
    %v1572 = vlaneseq
    %v1573 = vshrl.u32 %v1572, 7
    %v1574 = vsub.s32 1, %v1573
    %v1575 = vrot.slane %v1566, %v1574
    %v1576 = vlaneseq
    %v1577 = vshrl.u32 %v1576, 7
    %v1578 = vsub.s32 2, %v1577
    %v1579 = vrot.slane %v1566, %v1578
    %v1584 = vsel %vm135, %v1380, 0
    %1586 = vmatprep.subr.mxu0 %v1555
    %1587 = vmatpush1.msra.mxu0 %v1554
    %1588 = vmatprep.subr.mxu0 %v1558
    %1589 = vmatpush1.msra.mxu0 %v1557
    %1590 = vmatprep.subr.mxu0 %v1561
    %1591 = vmatpush1.msra.mxu0 %v1560
    %1592 = vmatprep.subr.mxu0 %v1564
    %1593 = vmatpush1.msra.mxu0 %v1563
    %1594 = vmatprep.subr.mxu0 0.0
    %1595 = vmatpush1.msra.mxu0 0.0
    %1596 = vmatprep.subr.mxu0 0.0
    %1597 = vmatpush1.msra.mxu0 0.0
    %1598 = vmatprep.subr.mxu0 0.0
    %1599 = vmatpush1.msra.mxu0 0.0
    %1600 = vmatprep.subr.mxu0 0.0
    %1601 = vmatpush1.msra.mxu0 0.0
    %1602 = vmatprep.subr.mxu0 0.0
    %1603 = vmatpush1.msra.mxu0 0.0
    %1604 = vmatprep.subr.mxu0 0.0
    %1605 = vmatpush1.msra.mxu0 0.0
    %1606 = vmatprep.subr.mxu0 0.0
    %1607 = vmatpush1.msra.mxu0 0.0
    %1608 = vmatprep.subr.mxu0 0.0
    %1609 = vmatpush1.msra.mxu0 0.0
    %1610 = vmatprep.subr.mxu0 0.0
    %1611 = vmatpush1.msra.mxu0 0.0
    %1612 = vmatprep.subr.mxu0 0.0
    %1613 = vmatpush1.msra.mxu0 0.0
    %1614 = vmatprep.subr.mxu0 0.0
    %1615 = vmatpush1.msra.mxu0 0.0
    %1616 = vmatprep.subr.mxu0 0.0
    %1617 = vmatpush1.msra.mxu0 0.0
    %1618 = vmatprep.subr.mxu0 0.0
    %1619 = vmatpush1.msra.mxu0 0.0
    %1620 = vmatprep.subr.mxu0 0.0
    %1621 = vmatpush1.msra.mxu0 0.0
    %1622 = vmatprep.subr.mxu0 0.0
    %1623 = vmatpush1.msra.mxu0 0.0
    %1624 = vmatprep.subr.mxu0 0.0
    %1625 = vmatpush1.msra.mxu0 0.0
    %1626 = vmatprep.subr.mxu0 0.0
    %1627 = vmatpush1.msra.mxu0 0.0
    %1628 = vmatprep.subr.mxu0 0.0
    %1629 = vmatpush1.msra.mxu0 0.0
    %1630 = vmatprep.subr.mxu0 0.0
    %1631 = vmatpush1.msra.mxu0 0.0
    %1632 = vmatprep.subr.mxu0 0.0
    %1633 = vmatpush1.msra.mxu0 0.0
    %1634 = vmatprep.subr.mxu0 0.0
    %1635 = vmatpush1.msra.mxu0 0.0
    %1636 = vmatprep.subr.mxu0 0.0
    %1637 = vmatpush1.msra.mxu0 0.0
    %1638 = vmatprep.subr.mxu0 0.0
    %1639 = vmatpush1.msra.mxu0 0.0
    %1640 = vmatprep.subr.mxu0 0.0
    %1641 = vmatpush1.msra.mxu0 0.0
    %1642 = vmatprep.subr.mxu0 0.0
    %1643 = vmatpush1.msra.mxu0 0.0
    %1644 = vmatprep.subr.mxu0 0.0
    %1645 = vmatpush1.msra.mxu0 0.0
    %1646 = vmatprep.subr.mxu0 0.0
    %1647 = vmatpush1.msra.mxu0 0.0
    %1648 = vmatprep.subr.mxu0 0.0
    %1649 = vmatpush1.msra.mxu0 0.0
    %1650 = vmatprep.mubr.f32.mxu0 0.0
    %1651 = vmatmul.mubr.f32.gmra.mrb[0].mxu0 %v1584
    %v1652 = vpop.f32.mrb[0].mxu0
    %v1653 = vadd.f32 %v1571, %v1652
    %v1654 = vpop.f32.mrb[0].mxu0
    %v1655 = vadd.f32 %v1575, %v1654
    %1656 = vdwg.mxu0
    %1657 = vmatprep.subr.mxu0 0.0
    %1658 = vmatpush1.msra.mxu0 %v1556
    %1659 = vmatprep.subr.mxu0 0.0
    %1660 = vmatpush1.msra.mxu0 %v1559
    %1661 = vmatprep.subr.mxu0 0.0
    %1662 = vmatpush1.msra.mxu0 %v1562
    %1663 = vmatprep.subr.mxu0 0.0
    %1664 = vmatpush1.msra.mxu0 %v1565
    %1665 = vmatprep.subr.mxu0 0.0
    %1666 = vmatpush1.msra.mxu0 0.0
    %1667 = vmatprep.subr.mxu0 0.0
    %1668 = vmatpush1.msra.mxu0 0.0
    %1669 = vmatprep.subr.mxu0 0.0
    %1670 = vmatpush1.msra.mxu0 0.0
    %1671 = vmatprep.subr.mxu0 0.0
    %1672 = vmatpush1.msra.mxu0 0.0
    %1673 = vmatprep.subr.mxu0 0.0
    %1674 = vmatpush1.msra.mxu0 0.0
    %1675 = vmatprep.subr.mxu0 0.0
    %1676 = vmatpush1.msra.mxu0 0.0
    %1677 = vmatprep.subr.mxu0 0.0
    %1678 = vmatpush1.msra.mxu0 0.0
    %1679 = vmatprep.subr.mxu0 0.0
    %1680 = vmatpush1.msra.mxu0 0.0
    %1681 = vmatprep.subr.mxu0 0.0
    %1682 = vmatpush1.msra.mxu0 0.0
    %1683 = vmatprep.subr.mxu0 0.0
    %1684 = vmatpush1.msra.mxu0 0.0
    %1685 = vmatprep.subr.mxu0 0.0
    %1686 = vmatpush1.msra.mxu0 0.0
    %1687 = vmatprep.subr.mxu0 0.0
    %1688 = vmatpush1.msra.mxu0 0.0
    %1689 = vmatprep.subr.mxu0 0.0
    %1690 = vmatpush1.msra.mxu0 0.0
    %1691 = vmatprep.subr.mxu0 0.0
    %1692 = vmatpush1.msra.mxu0 0.0
    %1693 = vmatprep.subr.mxu0 0.0
    %1694 = vmatpush1.msra.mxu0 0.0
    %1695 = vmatprep.subr.mxu0 0.0
    %1696 = vmatpush1.msra.mxu0 0.0
    %1697 = vmatprep.subr.mxu0 0.0
    %1698 = vmatpush1.msra.mxu0 0.0
    %1699 = vmatprep.subr.mxu0 0.0
    %1700 = vmatpush1.msra.mxu0 0.0
    %1701 = vmatprep.subr.mxu0 0.0
    %1702 = vmatpush1.msra.mxu0 0.0
    %1703 = vmatprep.subr.mxu0 0.0
    %1704 = vmatpush1.msra.mxu0 0.0
    %1705 = vmatprep.subr.mxu0 0.0
    %1706 = vmatpush1.msra.mxu0 0.0
    %1707 = vmatprep.subr.mxu0 0.0
    %1708 = vmatpush1.msra.mxu0 0.0
    %1709 = vmatprep.subr.mxu0 0.0
    %1710 = vmatpush1.msra.mxu0 0.0
    %1711 = vmatprep.subr.mxu0 0.0
    %1712 = vmatpush1.msra.mxu0 0.0
    %1713 = vmatprep.subr.mxu0 0.0
    %1714 = vmatpush1.msra.mxu0 0.0
    %1715 = vmatprep.subr.mxu0 0.0
    %1716 = vmatpush1.msra.mxu0 0.0
    %1717 = vmatprep.subr.mxu0 0.0
    %1718 = vmatpush1.msra.mxu0 0.0
    %1719 = vmatprep.subr.mxu0 0.0
    %1720 = vmatpush1.msra.mxu0 0.0
    %1721 = vmatprep.mubr.f32.mxu0 0.0
    %1722 = vmatmul.mubr.f32.gmra.mrb[0].mxu0 %v1584
    %v1723 = vpop.f32.mrb[0].mxu0
    %v1724 = vadd.f32 %v1579, %v1723
    %v1725 = vpop.f32.mrb[0].mxu0
    %1726 = vdwg.mxu0
    %v1727 = vld [vmem:[#allocation8 + $0x18] sm:$0xff]
    %v1728 = vld [vmem:[#allocation8 + $0x20] sm:$0xff]
    %v1729 = vld [vmem:[#allocation8 + $0x28] sm:$0xff]
    %v1730 = vld [vmem:[#allocation8 + $0x80] sm:$0xff]
    %v1731 = vld [vmem:[#allocation8 + $0x88] sm:$0xff]
    %v1732 = vld [vmem:[#allocation8 + $0x90] sm:$0xff]
    %v1733 = vld [vmem:[#allocation8 + $0xe8] sm:$0xff]
    %v1734 = vld [vmem:[#allocation8 + $0xf0] sm:$0xff]
    %v1735 = vld [vmem:[#allocation8 + $0xf8] sm:$0xff]
    %v1736 = vld [vmem:[#allocation8 + $0x150] sm:$0xff]
    %v1737 = vld [vmem:[#allocation8 + $0x158] sm:$0xff]
    %v1738 = vld [vmem:[#allocation8 + $0x160] sm:$0xff]
    %v1739 = vld [vmem:[#allocation8 + $0x48] sm:$0xff]
    %v1740 = vld [vmem:[#allocation8 + $0x50] sm:$0xff]
    %v1741 = vld [vmem:[#allocation8 + $0x58] sm:$0xff]
    %v1742 = vld [vmem:[#allocation8 + $0xb0] sm:$0xff]
    %v1743 = vld [vmem:[#allocation8 + $0xb8] sm:$0xff]
    %v1744 = vld [vmem:[#allocation8 + $0xc0] sm:$0xff]
    %v1745 = vld [vmem:[#allocation8 + $0x118] sm:$0xff]
    %v1746 = vld [vmem:[#allocation8 + $0x120] sm:$0xff]
    %v1747 = vld [vmem:[#allocation8 + $0x128] sm:$0xff]
    %v1748 = vld [vmem:[#allocation8 + $0x180] sm:$0xff]
    %v1749 = vld [vmem:[#allocation8 + $0x188] sm:$0xff]
    %v1750 = vld [vmem:[#allocation8 + $0x190] sm:$0xff]
    %v1751 = vld [vmem:[%s4 + $0x3] sm:$0x7]
    %v1752 = vld [vmem:[%s4 + $0x9] sm:$0x7]
    %v1754 = vlaneseq
    %v1755 = vshrl.u32 %v1754, 7
    %v1756 = vsub.s32 0, %v1755
    %v1757 = vrot.slane %v1751, %v1756
    %v1758 = vlaneseq
    %v1759 = vshrl.u32 %v1758, 7
    %v1760 = vsub.s32 1, %v1759
    %v1761 = vrot.slane %v1751, %v1760
    %v1762 = vlaneseq
    %v1763 = vshrl.u32 %v1762, 7
    %v1764 = vsub.s32 2, %v1763
    %v1765 = vrot.slane %v1751, %v1764
    %v1770 = vsel %vm135, 0.0, 0
    %1772 = vmatprep.subr.mxu0 %v1728
    %1773 = vmatpush1.msra.mxu0 %v1727
    %1774 = vmatprep.subr.mxu0 %v1731
    %1775 = vmatpush1.msra.mxu0 %v1730
    %1776 = vmatprep.subr.mxu0 %v1734
    %1777 = vmatpush1.msra.mxu0 %v1733
    %1778 = vmatprep.subr.mxu0 %v1737
    %1779 = vmatpush1.msra.mxu0 %v1736
    %1780 = vmatprep.subr.mxu0 0.0
    %1781 = vmatpush1.msra.mxu0 0.0
    %1782 = vmatprep.subr.mxu0 0.0
    %1783 = vmatpush1.msra.mxu0 0.0
    %1784 = vmatprep.subr.mxu0 0.0
    %1785 = vmatpush1.msra.mxu0 0.0
    %1786 = vmatprep.subr.mxu0 0.0
    %1787 = vmatpush1.msra.mxu0 0.0
    %1788 = vmatprep.subr.mxu0 0.0
    %1789 = vmatpush1.msra.mxu0 0.0
    %1790 = vmatprep.subr.mxu0 0.0
    %1791 = vmatpush1.msra.mxu0 0.0
    %1792 = vmatprep.subr.mxu0 0.0
    %1793 = vmatpush1.msra.mxu0 0.0
    %1794 = vmatprep.subr.mxu0 0.0
    %1795 = vmatpush1.msra.mxu0 0.0
    %1796 = vmatprep.subr.mxu0 0.0
    %1797 = vmatpush1.msra.mxu0 0.0
    %1798 = vmatprep.subr.mxu0 0.0
    %1799 = vmatpush1.msra.mxu0 0.0
    %1800 = vmatprep.subr.mxu0 0.0
    %1801 = vmatpush1.msra.mxu0 0.0
    %1802 = vmatprep.subr.mxu0 0.0
    %1803 = vmatpush1.msra.mxu0 0.0
    %1804 = vmatprep.subr.mxu0 0.0
    %1805 = vmatpush1.msra.mxu0 0.0
    %1806 = vmatprep.subr.mxu0 0.0
    %1807 = vmatpush1.msra.mxu0 0.0
    %1808 = vmatprep.subr.mxu0 0.0
    %1809 = vmatpush1.msra.mxu0 0.0
    %1810 = vmatprep.subr.mxu0 0.0
    %1811 = vmatpush1.msra.mxu0 0.0
    %1812 = vmatprep.subr.mxu0 0.0
    %1813 = vmatpush1.msra.mxu0 0.0
    %1814 = vmatprep.subr.mxu0 0.0
    %1815 = vmatpush1.msra.mxu0 0.0
    %1816 = vmatprep.subr.mxu0 0.0
    %1817 = vmatpush1.msra.mxu0 0.0
    %1818 = vmatprep.subr.mxu0 0.0
    %1819 = vmatpush1.msra.mxu0 0.0
    %1820 = vmatprep.subr.mxu0 0.0
    %1821 = vmatpush1.msra.mxu0 0.0
    %1822 = vmatprep.subr.mxu0 0.0
    %1823 = vmatpush1.msra.mxu0 0.0
    %1824 = vmatprep.subr.mxu0 0.0
    %1825 = vmatpush1.msra.mxu0 0.0
    %1826 = vmatprep.subr.mxu0 0.0
    %1827 = vmatpush1.msra.mxu0 0.0
    %1828 = vmatprep.subr.mxu0 0.0
    %1829 = vmatpush1.msra.mxu0 0.0
    %1830 = vmatprep.subr.mxu0 0.0
    %1831 = vmatpush1.msra.mxu0 0.0
    %1832 = vmatprep.subr.mxu0 0.0
    %1833 = vmatpush1.msra.mxu0 0.0
    %1834 = vmatprep.subr.mxu0 0.0
    %1835 = vmatpush1.msra.mxu0 0.0
    %1836 = vmatprep.mubr.f32.mxu0 0.0
    %1837 = vmatmul.mubr.f32.gmra.mrb[0].mxu0 %v1770
    %v1838 = vpop.f32.mrb[0].mxu0
    %v1839 = vadd.f32 %v1757, %v1838
    %v1840 = vpop.f32.mrb[0].mxu0
    %v1841 = vadd.f32 %v1761, %v1840
    %1842 = vdwg.mxu0
    %1843 = vmatprep.subr.mxu0 0.0
    %1844 = vmatpush1.msra.mxu0 %v1729
    %1845 = vmatprep.subr.mxu0 0.0
    %1846 = vmatpush1.msra.mxu0 %v1732
    %1847 = vmatprep.subr.mxu0 0.0
    %1848 = vmatpush1.msra.mxu0 %v1735
    %1849 = vmatprep.subr.mxu0 0.0
    %1850 = vmatpush1.msra.mxu0 %v1738
    %1851 = vmatprep.subr.mxu0 0.0
    %1852 = vmatpush1.msra.mxu0 0.0
    %1853 = vmatprep.subr.mxu0 0.0
    %1854 = vmatpush1.msra.mxu0 0.0
    %1855 = vmatprep.subr.mxu0 0.0
    %1856 = vmatpush1.msra.mxu0 0.0
    %1857 = vmatprep.subr.mxu0 0.0
    %1858 = vmatpush1.msra.mxu0 0.0
    %1859 = vmatprep.subr.mxu0 0.0
    %1860 = vmatpush1.msra.mxu0 0.0
    %1861 = vmatprep.subr.mxu0 0.0
    %1862 = vmatpush1.msra.mxu0 0.0
    %1863 = vmatprep.subr.mxu0 0.0
    %1864 = vmatpush1.msra.mxu0 0.0
    %1865 = vmatprep.subr.mxu0 0.0
    %1866 = vmatpush1.msra.mxu0 0.0
    %1867 = vmatprep.subr.mxu0 0.0
    %1868 = vmatpush1.msra.mxu0 0.0
    %1869 = vmatprep.subr.mxu0 0.0
    %1870 = vmatpush1.msra.mxu0 0.0
    %1871 = vmatprep.subr.mxu0 0.0
    %1872 = vmatpush1.msra.mxu0 0.0
    %1873 = vmatprep.subr.mxu0 0.0
    %1874 = vmatpush1.msra.mxu0 0.0
    %1875 = vmatprep.subr.mxu0 0.0
    %1876 = vmatpush1.msra.mxu0 0.0
    %1877 = vmatprep.subr.mxu0 0.0
    %1878 = vmatpush1.msra.mxu0 0.0
    %1879 = vmatprep.subr.mxu0 0.0
    %1880 = vmatpush1.msra.mxu0 0.0
    %1881 = vmatprep.subr.mxu0 0.0
    %1882 = vmatpush1.msra.mxu0 0.0
    %1883 = vmatprep.subr.mxu0 0.0
    %1884 = vmatpush1.msra.mxu0 0.0
    %1885 = vmatprep.subr.mxu0 0.0
    %1886 = vmatpush1.msra.mxu0 0.0
    %1887 = vmatprep.subr.mxu0 0.0
    %1888 = vmatpush1.msra.mxu0 0.0
    %1889 = vmatprep.subr.mxu0 0.0
    %1890 = vmatpush1.msra.mxu0 0.0
    %1891 = vmatprep.subr.mxu0 0.0
    %1892 = vmatpush1.msra.mxu0 0.0
    %1893 = vmatprep.subr.mxu0 0.0
    %1894 = vmatpush1.msra.mxu0 0.0
    %1895 = vmatprep.subr.mxu0 0.0
    %1896 = vmatpush1.msra.mxu0 0.0
    %1897 = vmatprep.subr.mxu0 0.0
    %1898 = vmatpush1.msra.mxu0 0.0
    %1899 = vmatprep.subr.mxu0 0.0
    %1900 = vmatpush1.msra.mxu0 0.0
    %1901 = vmatprep.subr.mxu0 0.0
    %1902 = vmatpush1.msra.mxu0 0.0
    %1903 = vmatprep.subr.mxu0 0.0
    %1904 = vmatpush1.msra.mxu0 0.0
    %1905 = vmatprep.subr.mxu0 0.0
    %1906 = vmatpush1.msra.mxu0 0.0
    %1907 = vmatprep.mubr.f32.mxu0 0.0
    %1908 = vmatmul.mubr.f32.gmra.mrb[0].mxu0 %v1770
    %v1909 = vpop.f32.mrb[0].mxu0
    %v1910 = vadd.f32 %v1765, %v1909
    %v1911 = vpop.f32.mrb[0].mxu0
    %1912 = vdwg.mxu0
    %v1913 = vadd.f32 %v1480, %v1839
    %v1914 = vadd.f32 %v1482, %v1841
    %v1915 = vxor.u32 %v1913, 2147483648
    %v1916 = vxor.u32 %v1914, 2147483648
    %v1917 = vmul.f32 %v1915, 1.442695
    %v1918 = vpow.pop %v1917
    %v1919 = vmul.f32 %v1916, 1.442695
    %v1920 = vpow.pop %v1919
    %v1921 = vadd.f32 %v1918, 1.0
    %v1922 = vadd.f32 %v1920, 1.0
    %v1923 = vrcp.pop %v1921
    %v1924 = vmul.f32 1.0, %v1923
    %v1925 = vrcp.pop %v1922
    %v1926 = vmul.f32 1.0, %v1925
    %v1927 = vmul.f32 %v1924, %v1910
    %v1928 = vadd.f32 %v1551, %v1927
    %v1929 = vtanh.pop %v1928
    %v1930 = vsub.f32 0.0, %v1929
    %v1931 = vmul.f32 %v1926, %v1930
    %v1932 = vadd.f32 %v1929, %v1931
    %v1934 = vlaneseq
    %v1935 = vshrl.u32 %v1934, 7
    %v1936 = vsub.s32 0, %v1935
    %v1937 = vrot.slane %v1752, %v1936
    %v1938 = vlaneseq
    %v1939 = vshrl.u32 %v1938, 7
    %v1940 = vsub.s32 1, %v1939
    %v1941 = vrot.slane %v1752, %v1940
    %v1942 = vlaneseq
    %v1943 = vshrl.u32 %v1942, 7
    %v1944 = vsub.s32 2, %v1943
    %v1945 = vrot.slane %v1752, %v1944
    %v1950 = vsel %vm135, %v1932, 0
    %1952 = vmatprep.subr.mxu0 %v1740
    %1953 = vmatpush1.msra.mxu0 %v1739
    %1954 = vmatprep.subr.mxu0 %v1743
    %1955 = vmatpush1.msra.mxu0 %v1742
    %1956 = vmatprep.subr.mxu0 %v1746
    %1957 = vmatpush1.msra.mxu0 %v1745
    %1958 = vmatprep.subr.mxu0 %v1749
    %1959 = vmatpush1.msra.mxu0 %v1748
    %1960 = vmatprep.subr.mxu0 0.0
    %1961 = vmatpush1.msra.mxu0 0.0
    %1962 = vmatprep.subr.mxu0 0.0
    %1963 = vmatpush1.msra.mxu0 0.0
    %1964 = vmatprep.subr.mxu0 0.0
    %1965 = vmatpush1.msra.mxu0 0.0
    %1966 = vmatprep.subr.mxu0 0.0
    %1967 = vmatpush1.msra.mxu0 0.0
    %1968 = vmatprep.subr.mxu0 0.0
    %1969 = vmatpush1.msra.mxu0 0.0
    %1970 = vmatprep.subr.mxu0 0.0
    %1971 = vmatpush1.msra.mxu0 0.0
    %1972 = vmatprep.subr.mxu0 0.0
    %1973 = vmatpush1.msra.mxu0 0.0
    %1974 = vmatprep.subr.mxu0 0.0
    %1975 = vmatpush1.msra.mxu0 0.0
    %1976 = vmatprep.subr.mxu0 0.0
    %1977 = vmatpush1.msra.mxu0 0.0
    %1978 = vmatprep.subr.mxu0 0.0
    %1979 = vmatpush1.msra.mxu0 0.0
    %1980 = vmatprep.subr.mxu0 0.0
    %1981 = vmatpush1.msra.mxu0 0.0
    %1982 = vmatprep.subr.mxu0 0.0
    %1983 = vmatpush1.msra.mxu0 0.0
    %1984 = vmatprep.subr.mxu0 0.0
    %1985 = vmatpush1.msra.mxu0 0.0
    %1986 = vmatprep.subr.mxu0 0.0
    %1987 = vmatpush1.msra.mxu0 0.0
    %1988 = vmatprep.subr.mxu0 0.0
    %1989 = vmatpush1.msra.mxu0 0.0
    %1990 = vmatprep.subr.mxu0 0.0
    %1991 = vmatpush1.msra.mxu0 0.0
    %1992 = vmatprep.subr.mxu0 0.0
    %1993 = vmatpush1.msra.mxu0 0.0
    %1994 = vmatprep.subr.mxu0 0.0
    %1995 = vmatpush1.msra.mxu0 0.0
    %1996 = vmatprep.subr.mxu0 0.0
    %1997 = vmatpush1.msra.mxu0 0.0
    %1998 = vmatprep.subr.mxu0 0.0
    %1999 = vmatpush1.msra.mxu0 0.0
    %2000 = vmatprep.subr.mxu0 0.0
    %2001 = vmatpush1.msra.mxu0 0.0
    %2002 = vmatprep.subr.mxu0 0.0
    %2003 = vmatpush1.msra.mxu0 0.0
    %2004 = vmatprep.subr.mxu0 0.0
    %2005 = vmatpush1.msra.mxu0 0.0
    %2006 = vmatprep.subr.mxu0 0.0
    %2007 = vmatpush1.msra.mxu0 0.0
    %2008 = vmatprep.subr.mxu0 0.0
    %2009 = vmatpush1.msra.mxu0 0.0
    %2010 = vmatprep.subr.mxu0 0.0
    %2011 = vmatpush1.msra.mxu0 0.0
    %2012 = vmatprep.subr.mxu0 0.0
    %2013 = vmatpush1.msra.mxu0 0.0
    %2014 = vmatprep.subr.mxu0 0.0
    %2015 = vmatpush1.msra.mxu0 0.0
    %2016 = vmatprep.mubr.f32.mxu0 0.0
    %2017 = vmatmul.mubr.f32.gmra.mrb[0].mxu0 %v1950
    %v2018 = vpop.f32.mrb[0].mxu0
    %v2019 = vadd.f32 %v1937, %v2018
    %v2020 = vpop.f32.mrb[0].mxu0
    %v2021 = vadd.f32 %v1941, %v2020
    %2022 = vdwg.mxu0
    %2023 = vmatprep.subr.mxu0 0.0
    %2024 = vmatpush1.msra.mxu0 %v1741
    %2025 = vmatprep.subr.mxu0 0.0
    %2026 = vmatpush1.msra.mxu0 %v1744
    %2027 = vmatprep.subr.mxu0 0.0
    %2028 = vmatpush1.msra.mxu0 %v1747
    %2029 = vmatprep.subr.mxu0 0.0
    %2030 = vmatpush1.msra.mxu0 %v1750
    %2031 = vmatprep.subr.mxu0 0.0
    %2032 = vmatpush1.msra.mxu0 0.0
    %2033 = vmatprep.subr.mxu0 0.0
    %2034 = vmatpush1.msra.mxu0 0.0
    %2035 = vmatprep.subr.mxu0 0.0
    %2036 = vmatpush1.msra.mxu0 0.0
    %2037 = vmatprep.subr.mxu0 0.0
    %2038 = vmatpush1.msra.mxu0 0.0
    %2039 = vmatprep.subr.mxu0 0.0
    %2040 = vmatpush1.msra.mxu0 0.0
    %2041 = vmatprep.subr.mxu0 0.0
    %2042 = vmatpush1.msra.mxu0 0.0
    %2043 = vmatprep.subr.mxu0 0.0
    %2044 = vmatpush1.msra.mxu0 0.0
    %2045 = vmatprep.subr.mxu0 0.0
    %2046 = vmatpush1.msra.mxu0 0.0
    %2047 = vmatprep.subr.mxu0 0.0
    %2048 = vmatpush1.msra.mxu0 0.0
    %2049 = vmatprep.subr.mxu0 0.0
    %2050 = vmatpush1.msra.mxu0 0.0
    %2051 = vmatprep.subr.mxu0 0.0
    %2052 = vmatpush1.msra.mxu0 0.0
    %2053 = vmatprep.subr.mxu0 0.0
    %2054 = vmatpush1.msra.mxu0 0.0
    %2055 = vmatprep.subr.mxu0 0.0
    %2056 = vmatpush1.msra.mxu0 0.0
    %2057 = vmatprep.subr.mxu0 0.0
    %2058 = vmatpush1.msra.mxu0 0.0
    %2059 = vmatprep.subr.mxu0 0.0
    %2060 = vmatpush1.msra.mxu0 0.0
    %2061 = vmatprep.subr.mxu0 0.0
    %2062 = vmatpush1.msra.mxu0 0.0
    %2063 = vmatprep.subr.mxu0 0.0
    %2064 = vmatpush1.msra.mxu0 0.0
    %2065 = vmatprep.subr.mxu0 0.0
    %2066 = vmatpush1.msra.mxu0 0.0
    %2067 = vmatprep.subr.mxu0 0.0
    %2068 = vmatpush1.msra.mxu0 0.0
    %2069 = vmatprep.subr.mxu0 0.0
    %2070 = vmatpush1.msra.mxu0 0.0
    %2071 = vmatprep.subr.mxu0 0.0
    %2072 = vmatpush1.msra.mxu0 0.0
    %2073 = vmatprep.subr.mxu0 0.0
    %2074 = vmatpush1.msra.mxu0 0.0
    %2075 = vmatprep.subr.mxu0 0.0
    %2076 = vmatpush1.msra.mxu0 0.0
    %2077 = vmatprep.subr.mxu0 0.0
    %2078 = vmatpush1.msra.mxu0 0.0
    %2079 = vmatprep.subr.mxu0 0.0
    %2080 = vmatpush1.msra.mxu0 0.0
    %2081 = vmatprep.subr.mxu0 0.0
    %2082 = vmatpush1.msra.mxu0 0.0
    %2083 = vmatprep.subr.mxu0 0.0
    %2084 = vmatpush1.msra.mxu0 0.0
    %2085 = vmatprep.subr.mxu0 0.0
    %2086 = vmatpush1.msra.mxu0 0.0
    %2087 = vmatprep.mubr.f32.mxu0 0.0
    %2088 = vmatmul.mubr.f32.gmra.mrb[0].mxu0 %v1950
    %v2089 = vpop.f32.mrb[0].mxu0
    %v2090 = vadd.f32 %v1945, %v2089
    %v2091 = vpop.f32.mrb[0].mxu0
    %2092 = vdwg.mxu0
    %v2093 = vadd.f32 %v1653, %v2019
    %v2094 = vadd.f32 %v1655, %v2021
    %v2095 = vxor.u32 %v2093, 2147483648
    %v2096 = vxor.u32 %v2094, 2147483648
    %v2097 = vmul.f32 %v2095, 1.442695
    %v2098 = vpow.pop %v2097
    %v2099 = vmul.f32 %v2096, 1.442695
    %v2100 = vpow.pop %v2099
    %v2101 = vadd.f32 %v2098, 1.0
    %v2102 = vadd.f32 %v2100, 1.0
    %v2103 = vrcp.pop %v2101
    %v2104 = vmul.f32 1.0, %v2103
    %v2105 = vrcp.pop %v2102
    %v2106 = vmul.f32 1.0, %v2105
    %v2107 = vmul.f32 %v2104, %v2090
    %v2108 = vadd.f32 %v1724, %v2107
    %v2109 = vtanh.pop %v2108
    %v2110 = vsub.f32 %v1932, %v2109
    %v2111 = vmul.f32 %v2106, %v2110
    %v2112 = vadd.f32 %v2109, %v2111
    %v2114 = vsel %vm135, %v2112, 0
    %2116 = vmatprep.subr.mxu0 %v1728
    %2117 = vmatpush1.msra.mxu0 %v1727
    %2118 = vmatprep.subr.mxu0 %v1731
    %2119 = vmatpush1.msra.mxu0 %v1730
    %2120 = vmatprep.subr.mxu0 %v1734
    %2121 = vmatpush1.msra.mxu0 %v1733
    %2122 = vmatprep.subr.mxu0 %v1737
    %2123 = vmatpush1.msra.mxu0 %v1736
    %2124 = vmatprep.subr.mxu0 0.0
    %2125 = vmatpush1.msra.mxu0 0.0
    %2126 = vmatprep.subr.mxu0 0.0
    %2127 = vmatpush1.msra.mxu0 0.0
    %2128 = vmatprep.subr.mxu0 0.0
    %2129 = vmatpush1.msra.mxu0 0.0
    %2130 = vmatprep.subr.mxu0 0.0
    %2131 = vmatpush1.msra.mxu0 0.0
    %2132 = vmatprep.subr.mxu0 0.0
    %2133 = vmatpush1.msra.mxu0 0.0
    %2134 = vmatprep.subr.mxu0 0.0
    %2135 = vmatpush1.msra.mxu0 0.0
    %2136 = vmatprep.subr.mxu0 0.0
    %2137 = vmatpush1.msra.mxu0 0.0
    %2138 = vmatprep.subr.mxu0 0.0
    %2139 = vmatpush1.msra.mxu0 0.0
    %2140 = vmatprep.subr.mxu0 0.0
    %2141 = vmatpush1.msra.mxu0 0.0
    %2142 = vmatprep.subr.mxu0 0.0
    %2143 = vmatpush1.msra.mxu0 0.0
    %2144 = vmatprep.subr.mxu0 0.0
    %2145 = vmatpush1.msra.mxu0 0.0
    %2146 = vmatprep.subr.mxu0 0.0
    %2147 = vmatpush1.msra.mxu0 0.0
    %2148 = vmatprep.subr.mxu0 0.0
    %2149 = vmatpush1.msra.mxu0 0.0
    %2150 = vmatprep.subr.mxu0 0.0
    %2151 = vmatpush1.msra.mxu0 0.0
    %2152 = vmatprep.subr.mxu0 0.0
    %2153 = vmatpush1.msra.mxu0 0.0
    %2154 = vmatprep.subr.mxu0 0.0
    %2155 = vmatpush1.msra.mxu0 0.0
    %2156 = vmatprep.subr.mxu0 0.0
    %2157 = vmatpush1.msra.mxu0 0.0
    %2158 = vmatprep.subr.mxu0 0.0
    %2159 = vmatpush1.msra.mxu0 0.0
    %2160 = vmatprep.subr.mxu0 0.0
    %2161 = vmatpush1.msra.mxu0 0.0
    %2162 = vmatprep.subr.mxu0 0.0
    %2163 = vmatpush1.msra.mxu0 0.0
    %2164 = vmatprep.subr.mxu0 0.0
    %2165 = vmatpush1.msra.mxu0 0.0
    %2166 = vmatprep.subr.mxu0 0.0
    %2167 = vmatpush1.msra.mxu0 0.0
    %2168 = vmatprep.subr.mxu0 0.0
    %2169 = vmatpush1.msra.mxu0 0.0
    %2170 = vmatprep.subr.mxu0 0.0
    %2171 = vmatpush1.msra.mxu0 0.0
    %2172 = vmatprep.subr.mxu0 0.0
    %2173 = vmatpush1.msra.mxu0 0.0
    %2174 = vmatprep.subr.mxu0 0.0
    %2175 = vmatpush1.msra.mxu0 0.0
    %2176 = vmatprep.subr.mxu0 0.0
    %2177 = vmatpush1.msra.mxu0 0.0
    %2178 = vmatprep.subr.mxu0 0.0
    %2179 = vmatpush1.msra.mxu0 0.0
    %2180 = vmatprep.mubr.f32.mxu0 0.0
    %2181 = vmatmul.mubr.f32.gmra.mrb[0].mxu0 %v2114
    %v2182 = vpop.f32.mrb[0].mxu0
    %v2183 = vadd.f32 %v1757, %v2182
    %v2184 = vpop.f32.mrb[0].mxu0
    %v2185 = vadd.f32 %v1761, %v2184
    %2186 = vdwg.mxu0
    %2187 = vmatprep.subr.mxu0 0.0
    %2188 = vmatpush1.msra.mxu0 %v1729
    %2189 = vmatprep.subr.mxu0 0.0
    %2190 = vmatpush1.msra.mxu0 %v1732
    %2191 = vmatprep.subr.mxu0 0.0
    %2192 = vmatpush1.msra.mxu0 %v1735
    %2193 = vmatprep.subr.mxu0 0.0
    %2194 = vmatpush1.msra.mxu0 %v1738
    %2195 = vmatprep.subr.mxu0 0.0
    %2196 = vmatpush1.msra.mxu0 0.0
    %2197 = vmatprep.subr.mxu0 0.0
    %2198 = vmatpush1.msra.mxu0 0.0
    %2199 = vmatprep.subr.mxu0 0.0
    %2200 = vmatpush1.msra.mxu0 0.0
    %2201 = vmatprep.subr.mxu0 0.0
    %2202 = vmatpush1.msra.mxu0 0.0
    %2203 = vmatprep.subr.mxu0 0.0
    %2204 = vmatpush1.msra.mxu0 0.0
    %2205 = vmatprep.subr.mxu0 0.0
    %2206 = vmatpush1.msra.mxu0 0.0
    %2207 = vmatprep.subr.mxu0 0.0
    %2208 = vmatpush1.msra.mxu0 0.0
    %2209 = vmatprep.subr.mxu0 0.0
    %2210 = vmatpush1.msra.mxu0 0.0
    %2211 = vmatprep.subr.mxu0 0.0
    %2212 = vmatpush1.msra.mxu0 0.0
    %2213 = vmatprep.subr.mxu0 0.0
    %2214 = vmatpush1.msra.mxu0 0.0
    %2215 = vmatprep.subr.mxu0 0.0
    %2216 = vmatpush1.msra.mxu0 0.0
    %2217 = vmatprep.subr.mxu0 0.0
    %2218 = vmatpush1.msra.mxu0 0.0
    %2219 = vmatprep.subr.mxu0 0.0
    %2220 = vmatpush1.msra.mxu0 0.0
    %2221 = vmatprep.subr.mxu0 0.0
    %2222 = vmatpush1.msra.mxu0 0.0
    %2223 = vmatprep.subr.mxu0 0.0
    %2224 = vmatpush1.msra.mxu0 0.0
    %2225 = vmatprep.subr.mxu0 0.0
    %2226 = vmatpush1.msra.mxu0 0.0
    %2227 = vmatprep.subr.mxu0 0.0
    %2228 = vmatpush1.msra.mxu0 0.0
    %2229 = vmatprep.subr.mxu0 0.0
    %2230 = vmatpush1.msra.mxu0 0.0
    %2231 = vmatprep.subr.mxu0 0.0
    %2232 = vmatpush1.msra.mxu0 0.0
    %2233 = vmatprep.subr.mxu0 0.0
    %2234 = vmatpush1.msra.mxu0 0.0
    %2235 = vmatprep.subr.mxu0 0.0
    %2236 = vmatpush1.msra.mxu0 0.0
    %2237 = vmatprep.subr.mxu0 0.0
    %2238 = vmatpush1.msra.mxu0 0.0
    %2239 = vmatprep.subr.mxu0 0.0
    %2240 = vmatpush1.msra.mxu0 0.0
    %2241 = vmatprep.subr.mxu0 0.0
    %2242 = vmatpush1.msra.mxu0 0.0
    %2243 = vmatprep.subr.mxu0 0.0
    %2244 = vmatpush1.msra.mxu0 0.0
    %2245 = vmatprep.subr.mxu0 0.0
    %2246 = vmatpush1.msra.mxu0 0.0
    %2247 = vmatprep.subr.mxu0 0.0
    %2248 = vmatpush1.msra.mxu0 0.0
    %2249 = vmatprep.subr.mxu0 0.0
    %2250 = vmatpush1.msra.mxu0 0.0
    %2251 = vmatprep.mubr.f32.mxu0 0.0
    %2252 = vmatmul.mubr.f32.gmra.mrb[0].mxu0 %v2114
    %v2253 = vpop.f32.mrb[0].mxu0
    %v2254 = vadd.f32 %v1765, %v2253
    %v2255 = vpop.f32.mrb[0].mxu0
    %2256 = vdwg.mxu0
    %v2259 = vrot.slane %v2183, 7
    %v2260 = vrot.slane %v2185, 7
    %v2263 = vadd.f32 %v1480, %v2259
    %v2264 = vadd.f32 %v1482, %v2260
    %v2265 = vxor.u32 %v2263, 2147483648
    %v2266 = vxor.u32 %v2264, 2147483648
    %v2267 = vmul.f32 %v2265, 1.442695
    %v2268 = vpow.pop %v2267
    %v2269 = vmul.f32 %v2266, 1.442695
    %v2270 = vpow.pop %v2269
    %v2271 = vadd.f32 %v2268, 1.0
    %v2272 = vadd.f32 %v2270, 1.0
    %v2273 = vrcp.pop %v2271
    %v2274 = vmul.f32 1.0, %v2273
    %v2275 = vrcp.pop %v2272
    %v2276 = vmul.f32 1.0, %v2275
    %v2278 = vrot.slane %v2254, 7
    %v2280 = vmul.f32 %v2274, %v2278
    %v2281 = vadd.f32 %v1551, %v2280
    %v2282 = vtanh.pop %v2281
    %v2284 = vrot.slane %v2282, 1
    %v2286 = vsub.f32 %v2112, %v2284
    %v2288 = vrot.slane %v2286, 7
    %v2290 = vmul.f32 %v2276, %v2288
    %v2291 = vadd.f32 %v2282, %v2290
    %v2293 = vrot.slane %v2291, 1
    %v2294 = vsel %vm135, %v2293, 0
    %2296 = vmatprep.subr.mxu0 %v1740
    %2297 = vmatpush1.msra.mxu0 %v1739
    %2298 = vmatprep.subr.mxu0 %v1743
    %2299 = vmatpush1.msra.mxu0 %v1742
    %2300 = vmatprep.subr.mxu0 %v1746
    %2301 = vmatpush1.msra.mxu0 %v1745
    %2302 = vmatprep.subr.mxu0 %v1749
    %2303 = vmatpush1.msra.mxu0 %v1748
    %2304 = vmatprep.subr.mxu0 0.0
    %2305 = vmatpush1.msra.mxu0 0.0
    %2306 = vmatprep.subr.mxu0 0.0
    %2307 = vmatpush1.msra.mxu0 0.0
    %2308 = vmatprep.subr.mxu0 0.0
    %2309 = vmatpush1.msra.mxu0 0.0
    %2310 = vmatprep.subr.mxu0 0.0
    %2311 = vmatpush1.msra.mxu0 0.0
    %2312 = vmatprep.subr.mxu0 0.0
    %2313 = vmatpush1.msra.mxu0 0.0
    %2314 = vmatprep.subr.mxu0 0.0
    %2315 = vmatpush1.msra.mxu0 0.0
    %2316 = vmatprep.subr.mxu0 0.0
    %2317 = vmatpush1.msra.mxu0 0.0
    %2318 = vmatprep.subr.mxu0 0.0
    %2319 = vmatpush1.msra.mxu0 0.0
    %2320 = vmatprep.subr.mxu0 0.0
    %2321 = vmatpush1.msra.mxu0 0.0
    %2322 = vmatprep.subr.mxu0 0.0
    %2323 = vmatpush1.msra.mxu0 0.0
    %2324 = vmatprep.subr.mxu0 0.0
    %2325 = vmatpush1.msra.mxu0 0.0
    %2326 = vmatprep.subr.mxu0 0.0
    %2327 = vmatpush1.msra.mxu0 0.0
    %2328 = vmatprep.subr.mxu0 0.0
    %2329 = vmatpush1.msra.mxu0 0.0
    %2330 = vmatprep.subr.mxu0 0.0
    %2331 = vmatpush1.msra.mxu0 0.0
    %2332 = vmatprep.subr.mxu0 0.0
    %2333 = vmatpush1.msra.mxu0 0.0
    %2334 = vmatprep.subr.mxu0 0.0
    %2335 = vmatpush1.msra.mxu0 0.0
    %2336 = vmatprep.subr.mxu0 0.0
    %2337 = vmatpush1.msra.mxu0 0.0
    %2338 = vmatprep.subr.mxu0 0.0
    %2339 = vmatpush1.msra.mxu0 0.0
    %2340 = vmatprep.subr.mxu0 0.0
    %2341 = vmatpush1.msra.mxu0 0.0
    %2342 = vmatprep.subr.mxu0 0.0
    %2343 = vmatpush1.msra.mxu0 0.0
    %2344 = vmatprep.subr.mxu0 0.0
    %2345 = vmatpush1.msra.mxu0 0.0
    %2346 = vmatprep.subr.mxu0 0.0
    %2347 = vmatpush1.msra.mxu0 0.0
    %2348 = vmatprep.subr.mxu0 0.0
    %2349 = vmatpush1.msra.mxu0 0.0
    %2350 = vmatprep.subr.mxu0 0.0
    %2351 = vmatpush1.msra.mxu0 0.0
    %2352 = vmatprep.subr.mxu0 0.0
    %2353 = vmatpush1.msra.mxu0 0.0
    %2354 = vmatprep.subr.mxu0 0.0
    %2355 = vmatpush1.msra.mxu0 0.0
    %2356 = vmatprep.subr.mxu0 0.0
    %2357 = vmatpush1.msra.mxu0 0.0
    %2358 = vmatprep.subr.mxu0 0.0
    %2359 = vmatpush1.msra.mxu0 0.0
    %2360 = vmatprep.mubr.f32.mxu0 0.0
    %2361 = vmatmul.mubr.f32.gmra.mrb[0].mxu0 %v2294
    %v2362 = vpop.f32.mrb[0].mxu0
    %v2363 = vadd.f32 %v1937, %v2362
    %v2364 = vpop.f32.mrb[0].mxu0
    %v2365 = vadd.f32 %v1941, %v2364
    %2366 = vdwg.mxu0
    %2367 = vmatprep.subr.mxu0 0.0
    %2368 = vmatpush1.msra.mxu0 %v1741
    %2369 = vmatprep.subr.mxu0 0.0
    %2370 = vmatpush1.msra.mxu0 %v1744
    %2371 = vmatprep.subr.mxu0 0.0
    %2372 = vmatpush1.msra.mxu0 %v1747
    %2373 = vmatprep.subr.mxu0 0.0
    %2374 = vmatpush1.msra.mxu0 %v1750
    %2375 = vmatprep.subr.mxu0 0.0
    %2376 = vmatpush1.msra.mxu0 0.0
    %2377 = vmatprep.subr.mxu0 0.0
    %2378 = vmatpush1.msra.mxu0 0.0
    %2379 = vmatprep.subr.mxu0 0.0
    %2380 = vmatpush1.msra.mxu0 0.0
    %2381 = vmatprep.subr.mxu0 0.0
    %2382 = vmatpush1.msra.mxu0 0.0
    %2383 = vmatprep.subr.mxu0 0.0
    %2384 = vmatpush1.msra.mxu0 0.0
    %2385 = vmatprep.subr.mxu0 0.0
    %2386 = vmatpush1.msra.mxu0 0.0
    %2387 = vmatprep.subr.mxu0 0.0
    %2388 = vmatpush1.msra.mxu0 0.0
    %2389 = vmatprep.subr.mxu0 0.0
    %2390 = vmatpush1.msra.mxu0 0.0
    %2391 = vmatprep.subr.mxu0 0.0
    %2392 = vmatpush1.msra.mxu0 0.0
    %2393 = vmatprep.subr.mxu0 0.0
    %2394 = vmatpush1.msra.mxu0 0.0
    %2395 = vmatprep.subr.mxu0 0.0
    %2396 = vmatpush1.msra.mxu0 0.0
    %2397 = vmatprep.subr.mxu0 0.0
    %2398 = vmatpush1.msra.mxu0 0.0
    %2399 = vmatprep.subr.mxu0 0.0
    %2400 = vmatpush1.msra.mxu0 0.0
    %2401 = vmatprep.subr.mxu0 0.0
    %2402 = vmatpush1.msra.mxu0 0.0
    %2403 = vmatprep.subr.mxu0 0.0
    %2404 = vmatpush1.msra.mxu0 0.0
    %2405 = vmatprep.subr.mxu0 0.0
    %2406 = vmatpush1.msra.mxu0 0.0
    %2407 = vmatprep.subr.mxu0 0.0
    %2408 = vmatpush1.msra.mxu0 0.0
    %2409 = vmatprep.subr.mxu0 0.0
    %2410 = vmatpush1.msra.mxu0 0.0
    %2411 = vmatprep.subr.mxu0 0.0
    %2412 = vmatpush1.msra.mxu0 0.0
    %2413 = vmatprep.subr.mxu0 0.0
    %2414 = vmatpush1.msra.mxu0 0.0
    %2415 = vmatprep.subr.mxu0 0.0
    %2416 = vmatpush1.msra.mxu0 0.0
    %2417 = vmatprep.subr.mxu0 0.0
    %2418 = vmatpush1.msra.mxu0 0.0
    %2419 = vmatprep.subr.mxu0 0.0
    %2420 = vmatpush1.msra.mxu0 0.0
    %2421 = vmatprep.subr.mxu0 0.0
    %2422 = vmatpush1.msra.mxu0 0.0
    %2423 = vmatprep.subr.mxu0 0.0
    %2424 = vmatpush1.msra.mxu0 0.0
    %2425 = vmatprep.subr.mxu0 0.0
    %2426 = vmatpush1.msra.mxu0 0.0
    %2427 = vmatprep.subr.mxu0 0.0
    %2428 = vmatpush1.msra.mxu0 0.0
    %2429 = vmatprep.subr.mxu0 0.0
    %2430 = vmatpush1.msra.mxu0 0.0
    %2431 = vmatprep.mubr.f32.mxu0 0.0
    %2432 = vmatmul.mubr.f32.gmra.mrb[0].mxu0 %v2294
    %v2433 = vpop.f32.mrb[0].mxu0
    %v2434 = vadd.f32 %v1945, %v2433
    %v2435 = vpop.f32.mrb[0].mxu0
    %2436 = vdwg.mxu0
    %v2439 = vrot.slane %v2363, 7
    %v2440 = vrot.slane %v2365, 7
    %v2443 = vadd.f32 %v1653, %v2439
    %v2444 = vadd.f32 %v1655, %v2440
    %v2445 = vxor.u32 %v2443, 2147483648
    %v2446 = vxor.u32 %v2444, 2147483648
    %v2447 = vmul.f32 %v2445, 1.442695
    %v2448 = vpow.pop %v2447
    %v2449 = vmul.f32 %v2446, 1.442695
    %v2450 = vpow.pop %v2449
    %v2451 = vadd.f32 %v2448, 1.0
    %v2452 = vadd.f32 %v2450, 1.0
    %v2453 = vrcp.pop %v2451
    %v2454 = vmul.f32 1.0, %v2453
    %v2455 = vrcp.pop %v2452
    %v2456 = vmul.f32 1.0, %v2455
    %v2458 = vrot.slane %v2434, 7
    %v2460 = vmul.f32 %v2454, %v2458
    %v2461 = vadd.f32 %v1724, %v2460
    %v2462 = vtanh.pop %v2461
    %v2463 = vsub.f32 %v2291, %v2462
    %v2464 = vmul.f32 %v2456, %v2463
    %v2465 = vadd.f32 %v2462, %v2464
    %v2467 = vrot.slane %v2465, 1
    %v2468 = vsel %vm135, %v2467, 0
    %2470 = vmatprep.subr.mxu0 %v1728
    %2471 = vmatpush1.msra.mxu0 %v1727
    %2472 = vmatprep.subr.mxu0 %v1731
    %2473 = vmatpush1.msra.mxu0 %v1730
    %2474 = vmatprep.subr.mxu0 %v1734
    %2475 = vmatpush1.msra.mxu0 %v1733
    %2476 = vmatprep.subr.mxu0 %v1737
    %2477 = vmatpush1.msra.mxu0 %v1736
    %2478 = vmatprep.subr.mxu0 0.0
    %2479 = vmatpush1.msra.mxu0 0.0
    %2480 = vmatprep.subr.mxu0 0.0
    %2481 = vmatpush1.msra.mxu0 0.0
    %2482 = vmatprep.subr.mxu0 0.0
    %2483 = vmatpush1.msra.mxu0 0.0
    %2484 = vmatprep.subr.mxu0 0.0
    %2485 = vmatpush1.msra.mxu0 0.0
    %2486 = vmatprep.subr.mxu0 0.0
    %2487 = vmatpush1.msra.mxu0 0.0
    %2488 = vmatprep.subr.mxu0 0.0
    %2489 = vmatpush1.msra.mxu0 0.0
    %2490 = vmatprep.subr.mxu0 0.0
    %2491 = vmatpush1.msra.mxu0 0.0
    %2492 = vmatprep.subr.mxu0 0.0
    %2493 = vmatpush1.msra.mxu0 0.0
    %2494 = vmatprep.subr.mxu0 0.0
    %2495 = vmatpush1.msra.mxu0 0.0
    %2496 = vmatprep.subr.mxu0 0.0
    %2497 = vmatpush1.msra.mxu0 0.0
    %2498 = vmatprep.subr.mxu0 0.0
    %2499 = vmatpush1.msra.mxu0 0.0
    %2500 = vmatprep.subr.mxu0 0.0
    %2501 = vmatpush1.msra.mxu0 0.0
    %2502 = vmatprep.subr.mxu0 0.0
    %2503 = vmatpush1.msra.mxu0 0.0
    %2504 = vmatprep.subr.mxu0 0.0
    %2505 = vmatpush1.msra.mxu0 0.0
    %2506 = vmatprep.subr.mxu0 0.0
    %2507 = vmatpush1.msra.mxu0 0.0
    %2508 = vmatprep.subr.mxu0 0.0
    %2509 = vmatpush1.msra.mxu0 0.0
    %2510 = vmatprep.subr.mxu0 0.0
    %2511 = vmatpush1.msra.mxu0 0.0
    %2512 = vmatprep.subr.mxu0 0.0
    %2513 = vmatpush1.msra.mxu0 0.0
    %2514 = vmatprep.subr.mxu0 0.0
    %2515 = vmatpush1.msra.mxu0 0.0
    %2516 = vmatprep.subr.mxu0 0.0
    %2517 = vmatpush1.msra.mxu0 0.0
    %2518 = vmatprep.subr.mxu0 0.0
    %2519 = vmatpush1.msra.mxu0 0.0
    %2520 = vmatprep.subr.mxu0 0.0
    %2521 = vmatpush1.msra.mxu0 0.0
    %2522 = vmatprep.subr.mxu0 0.0
    %2523 = vmatpush1.msra.mxu0 0.0
    %2524 = vmatprep.subr.mxu0 0.0
    %2525 = vmatpush1.msra.mxu0 0.0
    %2526 = vmatprep.subr.mxu0 0.0
    %2527 = vmatpush1.msra.mxu0 0.0
    %2528 = vmatprep.subr.mxu0 0.0
    %2529 = vmatpush1.msra.mxu0 0.0
    %2530 = vmatprep.subr.mxu0 0.0
    %2531 = vmatpush1.msra.mxu0 0.0
    %2532 = vmatprep.subr.mxu0 0.0
    %2533 = vmatpush1.msra.mxu0 0.0
    %2534 = vmatprep.mubr.f32.mxu0 0.0
    %2535 = vmatmul.mubr.f32.gmra.mrb[0].mxu0 %v2468
    %v2536 = vpop.f32.mrb[0].mxu0
    %v2537 = vadd.f32 %v1757, %v2536
    %v2538 = vpop.f32.mrb[0].mxu0
    %v2539 = vadd.f32 %v1761, %v2538
    %2540 = vdwg.mxu0
    %2541 = vmatprep.subr.mxu0 0.0
    %2542 = vmatpush1.msra.mxu0 %v1729
    %2543 = vmatprep.subr.mxu0 0.0
    %2544 = vmatpush1.msra.mxu0 %v1732
    %2545 = vmatprep.subr.mxu0 0.0
    %2546 = vmatpush1.msra.mxu0 %v1735
    %2547 = vmatprep.subr.mxu0 0.0
    %2548 = vmatpush1.msra.mxu0 %v1738
    %2549 = vmatprep.subr.mxu0 0.0
    %2550 = vmatpush1.msra.mxu0 0.0
    %2551 = vmatprep.subr.mxu0 0.0
    %2552 = vmatpush1.msra.mxu0 0.0
    %2553 = vmatprep.subr.mxu0 0.0
    %2554 = vmatpush1.msra.mxu0 0.0
    %2555 = vmatprep.subr.mxu0 0.0
    %2556 = vmatpush1.msra.mxu0 0.0
    %2557 = vmatprep.subr.mxu0 0.0
    %2558 = vmatpush1.msra.mxu0 0.0
    %2559 = vmatprep.subr.mxu0 0.0
    %2560 = vmatpush1.msra.mxu0 0.0
    %2561 = vmatprep.subr.mxu0 0.0
    %2562 = vmatpush1.msra.mxu0 0.0
    %2563 = vmatprep.subr.mxu0 0.0
    %2564 = vmatpush1.msra.mxu0 0.0
    %2565 = vmatprep.subr.mxu0 0.0
    %2566 = vmatpush1.msra.mxu0 0.0
    %2567 = vmatprep.subr.mxu0 0.0
    %2568 = vmatpush1.msra.mxu0 0.0
    %2569 = vmatprep.subr.mxu0 0.0
    %2570 = vmatpush1.msra.mxu0 0.0
    %2571 = vmatprep.subr.mxu0 0.0
    %2572 = vmatpush1.msra.mxu0 0.0
    %2573 = vmatprep.subr.mxu0 0.0
    %2574 = vmatpush1.msra.mxu0 0.0
    %2575 = vmatprep.subr.mxu0 0.0
    %2576 = vmatpush1.msra.mxu0 0.0
    %2577 = vmatprep.subr.mxu0 0.0
    %2578 = vmatpush1.msra.mxu0 0.0
    %2579 = vmatprep.subr.mxu0 0.0
    %2580 = vmatpush1.msra.mxu0 0.0
    %2581 = vmatprep.subr.mxu0 0.0
    %2582 = vmatpush1.msra.mxu0 0.0
    %2583 = vmatprep.subr.mxu0 0.0
    %2584 = vmatpush1.msra.mxu0 0.0
    %2585 = vmatprep.subr.mxu0 0.0
    %2586 = vmatpush1.msra.mxu0 0.0
    %2587 = vmatprep.subr.mxu0 0.0
    %2588 = vmatpush1.msra.mxu0 0.0
    %2589 = vmatprep.subr.mxu0 0.0
    %2590 = vmatpush1.msra.mxu0 0.0
    %2591 = vmatprep.subr.mxu0 0.0
    %2592 = vmatpush1.msra.mxu0 0.0
    %2593 = vmatprep.subr.mxu0 0.0
    %2594 = vmatpush1.msra.mxu0 0.0
    %2595 = vmatprep.subr.mxu0 0.0
    %2596 = vmatpush1.msra.mxu0 0.0
    %2597 = vmatprep.subr.mxu0 0.0
    %2598 = vmatpush1.msra.mxu0 0.0
    %2599 = vmatprep.subr.mxu0 0.0
    %2600 = vmatpush1.msra.mxu0 0.0
    %2601 = vmatprep.subr.mxu0 0.0
    %2602 = vmatpush1.msra.mxu0 0.0
    %2603 = vmatprep.subr.mxu0 0.0
    %2604 = vmatpush1.msra.mxu0 0.0
    %2605 = vmatprep.mubr.f32.mxu0 0.0
    %2606 = vmatmul.mubr.f32.gmra.mrb[0].mxu0 %v2468
    %v2607 = vpop.f32.mrb[0].mxu0
    %v2608 = vadd.f32 %v1765, %v2607
    %v2609 = vpop.f32.mrb[0].mxu0
    %2610 = vdwg.mxu0
    %v2613 = vrot.slane %v2537, 6
    %v2614 = vrot.slane %v2539, 6
    %v2617 = vadd.f32 %v1480, %v2613
    %v2618 = vadd.f32 %v1482, %v2614
    %v2619 = vxor.u32 %v2617, 2147483648
    %v2620 = vxor.u32 %v2618, 2147483648
    %v2621 = vmul.f32 %v2619, 1.442695
    %v2622 = vpow.pop %v2621
    %v2623 = vmul.f32 %v2620, 1.442695
    %v2624 = vpow.pop %v2623
    %v2625 = vadd.f32 %v2622, 1.0
    %v2626 = vadd.f32 %v2624, 1.0
    %v2627 = vrcp.pop %v2625
    %v2628 = vmul.f32 1.0, %v2627
    %v2629 = vrcp.pop %v2626
    %v2630 = vmul.f32 1.0, %v2629
    %v2632 = vrot.slane %v2608, 6
    %v2634 = vmul.f32 %v2628, %v2632
    %v2635 = vadd.f32 %v1551, %v2634
    %v2636 = vtanh.pop %v2635
    %v2638 = vrot.slane %v2636, 1
    %v2640 = vsub.f32 %v2465, %v2638
    %v2642 = vrot.slane %v2640, 7
    %v2644 = vmul.f32 %v2630, %v2642
    %v2645 = vadd.f32 %v2636, %v2644
    %v2647 = vrot.slane %v2645, 2
    %v2648 = vsel %vm135, %v2647, 0
    %2650 = vmatprep.subr.mxu0 %v1740
    %2651 = vmatpush1.msra.mxu0 %v1739
    %2652 = vmatprep.subr.mxu0 %v1743
    %2653 = vmatpush1.msra.mxu0 %v1742
    %2654 = vmatprep.subr.mxu0 %v1746
    %2655 = vmatpush1.msra.mxu0 %v1745
    %2656 = vmatprep.subr.mxu0 %v1749
    %2657 = vmatpush1.msra.mxu0 %v1748
    %2658 = vmatprep.subr.mxu0 0.0
    %2659 = vmatpush1.msra.mxu0 0.0
    %2660 = vmatprep.subr.mxu0 0.0
    %2661 = vmatpush1.msra.mxu0 0.0
    %2662 = vmatprep.subr.mxu0 0.0
    %2663 = vmatpush1.msra.mxu0 0.0
    %2664 = vmatprep.subr.mxu0 0.0
    %2665 = vmatpush1.msra.mxu0 0.0
    %2666 = vmatprep.subr.mxu0 0.0
    %2667 = vmatpush1.msra.mxu0 0.0
    %2668 = vmatprep.subr.mxu0 0.0
    %2669 = vmatpush1.msra.mxu0 0.0
    %2670 = vmatprep.subr.mxu0 0.0
    %2671 = vmatpush1.msra.mxu0 0.0
    %2672 = vmatprep.subr.mxu0 0.0
    %2673 = vmatpush1.msra.mxu0 0.0
    %2674 = vmatprep.subr.mxu0 0.0
    %2675 = vmatpush1.msra.mxu0 0.0
    %2676 = vmatprep.subr.mxu0 0.0
    %2677 = vmatpush1.msra.mxu0 0.0
    %2678 = vmatprep.subr.mxu0 0.0
    %2679 = vmatpush1.msra.mxu0 0.0
    %2680 = vmatprep.subr.mxu0 0.0
    %2681 = vmatpush1.msra.mxu0 0.0
    %2682 = vmatprep.subr.mxu0 0.0
    %2683 = vmatpush1.msra.mxu0 0.0
    %2684 = vmatprep.subr.mxu0 0.0
    %2685 = vmatpush1.msra.mxu0 0.0
    %2686 = vmatprep.subr.mxu0 0.0
    %2687 = vmatpush1.msra.mxu0 0.0
    %2688 = vmatprep.subr.mxu0 0.0
    %2689 = vmatpush1.msra.mxu0 0.0
    %2690 = vmatprep.subr.mxu0 0.0
    %2691 = vmatpush1.msra.mxu0 0.0
    %2692 = vmatprep.subr.mxu0 0.0
    %2693 = vmatpush1.msra.mxu0 0.0
    %2694 = vmatprep.subr.mxu0 0.0
    %2695 = vmatpush1.msra.mxu0 0.0
    %2696 = vmatprep.subr.mxu0 0.0
    %2697 = vmatpush1.msra.mxu0 0.0
    %2698 = vmatprep.subr.mxu0 0.0
    %2699 = vmatpush1.msra.mxu0 0.0
    %2700 = vmatprep.subr.mxu0 0.0
    %2701 = vmatpush1.msra.mxu0 0.0
    %2702 = vmatprep.subr.mxu0 0.0
    %2703 = vmatpush1.msra.mxu0 0.0
    %2704 = vmatprep.subr.mxu0 0.0
    %2705 = vmatpush1.msra.mxu0 0.0
    %2706 = vmatprep.subr.mxu0 0.0
    %2707 = vmatpush1.msra.mxu0 0.0
    %2708 = vmatprep.subr.mxu0 0.0
    %2709 = vmatpush1.msra.mxu0 0.0
    %2710 = vmatprep.subr.mxu0 0.0
    %2711 = vmatpush1.msra.mxu0 0.0
    %2712 = vmatprep.subr.mxu0 0.0
    %2713 = vmatpush1.msra.mxu0 0.0
    %2714 = vmatprep.mubr.f32.mxu0 0.0
    %2715 = vmatmul.mubr.f32.gmra.mrb[0].mxu0 %v2648
    %v2716 = vpop.f32.mrb[0].mxu0
    %v2717 = vadd.f32 %v1937, %v2716
    %v2718 = vpop.f32.mrb[0].mxu0
    %v2719 = vadd.f32 %v1941, %v2718
    %2720 = vdwg.mxu0
    %2721 = vmatprep.subr.mxu0 0.0
    %2722 = vmatpush1.msra.mxu0 %v1741
    %2723 = vmatprep.subr.mxu0 0.0
    %2724 = vmatpush1.msra.mxu0 %v1744
    %2725 = vmatprep.subr.mxu0 0.0
    %2726 = vmatpush1.msra.mxu0 %v1747
    %2727 = vmatprep.subr.mxu0 0.0
    %2728 = vmatpush1.msra.mxu0 %v1750
    %2729 = vmatprep.subr.mxu0 0.0
    %2730 = vmatpush1.msra.mxu0 0.0
    %2731 = vmatprep.subr.mxu0 0.0
    %2732 = vmatpush1.msra.mxu0 0.0
    %2733 = vmatprep.subr.mxu0 0.0
    %2734 = vmatpush1.msra.mxu0 0.0
    %2735 = vmatprep.subr.mxu0 0.0
    %2736 = vmatpush1.msra.mxu0 0.0
    %2737 = vmatprep.subr.mxu0 0.0
    %2738 = vmatpush1.msra.mxu0 0.0
    %2739 = vmatprep.subr.mxu0 0.0
    %2740 = vmatpush1.msra.mxu0 0.0
    %2741 = vmatprep.subr.mxu0 0.0
    %2742 = vmatpush1.msra.mxu0 0.0
    %2743 = vmatprep.subr.mxu0 0.0
    %2744 = vmatpush1.msra.mxu0 0.0
    %2745 = vmatprep.subr.mxu0 0.0
    %2746 = vmatpush1.msra.mxu0 0.0
    %2747 = vmatprep.subr.mxu0 0.0
    %2748 = vmatpush1.msra.mxu0 0.0
    %2749 = vmatprep.subr.mxu0 0.0
    %2750 = vmatpush1.msra.mxu0 0.0
    %2751 = vmatprep.subr.mxu0 0.0
    %2752 = vmatpush1.msra.mxu0 0.0
    %2753 = vmatprep.subr.mxu0 0.0
    %2754 = vmatpush1.msra.mxu0 0.0
    %2755 = vmatprep.subr.mxu0 0.0
    %2756 = vmatpush1.msra.mxu0 0.0
    %2757 = vmatprep.subr.mxu0 0.0
    %2758 = vmatpush1.msra.mxu0 0.0
    %2759 = vmatprep.subr.mxu0 0.0
    %2760 = vmatpush1.msra.mxu0 0.0
    %2761 = vmatprep.subr.mxu0 0.0
    %2762 = vmatpush1.msra.mxu0 0.0
    %2763 = vmatprep.subr.mxu0 0.0
    %2764 = vmatpush1.msra.mxu0 0.0
    %2765 = vmatprep.subr.mxu0 0.0
    %2766 = vmatpush1.msra.mxu0 0.0
    %2767 = vmatprep.subr.mxu0 0.0
    %2768 = vmatpush1.msra.mxu0 0.0
    %2769 = vmatprep.subr.mxu0 0.0
    %2770 = vmatpush1.msra.mxu0 0.0
    %2771 = vmatprep.subr.mxu0 0.0
    %2772 = vmatpush1.msra.mxu0 0.0
    %2773 = vmatprep.subr.mxu0 0.0
    %2774 = vmatpush1.msra.mxu0 0.0
    %2775 = vmatprep.subr.mxu0 0.0
    %2776 = vmatpush1.msra.mxu0 0.0
    %2777 = vmatprep.subr.mxu0 0.0
    %2778 = vmatpush1.msra.mxu0 0.0
    %2779 = vmatprep.subr.mxu0 0.0
    %2780 = vmatpush1.msra.mxu0 0.0
    %2781 = vmatprep.subr.mxu0 0.0
    %2782 = vmatpush1.msra.mxu0 0.0
    %2783 = vmatprep.subr.mxu0 0.0
    %2784 = vmatpush1.msra.mxu0 0.0
    %2785 = vmatprep.mubr.f32.mxu0 0.0
    %2786 = vmatmul.mubr.f32.gmra.mrb[0].mxu0 %v2648
    %v2787 = vpop.f32.mrb[0].mxu0
    %v2788 = vadd.f32 %v1945, %v2787
    %v2789 = vpop.f32.mrb[0].mxu0
    %2790 = vdwg.mxu0
    %v2793 = vrot.slane %v2717, 6
    %v2794 = vrot.slane %v2719, 6
    %v2797 = vadd.f32 %v1653, %v2793
    %v2798 = vadd.f32 %v1655, %v2794
    %v2799 = vxor.u32 %v2797, 2147483648
    %v2800 = vxor.u32 %v2798, 2147483648
    %v2801 = vmul.f32 %v2799, 1.442695
    %v2802 = vpow.pop %v2801
    %v2803 = vmul.f32 %v2800, 1.442695
    %v2804 = vpow.pop %v2803
    %v2805 = vadd.f32 %v2802, 1.0
    %v2806 = vadd.f32 %v2804, 1.0
    %v2807 = vrcp.pop %v2805
    %v2808 = vmul.f32 1.0, %v2807
    %v2809 = vrcp.pop %v2806
    %v2810 = vmul.f32 1.0, %v2809
    %v2812 = vrot.slane %v2788, 6
    %v2814 = vmul.f32 %v2808, %v2812
    %v2815 = vadd.f32 %v1724, %v2814
    %v2816 = vtanh.pop %v2815
    %v2817 = vsub.f32 %v2645, %v2816
    %v2818 = vmul.f32 %v2810, %v2817
    %v2819 = vadd.f32 %v2816, %v2818
    %v2821 = vrot.slane %v2819, 2
    %v2822 = vsel %vm135, %v2821, 0
    %2824 = vmatprep.subr.mxu0 %v1728
    %2825 = vmatpush1.msra.mxu0 %v1727
    %2826 = vmatprep.subr.mxu0 %v1731
    %2827 = vmatpush1.msra.mxu0 %v1730
    %2828 = vmatprep.subr.mxu0 %v1734
    %2829 = vmatpush1.msra.mxu0 %v1733
    %2830 = vmatprep.subr.mxu0 %v1737
    %2831 = vmatpush1.msra.mxu0 %v1736
    %2832 = vmatprep.subr.mxu0 0.0
    %2833 = vmatpush1.msra.mxu0 0.0
    %2834 = vmatprep.subr.mxu0 0.0
    %2835 = vmatpush1.msra.mxu0 0.0
    %2836 = vmatprep.subr.mxu0 0.0
    %2837 = vmatpush1.msra.mxu0 0.0
    %2838 = vmatprep.subr.mxu0 0.0
    %2839 = vmatpush1.msra.mxu0 0.0
    %2840 = vmatprep.subr.mxu0 0.0
    %2841 = vmatpush1.msra.mxu0 0.0
    %2842 = vmatprep.subr.mxu0 0.0
    %2843 = vmatpush1.msra.mxu0 0.0
    %2844 = vmatprep.subr.mxu0 0.0
    %2845 = vmatpush1.msra.mxu0 0.0
    %2846 = vmatprep.subr.mxu0 0.0
    %2847 = vmatpush1.msra.mxu0 0.0
    %2848 = vmatprep.subr.mxu0 0.0
    %2849 = vmatpush1.msra.mxu0 0.0
    %2850 = vmatprep.subr.mxu0 0.0
    %2851 = vmatpush1.msra.mxu0 0.0
    %2852 = vmatprep.subr.mxu0 0.0
    %2853 = vmatpush1.msra.mxu0 0.0
    %2854 = vmatprep.subr.mxu0 0.0
    %2855 = vmatpush1.msra.mxu0 0.0
    %2856 = vmatprep.subr.mxu0 0.0
    %2857 = vmatpush1.msra.mxu0 0.0
    %2858 = vmatprep.subr.mxu0 0.0
    %2859 = vmatpush1.msra.mxu0 0.0
    %2860 = vmatprep.subr.mxu0 0.0
    %2861 = vmatpush1.msra.mxu0 0.0
    %2862 = vmatprep.subr.mxu0 0.0
    %2863 = vmatpush1.msra.mxu0 0.0
    %2864 = vmatprep.subr.mxu0 0.0
    %2865 = vmatpush1.msra.mxu0 0.0
    %2866 = vmatprep.subr.mxu0 0.0
    %2867 = vmatpush1.msra.mxu0 0.0
    %2868 = vmatprep.subr.mxu0 0.0
    %2869 = vmatpush1.msra.mxu0 0.0
    %2870 = vmatprep.subr.mxu0 0.0
    %2871 = vmatpush1.msra.mxu0 0.0
    %2872 = vmatprep.subr.mxu0 0.0
    %2873 = vmatpush1.msra.mxu0 0.0
    %2874 = vmatprep.subr.mxu0 0.0
    %2875 = vmatpush1.msra.mxu0 0.0
    %2876 = vmatprep.subr.mxu0 0.0
    %2877 = vmatpush1.msra.mxu0 0.0
    %2878 = vmatprep.subr.mxu0 0.0
    %2879 = vmatpush1.msra.mxu0 0.0
    %2880 = vmatprep.subr.mxu0 0.0
    %2881 = vmatpush1.msra.mxu0 0.0
    %2882 = vmatprep.subr.mxu0 0.0
    %2883 = vmatpush1.msra.mxu0 0.0
    %2884 = vmatprep.subr.mxu0 0.0
    %2885 = vmatpush1.msra.mxu0 0.0
    %2886 = vmatprep.subr.mxu0 0.0
    %2887 = vmatpush1.msra.mxu0 0.0
    %2888 = vmatprep.mubr.f32.mxu0 0.0
    %2889 = vmatmul.mubr.f32.gmra.mrb[0].mxu0 %v2822
    %v2890 = vpop.f32.mrb[0].mxu0
    %v2891 = vadd.f32 %v1757, %v2890
    %v2892 = vpop.f32.mrb[0].mxu0
    %v2893 = vadd.f32 %v1761, %v2892
    %2894 = vdwg.mxu0
    %2895 = vmatprep.subr.mxu0 0.0
    %2896 = vmatpush1.msra.mxu0 %v1729
    %2897 = vmatprep.subr.mxu0 0.0
    %2898 = vmatpush1.msra.mxu0 %v1732
    %2899 = vmatprep.subr.mxu0 0.0
    %2900 = vmatpush1.msra.mxu0 %v1735
    %2901 = vmatprep.subr.mxu0 0.0
    %2902 = vmatpush1.msra.mxu0 %v1738
    %2903 = vmatprep.subr.mxu0 0.0
    %2904 = vmatpush1.msra.mxu0 0.0
    %2905 = vmatprep.subr.mxu0 0.0
    %2906 = vmatpush1.msra.mxu0 0.0
    %2907 = vmatprep.subr.mxu0 0.0
    %2908 = vmatpush1.msra.mxu0 0.0
    %2909 = vmatprep.subr.mxu0 0.0
    %2910 = vmatpush1.msra.mxu0 0.0
    %2911 = vmatprep.subr.mxu0 0.0
    %2912 = vmatpush1.msra.mxu0 0.0
    %2913 = vmatprep.subr.mxu0 0.0
    %2914 = vmatpush1.msra.mxu0 0.0
    %2915 = vmatprep.subr.mxu0 0.0
    %2916 = vmatpush1.msra.mxu0 0.0
    %2917 = vmatprep.subr.mxu0 0.0
    %2918 = vmatpush1.msra.mxu0 0.0
    %2919 = vmatprep.subr.mxu0 0.0
    %2920 = vmatpush1.msra.mxu0 0.0
    %2921 = vmatprep.subr.mxu0 0.0
    %2922 = vmatpush1.msra.mxu0 0.0
    %2923 = vmatprep.subr.mxu0 0.0
    %2924 = vmatpush1.msra.mxu0 0.0
    %2925 = vmatprep.subr.mxu0 0.0
    %2926 = vmatpush1.msra.mxu0 0.0
    %2927 = vmatprep.subr.mxu0 0.0
    %2928 = vmatpush1.msra.mxu0 0.0
    %2929 = vmatprep.subr.mxu0 0.0
    %2930 = vmatpush1.msra.mxu0 0.0
    %2931 = vmatprep.subr.mxu0 0.0
    %2932 = vmatpush1.msra.mxu0 0.0
    %2933 = vmatprep.subr.mxu0 0.0
    %2934 = vmatpush1.msra.mxu0 0.0
    %2935 = vmatprep.subr.mxu0 0.0
    %2936 = vmatpush1.msra.mxu0 0.0
    %2937 = vmatprep.subr.mxu0 0.0
    %2938 = vmatpush1.msra.mxu0 0.0
    %2939 = vmatprep.subr.mxu0 0.0
    %2940 = vmatpush1.msra.mxu0 0.0
    %2941 = vmatprep.subr.mxu0 0.0
    %2942 = vmatpush1.msra.mxu0 0.0
    %2943 = vmatprep.subr.mxu0 0.0
    %2944 = vmatpush1.msra.mxu0 0.0
    %2945 = vmatprep.subr.mxu0 0.0
    %2946 = vmatpush1.msra.mxu0 0.0
    %2947 = vmatprep.subr.mxu0 0.0
    %2948 = vmatpush1.msra.mxu0 0.0
    %2949 = vmatprep.subr.mxu0 0.0
    %2950 = vmatpush1.msra.mxu0 0.0
    %2951 = vmatprep.subr.mxu0 0.0
    %2952 = vmatpush1.msra.mxu0 0.0
    %2953 = vmatprep.subr.mxu0 0.0
    %2954 = vmatpush1.msra.mxu0 0.0
    %2955 = vmatprep.subr.mxu0 0.0
    %2956 = vmatpush1.msra.mxu0 0.0
    %2957 = vmatprep.subr.mxu0 0.0
    %2958 = vmatpush1.msra.mxu0 0.0
    %2959 = vmatprep.mubr.f32.mxu0 0.0
    %2960 = vmatmul.mubr.f32.gmra.mrb[0].mxu0 %v2822
    %v2961 = vpop.f32.mrb[0].mxu0
    %v2962 = vadd.f32 %v1765, %v2961
    %v2963 = vpop.f32.mrb[0].mxu0
    %2964 = vdwg.mxu0
    %v2967 = vrot.slane %v2891, 5
    %v2968 = vrot.slane %v2893, 5
    %v2971 = vadd.f32 %v1480, %v2967
    %v2972 = vadd.f32 %v1482, %v2968
    %v2973 = vxor.u32 %v2971, 2147483648
    %v2974 = vxor.u32 %v2972, 2147483648
    %v2975 = vmul.f32 %v2973, 1.442695
    %v2976 = vpow.pop %v2975
    %v2977 = vmul.f32 %v2974, 1.442695
    %v2978 = vpow.pop %v2977
    %v2979 = vadd.f32 %v2976, 1.0
    %v2980 = vadd.f32 %v2978, 1.0
    %v2981 = vrcp.pop %v2979
    %v2982 = vmul.f32 1.0, %v2981
    %v2983 = vrcp.pop %v2980
    %v2984 = vmul.f32 1.0, %v2983
    %v2986 = vrot.slane %v2962, 5
    %v2988 = vmul.f32 %v2982, %v2986
    %v2989 = vadd.f32 %v1551, %v2988
    %v2990 = vtanh.pop %v2989
    %v2992 = vrot.slane %v2990, 1
    %v2994 = vsub.f32 %v2819, %v2992
    %v2996 = vrot.slane %v2994, 7
    %v2998 = vmul.f32 %v2984, %v2996
    %v2999 = vadd.f32 %v2990, %v2998
    %v3001 = vrot.slane %v2999, 3
    %v3002 = vsel %vm135, %v3001, 0
    %3004 = vmatprep.subr.mxu0 %v1740
    %3005 = vmatpush1.msra.mxu0 %v1739
    %3006 = vmatprep.subr.mxu0 %v1743
    %3007 = vmatpush1.msra.mxu0 %v1742
    %3008 = vmatprep.subr.mxu0 %v1746
    %3009 = vmatpush1.msra.mxu0 %v1745
    %3010 = vmatprep.subr.mxu0 %v1749
    %3011 = vmatpush1.msra.mxu0 %v1748
    %3012 = vmatprep.subr.mxu0 0.0
    %3013 = vmatpush1.msra.mxu0 0.0
    %3014 = vmatprep.subr.mxu0 0.0
    %3015 = vmatpush1.msra.mxu0 0.0
    %3016 = vmatprep.subr.mxu0 0.0
    %3017 = vmatpush1.msra.mxu0 0.0
    %3018 = vmatprep.subr.mxu0 0.0
    %3019 = vmatpush1.msra.mxu0 0.0
    %3020 = vmatprep.subr.mxu0 0.0
    %3021 = vmatpush1.msra.mxu0 0.0
    %3022 = vmatprep.subr.mxu0 0.0
    %3023 = vmatpush1.msra.mxu0 0.0
    %3024 = vmatprep.subr.mxu0 0.0
    %3025 = vmatpush1.msra.mxu0 0.0
    %3026 = vmatprep.subr.mxu0 0.0
    %3027 = vmatpush1.msra.mxu0 0.0
    %3028 = vmatprep.subr.mxu0 0.0
    %3029 = vmatpush1.msra.mxu0 0.0
    %3030 = vmatprep.subr.mxu0 0.0
    %3031 = vmatpush1.msra.mxu0 0.0
    %3032 = vmatprep.subr.mxu0 0.0
    %3033 = vmatpush1.msra.mxu0 0.0
    %3034 = vmatprep.subr.mxu0 0.0
    %3035 = vmatpush1.msra.mxu0 0.0
    %3036 = vmatprep.subr.mxu0 0.0
    %3037 = vmatpush1.msra.mxu0 0.0
    %3038 = vmatprep.subr.mxu0 0.0
    %3039 = vmatpush1.msra.mxu0 0.0
    %3040 = vmatprep.subr.mxu0 0.0
    %3041 = vmatpush1.msra.mxu0 0.0
    %3042 = vmatprep.subr.mxu0 0.0
    %3043 = vmatpush1.msra.mxu0 0.0
    %3044 = vmatprep.subr.mxu0 0.0
    %3045 = vmatpush1.msra.mxu0 0.0
    %3046 = vmatprep.subr.mxu0 0.0
    %3047 = vmatpush1.msra.mxu0 0.0
    %3048 = vmatprep.subr.mxu0 0.0
    %3049 = vmatpush1.msra.mxu0 0.0
    %3050 = vmatprep.subr.mxu0 0.0
    %3051 = vmatpush1.msra.mxu0 0.0
    %3052 = vmatprep.subr.mxu0 0.0
    %3053 = vmatpush1.msra.mxu0 0.0
    %3054 = vmatprep.subr.mxu0 0.0
    %3055 = vmatpush1.msra.mxu0 0.0
    %3056 = vmatprep.subr.mxu0 0.0
    %3057 = vmatpush1.msra.mxu0 0.0
    %3058 = vmatprep.subr.mxu0 0.0
    %3059 = vmatpush1.msra.mxu0 0.0
    %3060 = vmatprep.subr.mxu0 0.0
    %3061 = vmatpush1.msra.mxu0 0.0
    %3062 = vmatprep.subr.mxu0 0.0
    %3063 = vmatpush1.msra.mxu0 0.0
    %3064 = vmatprep.subr.mxu0 0.0
    %3065 = vmatpush1.msra.mxu0 0.0
    %3066 = vmatprep.subr.mxu0 0.0
    %3067 = vmatpush1.msra.mxu0 0.0
    %3068 = vmatprep.mubr.f32.mxu0 0.0
    %3069 = vmatmul.mubr.f32.gmra.mrb[0].mxu0 %v3002
    %v3070 = vpop.f32.mrb[0].mxu0
    %v3071 = vadd.f32 %v1937, %v3070
    %v3072 = vpop.f32.mrb[0].mxu0
    %v3073 = vadd.f32 %v1941, %v3072
    %3074 = vdwg.mxu0
    %3075 = vmatprep.subr.mxu0 0.0
    %3076 = vmatpush1.msra.mxu0 %v1741
    %3077 = vmatprep.subr.mxu0 0.0
    %3078 = vmatpush1.msra.mxu0 %v1744
    %3079 = vmatprep.subr.mxu0 0.0
    %3080 = vmatpush1.msra.mxu0 %v1747
    %3081 = vmatprep.subr.mxu0 0.0
    %3082 = vmatpush1.msra.mxu0 %v1750
    %3083 = vmatprep.subr.mxu0 0.0
    %3084 = vmatpush1.msra.mxu0 0.0
    %3085 = vmatprep.subr.mxu0 0.0
    %3086 = vmatpush1.msra.mxu0 0.0
    %3087 = vmatprep.subr.mxu0 0.0
    %3088 = vmatpush1.msra.mxu0 0.0
    %3089 = vmatprep.subr.mxu0 0.0
    %3090 = vmatpush1.msra.mxu0 0.0
    %3091 = vmatprep.subr.mxu0 0.0
    %3092 = vmatpush1.msra.mxu0 0.0
    %3093 = vmatprep.subr.mxu0 0.0
    %3094 = vmatpush1.msra.mxu0 0.0
    %3095 = vmatprep.subr.mxu0 0.0
    %3096 = vmatpush1.msra.mxu0 0.0
    %3097 = vmatprep.subr.mxu0 0.0
    %3098 = vmatpush1.msra.mxu0 0.0
    %3099 = vmatprep.subr.mxu0 0.0
    %3100 = vmatpush1.msra.mxu0 0.0
    %3101 = vmatprep.subr.mxu0 0.0
    %3102 = vmatpush1.msra.mxu0 0.0
    %3103 = vmatprep.subr.mxu0 0.0
    %3104 = vmatpush1.msra.mxu0 0.0
    %3105 = vmatprep.subr.mxu0 0.0
    %3106 = vmatpush1.msra.mxu0 0.0
    %3107 = vmatprep.subr.mxu0 0.0
    %3108 = vmatpush1.msra.mxu0 0.0
    %3109 = vmatprep.subr.mxu0 0.0
    %3110 = vmatpush1.msra.mxu0 0.0
    %3111 = vmatprep.subr.mxu0 0.0
    %3112 = vmatpush1.msra.mxu0 0.0
    %3113 = vmatprep.subr.mxu0 0.0
    %3114 = vmatpush1.msra.mxu0 0.0
    %3115 = vmatprep.subr.mxu0 0.0
    %3116 = vmatpush1.msra.mxu0 0.0
    %3117 = vmatprep.subr.mxu0 0.0
    %3118 = vmatpush1.msra.mxu0 0.0
    %3119 = vmatprep.subr.mxu0 0.0
    %3120 = vmatpush1.msra.mxu0 0.0
    %3121 = vmatprep.subr.mxu0 0.0
    %3122 = vmatpush1.msra.mxu0 0.0
    %3123 = vmatprep.subr.mxu0 0.0
    %3124 = vmatpush1.msra.mxu0 0.0
    %3125 = vmatprep.subr.mxu0 0.0
    %3126 = vmatpush1.msra.mxu0 0.0
    %3127 = vmatprep.subr.mxu0 0.0
    %3128 = vmatpush1.msra.mxu0 0.0
    %3129 = vmatprep.subr.mxu0 0.0
    %3130 = vmatpush1.msra.mxu0 0.0
    %3131 = vmatprep.subr.mxu0 0.0
    %3132 = vmatpush1.msra.mxu0 0.0
    %3133 = vmatprep.subr.mxu0 0.0
    %3134 = vmatpush1.msra.mxu0 0.0
    %3135 = vmatprep.subr.mxu0 0.0
    %3136 = vmatpush1.msra.mxu0 0.0
    %3137 = vmatprep.subr.mxu0 0.0
    %3138 = vmatpush1.msra.mxu0 0.0
    %3139 = vmatprep.mubr.f32.mxu0 0.0
    %3140 = vmatmul.mubr.f32.gmra.mrb[0].mxu0 %v3002
    %v3141 = vpop.f32.mrb[0].mxu0
    %v3142 = vadd.f32 %v1945, %v3141
    %v3143 = vpop.f32.mrb[0].mxu0
    %3144 = vdwg.mxu0
    %v3147 = vrot.slane %v3071, 5
    %v3148 = vrot.slane %v3073, 5
    %v3151 = vadd.f32 %v1653, %v3147
    %v3152 = vadd.f32 %v1655, %v3148
    %v3153 = vxor.u32 %v3151, 2147483648
    %v3154 = vxor.u32 %v3152, 2147483648
    %v3155 = vmul.f32 %v3153, 1.442695
    %v3156 = vpow.pop %v3155
    %v3157 = vmul.f32 %v3154, 1.442695
    %v3158 = vpow.pop %v3157
    %v3159 = vadd.f32 %v3156, 1.0
    %v3160 = vadd.f32 %v3158, 1.0
    %v3161 = vrcp.pop %v3159
    %v3162 = vmul.f32 1.0, %v3161
    %v3163 = vrcp.pop %v3160
    %v3164 = vmul.f32 1.0, %v3163
    %v3166 = vrot.slane %v3142, 5
    %v3168 = vmul.f32 %v3162, %v3166
    %v3169 = vadd.f32 %v1724, %v3168
    %v3170 = vtanh.pop %v3169
    %v3171 = vsub.f32 %v2999, %v3170
    %v3172 = vmul.f32 %v3164, %v3171
    %v3173 = vadd.f32 %v3170, %v3172
    %v3175 = vrot.slane %v3173, 3
    %v3176 = vsel %vm135, %v3175, 0
    %3178 = vmatprep.subr.mxu0 %v1728
    %3179 = vmatpush1.msra.mxu0 %v1727
    %3180 = vmatprep.subr.mxu0 %v1731
    %3181 = vmatpush1.msra.mxu0 %v1730
    %3182 = vmatprep.subr.mxu0 %v1734
    %3183 = vmatpush1.msra.mxu0 %v1733
    %3184 = vmatprep.subr.mxu0 %v1737
    %3185 = vmatpush1.msra.mxu0 %v1736
    %3186 = vmatprep.subr.mxu0 0.0
    %3187 = vmatpush1.msra.mxu0 0.0
    %3188 = vmatprep.subr.mxu0 0.0
    %3189 = vmatpush1.msra.mxu0 0.0
    %3190 = vmatprep.subr.mxu0 0.0
    %3191 = vmatpush1.msra.mxu0 0.0
    %3192 = vmatprep.subr.mxu0 0.0
    %3193 = vmatpush1.msra.mxu0 0.0
    %3194 = vmatprep.subr.mxu0 0.0
    %3195 = vmatpush1.msra.mxu0 0.0
    %3196 = vmatprep.subr.mxu0 0.0
    %3197 = vmatpush1.msra.mxu0 0.0
    %3198 = vmatprep.subr.mxu0 0.0
    %3199 = vmatpush1.msra.mxu0 0.0
    %3200 = vmatprep.subr.mxu0 0.0
    %3201 = vmatpush1.msra.mxu0 0.0
    %3202 = vmatprep.subr.mxu0 0.0
    %3203 = vmatpush1.msra.mxu0 0.0
    %3204 = vmatprep.subr.mxu0 0.0
    %3205 = vmatpush1.msra.mxu0 0.0
    %3206 = vmatprep.subr.mxu0 0.0
    %3207 = vmatpush1.msra.mxu0 0.0
    %3208 = vmatprep.subr.mxu0 0.0
    %3209 = vmatpush1.msra.mxu0 0.0
    %3210 = vmatprep.subr.mxu0 0.0
    %3211 = vmatpush1.msra.mxu0 0.0
    %3212 = vmatprep.subr.mxu0 0.0
    %3213 = vmatpush1.msra.mxu0 0.0
    %3214 = vmatprep.subr.mxu0 0.0
    %3215 = vmatpush1.msra.mxu0 0.0
    %3216 = vmatprep.subr.mxu0 0.0
    %3217 = vmatpush1.msra.mxu0 0.0
    %3218 = vmatprep.subr.mxu0 0.0
    %3219 = vmatpush1.msra.mxu0 0.0
    %3220 = vmatprep.subr.mxu0 0.0
    %3221 = vmatpush1.msra.mxu0 0.0
    %3222 = vmatprep.subr.mxu0 0.0
    %3223 = vmatpush1.msra.mxu0 0.0
    %3224 = vmatprep.subr.mxu0 0.0
    %3225 = vmatpush1.msra.mxu0 0.0
    %3226 = vmatprep.subr.mxu0 0.0
    %3227 = vmatpush1.msra.mxu0 0.0
    %3228 = vmatprep.subr.mxu0 0.0
    %3229 = vmatpush1.msra.mxu0 0.0
    %3230 = vmatprep.subr.mxu0 0.0
    %3231 = vmatpush1.msra.mxu0 0.0
    %3232 = vmatprep.subr.mxu0 0.0
    %3233 = vmatpush1.msra.mxu0 0.0
    %3234 = vmatprep.subr.mxu0 0.0
    %3235 = vmatpush1.msra.mxu0 0.0
    %3236 = vmatprep.subr.mxu0 0.0
    %3237 = vmatpush1.msra.mxu0 0.0
    %3238 = vmatprep.subr.mxu0 0.0
    %3239 = vmatpush1.msra.mxu0 0.0
    %3240 = vmatprep.subr.mxu0 0.0
    %3241 = vmatpush1.msra.mxu0 0.0
    %3242 = vmatprep.mubr.f32.mxu0 0.0
    %3243 = vmatmul.mubr.f32.gmra.mrb[0].mxu0 %v3176
    %v3244 = vpop.f32.mrb[0].mxu0
    %v3245 = vadd.f32 %v1757, %v3244
    %v3246 = vpop.f32.mrb[0].mxu0
    %v3247 = vadd.f32 %v1761, %v3246
    %3248 = vdwg.mxu0
    %3249 = vmatprep.subr.mxu0 0.0
    %3250 = vmatpush1.msra.mxu0 %v1729
    %3251 = vmatprep.subr.mxu0 0.0
    %3252 = vmatpush1.msra.mxu0 %v1732
    %3253 = vmatprep.subr.mxu0 0.0
    %3254 = vmatpush1.msra.mxu0 %v1735
    %3255 = vmatprep.subr.mxu0 0.0
    %3256 = vmatpush1.msra.mxu0 %v1738
    %3257 = vmatprep.subr.mxu0 0.0
    %3258 = vmatpush1.msra.mxu0 0.0
    %3259 = vmatprep.subr.mxu0 0.0
    %3260 = vmatpush1.msra.mxu0 0.0
    %3261 = vmatprep.subr.mxu0 0.0
    %3262 = vmatpush1.msra.mxu0 0.0
    %3263 = vmatprep.subr.mxu0 0.0
    %3264 = vmatpush1.msra.mxu0 0.0
    %3265 = vmatprep.subr.mxu0 0.0
    %3266 = vmatpush1.msra.mxu0 0.0
    %3267 = vmatprep.subr.mxu0 0.0
    %3268 = vmatpush1.msra.mxu0 0.0
    %3269 = vmatprep.subr.mxu0 0.0
    %3270 = vmatpush1.msra.mxu0 0.0
    %3271 = vmatprep.subr.mxu0 0.0
    %3272 = vmatpush1.msra.mxu0 0.0
    %3273 = vmatprep.subr.mxu0 0.0
    %3274 = vmatpush1.msra.mxu0 0.0
    %3275 = vmatprep.subr.mxu0 0.0
    %3276 = vmatpush1.msra.mxu0 0.0
    %3277 = vmatprep.subr.mxu0 0.0
    %3278 = vmatpush1.msra.mxu0 0.0
    %3279 = vmatprep.subr.mxu0 0.0
    %3280 = vmatpush1.msra.mxu0 0.0
    %3281 = vmatprep.subr.mxu0 0.0
    %3282 = vmatpush1.msra.mxu0 0.0
    %3283 = vmatprep.subr.mxu0 0.0
    %3284 = vmatpush1.msra.mxu0 0.0
    %3285 = vmatprep.subr.mxu0 0.0
    %3286 = vmatpush1.msra.mxu0 0.0
    %3287 = vmatprep.subr.mxu0 0.0
    %3288 = vmatpush1.msra.mxu0 0.0
    %3289 = vmatprep.subr.mxu0 0.0
    %3290 = vmatpush1.msra.mxu0 0.0
    %3291 = vmatprep.subr.mxu0 0.0
    %3292 = vmatpush1.msra.mxu0 0.0
    %3293 = vmatprep.subr.mxu0 0.0
    %3294 = vmatpush1.msra.mxu0 0.0
    %3295 = vmatprep.subr.mxu0 0.0
    %3296 = vmatpush1.msra.mxu0 0.0
    %3297 = vmatprep.subr.mxu0 0.0
    %3298 = vmatpush1.msra.mxu0 0.0
    %3299 = vmatprep.subr.mxu0 0.0
    %3300 = vmatpush1.msra.mxu0 0.0
    %3301 = vmatprep.subr.mxu0 0.0
    %3302 = vmatpush1.msra.mxu0 0.0
    %3303 = vmatprep.subr.mxu0 0.0
    %3304 = vmatpush1.msra.mxu0 0.0
    %3305 = vmatprep.subr.mxu0 0.0
    %3306 = vmatpush1.msra.mxu0 0.0
    %3307 = vmatprep.subr.mxu0 0.0
    %3308 = vmatpush1.msra.mxu0 0.0
    %3309 = vmatprep.subr.mxu0 0.0
    %3310 = vmatpush1.msra.mxu0 0.0
    %3311 = vmatprep.subr.mxu0 0.0
    %3312 = vmatpush1.msra.mxu0 0.0
    %3313 = vmatprep.mubr.f32.mxu0 0.0
    %3314 = vmatmul.mubr.f32.gmra.mrb[0].mxu0 %v3176
    %v3315 = vpop.f32.mrb[0].mxu0
    %v3316 = vadd.f32 %v1765, %v3315
    %v3317 = vpop.f32.mrb[0].mxu0
    %3318 = vdwg.mxu0
    %v3321 = vrot.slane %v3245, 4
    %v3322 = vrot.slane %v3247, 4
    %v3325 = vadd.f32 %v1480, %v3321
    %v3326 = vadd.f32 %v1482, %v3322
    %v3327 = vxor.u32 %v3325, 2147483648
    %v3328 = vxor.u32 %v3326, 2147483648
    %v3329 = vmul.f32 %v3327, 1.442695
    %v3330 = vpow.pop %v3329
    %v3331 = vmul.f32 %v3328, 1.442695
    %v3332 = vpow.pop %v3331
    %v3333 = vadd.f32 %v3330, 1.0
    %v3334 = vadd.f32 %v3332, 1.0
    %v3335 = vrcp.pop %v3333
    %v3336 = vmul.f32 1.0, %v3335
    %v3337 = vrcp.pop %v3334
    %v3338 = vmul.f32 1.0, %v3337
    %v3340 = vrot.slane %v3316, 4
    %v3342 = vmul.f32 %v3336, %v3340
    %v3343 = vadd.f32 %v1551, %v3342
    %v3344 = vtanh.pop %v3343
    %v3346 = vrot.slane %v3344, 1
    %v3348 = vsub.f32 %v3173, %v3346
    %v3350 = vrot.slane %v3348, 7
    %v3352 = vmul.f32 %v3338, %v3350
    %v3353 = vadd.f32 %v3344, %v3352
    %v3355 = vrot.slane %v3353, 4
    %v3356 = vsel %vm135, %v3355, 0
    %3358 = vmatprep.subr.mxu0 %v1740
    %3359 = vmatpush1.msra.mxu0 %v1739
    %3360 = vmatprep.subr.mxu0 %v1743
    %3361 = vmatpush1.msra.mxu0 %v1742
    %3362 = vmatprep.subr.mxu0 %v1746
    %3363 = vmatpush1.msra.mxu0 %v1745
    %3364 = vmatprep.subr.mxu0 %v1749
    %3365 = vmatpush1.msra.mxu0 %v1748
    %3366 = vmatprep.subr.mxu0 0.0
    %3367 = vmatpush1.msra.mxu0 0.0
    %3368 = vmatprep.subr.mxu0 0.0
    %3369 = vmatpush1.msra.mxu0 0.0
    %3370 = vmatprep.subr.mxu0 0.0
    %3371 = vmatpush1.msra.mxu0 0.0
    %3372 = vmatprep.subr.mxu0 0.0
    %3373 = vmatpush1.msra.mxu0 0.0
    %3374 = vmatprep.subr.mxu0 0.0
    %3375 = vmatpush1.msra.mxu0 0.0
    %3376 = vmatprep.subr.mxu0 0.0
    %3377 = vmatpush1.msra.mxu0 0.0
    %3378 = vmatprep.subr.mxu0 0.0
    %3379 = vmatpush1.msra.mxu0 0.0
    %3380 = vmatprep.subr.mxu0 0.0
    %3381 = vmatpush1.msra.mxu0 0.0
    %3382 = vmatprep.subr.mxu0 0.0
    %3383 = vmatpush1.msra.mxu0 0.0
    %3384 = vmatprep.subr.mxu0 0.0
    %3385 = vmatpush1.msra.mxu0 0.0
    %3386 = vmatprep.subr.mxu0 0.0
    %3387 = vmatpush1.msra.mxu0 0.0
    %3388 = vmatprep.subr.mxu0 0.0
    %3389 = vmatpush1.msra.mxu0 0.0
    %3390 = vmatprep.subr.mxu0 0.0
    %3391 = vmatpush1.msra.mxu0 0.0
    %3392 = vmatprep.subr.mxu0 0.0
    %3393 = vmatpush1.msra.mxu0 0.0
    %3394 = vmatprep.subr.mxu0 0.0
    %3395 = vmatpush1.msra.mxu0 0.0
    %3396 = vmatprep.subr.mxu0 0.0
    %3397 = vmatpush1.msra.mxu0 0.0
    %3398 = vmatprep.subr.mxu0 0.0
    %3399 = vmatpush1.msra.mxu0 0.0
    %3400 = vmatprep.subr.mxu0 0.0
    %3401 = vmatpush1.msra.mxu0 0.0
    %3402 = vmatprep.subr.mxu0 0.0
    %3403 = vmatpush1.msra.mxu0 0.0
    %3404 = vmatprep.subr.mxu0 0.0
    %3405 = vmatpush1.msra.mxu0 0.0
    %3406 = vmatprep.subr.mxu0 0.0
    %3407 = vmatpush1.msra.mxu0 0.0
    %3408 = vmatprep.subr.mxu0 0.0
    %3409 = vmatpush1.msra.mxu0 0.0
    %3410 = vmatprep.subr.mxu0 0.0
    %3411 = vmatpush1.msra.mxu0 0.0
    %3412 = vmatprep.subr.mxu0 0.0
    %3413 = vmatpush1.msra.mxu0 0.0
    %3414 = vmatprep.subr.mxu0 0.0
    %3415 = vmatpush1.msra.mxu0 0.0
    %3416 = vmatprep.subr.mxu0 0.0
    %3417 = vmatpush1.msra.mxu0 0.0
    %3418 = vmatprep.subr.mxu0 0.0
    %3419 = vmatpush1.msra.mxu0 0.0
    %3420 = vmatprep.subr.mxu0 0.0
    %3421 = vmatpush1.msra.mxu0 0.0
    %3422 = vmatprep.mubr.f32.mxu0 0.0
    %3423 = vmatmul.mubr.f32.gmra.mrb[0].mxu0 %v3356
    %v3424 = vpop.f32.mrb[0].mxu0
    %v3425 = vadd.f32 %v1937, %v3424
    %v3426 = vpop.f32.mrb[0].mxu0
    %v3427 = vadd.f32 %v1941, %v3426
    %3428 = vdwg.mxu0
    %3429 = vmatprep.subr.mxu0 0.0
    %3430 = vmatpush1.msra.mxu0 %v1741
    %3431 = vmatprep.subr.mxu0 0.0
    %3432 = vmatpush1.msra.mxu0 %v1744
    %3433 = vmatprep.subr.mxu0 0.0
    %3434 = vmatpush1.msra.mxu0 %v1747
    %3435 = vmatprep.subr.mxu0 0.0
    %3436 = vmatpush1.msra.mxu0 %v1750
    %3437 = vmatprep.subr.mxu0 0.0
    %3438 = vmatpush1.msra.mxu0 0.0
    %3439 = vmatprep.subr.mxu0 0.0
    %3440 = vmatpush1.msra.mxu0 0.0
    %3441 = vmatprep.subr.mxu0 0.0
    %3442 = vmatpush1.msra.mxu0 0.0
    %3443 = vmatprep.subr.mxu0 0.0
    %3444 = vmatpush1.msra.mxu0 0.0
    %3445 = vmatprep.subr.mxu0 0.0
    %3446 = vmatpush1.msra.mxu0 0.0
    %3447 = vmatprep.subr.mxu0 0.0
    %3448 = vmatpush1.msra.mxu0 0.0
    %3449 = vmatprep.subr.mxu0 0.0
    %3450 = vmatpush1.msra.mxu0 0.0
    %3451 = vmatprep.subr.mxu0 0.0
    %3452 = vmatpush1.msra.mxu0 0.0
    %3453 = vmatprep.subr.mxu0 0.0
    %3454 = vmatpush1.msra.mxu0 0.0
    %3455 = vmatprep.subr.mxu0 0.0
    %3456 = vmatpush1.msra.mxu0 0.0
    %3457 = vmatprep.subr.mxu0 0.0
    %3458 = vmatpush1.msra.mxu0 0.0
    %3459 = vmatprep.subr.mxu0 0.0
    %3460 = vmatpush1.msra.mxu0 0.0
    %3461 = vmatprep.subr.mxu0 0.0
    %3462 = vmatpush1.msra.mxu0 0.0
    %3463 = vmatprep.subr.mxu0 0.0
    %3464 = vmatpush1.msra.mxu0 0.0
    %3465 = vmatprep.subr.mxu0 0.0
    %3466 = vmatpush1.msra.mxu0 0.0
    %3467 = vmatprep.subr.mxu0 0.0
    %3468 = vmatpush1.msra.mxu0 0.0
    %3469 = vmatprep.subr.mxu0 0.0
    %3470 = vmatpush1.msra.mxu0 0.0
    %3471 = vmatprep.subr.mxu0 0.0
    %3472 = vmatpush1.msra.mxu0 0.0
    %3473 = vmatprep.subr.mxu0 0.0
    %3474 = vmatpush1.msra.mxu0 0.0
    %3475 = vmatprep.subr.mxu0 0.0
    %3476 = vmatpush1.msra.mxu0 0.0
    %3477 = vmatprep.subr.mxu0 0.0
    %3478 = vmatpush1.msra.mxu0 0.0
    %3479 = vmatprep.subr.mxu0 0.0
    %3480 = vmatpush1.msra.mxu0 0.0
    %3481 = vmatprep.subr.mxu0 0.0
    %3482 = vmatpush1.msra.mxu0 0.0
    %3483 = vmatprep.subr.mxu0 0.0
    %3484 = vmatpush1.msra.mxu0 0.0
    %3485 = vmatprep.subr.mxu0 0.0
    %3486 = vmatpush1.msra.mxu0 0.0
    %3487 = vmatprep.subr.mxu0 0.0
    %3488 = vmatpush1.msra.mxu0 0.0
    %3489 = vmatprep.subr.mxu0 0.0
    %3490 = vmatpush1.msra.mxu0 0.0
    %3491 = vmatprep.subr.mxu0 0.0
    %3492 = vmatpush1.msra.mxu0 0.0
    %3493 = vmatprep.mubr.f32.mxu0 0.0
    %3494 = vmatmul.mubr.f32.gmra.mrb[0].mxu0 %v3356
    %v3495 = vpop.f32.mrb[0].mxu0
    %v3496 = vadd.f32 %v1945, %v3495
    %v3497 = vpop.f32.mrb[0].mxu0
    %3498 = vdwg.mxu0
    %v3501 = vrot.slane %v3425, 4
    %v3502 = vrot.slane %v3427, 4
    %v3505 = vadd.f32 %v1653, %v3501
    %v3506 = vadd.f32 %v1655, %v3502
    %v3507 = vxor.u32 %v3505, 2147483648
    %v3508 = vxor.u32 %v3506, 2147483648
    %v3509 = vmul.f32 %v3507, 1.442695
    %v3510 = vpow.pop %v3509
    %v3511 = vmul.f32 %v3508, 1.442695
    %v3512 = vpow.pop %v3511
    %v3513 = vadd.f32 %v3510, 1.0
    %v3514 = vadd.f32 %v3512, 1.0
    %v3515 = vrcp.pop %v3513
    %v3516 = vmul.f32 1.0, %v3515
    %v3517 = vrcp.pop %v3514
    %v3518 = vmul.f32 1.0, %v3517
    %v3520 = vrot.slane %v3496, 4
    %v3522 = vmul.f32 %v3516, %v3520
    %v3523 = vadd.f32 %v1724, %v3522
    %v3524 = vtanh.pop %v3523
    %v3525 = vsub.f32 %v3353, %v3524
    %v3526 = vmul.f32 %v3518, %v3525
    %v3527 = vadd.f32 %v3524, %v3526
    %v3529 = vrot.slane %v3527, 4
    %v3530 = vsel %vm135, %v3529, 0
    %3532 = vmatprep.subr.mxu0 %v1728
    %3533 = vmatpush1.msra.mxu0 %v1727
    %3534 = vmatprep.subr.mxu0 %v1731
    %3535 = vmatpush1.msra.mxu0 %v1730
    %3536 = vmatprep.subr.mxu0 %v1734
    %3537 = vmatpush1.msra.mxu0 %v1733
    %3538 = vmatprep.subr.mxu0 %v1737
    %3539 = vmatpush1.msra.mxu0 %v1736
    %3540 = vmatprep.subr.mxu0 0.0
    %3541 = vmatpush1.msra.mxu0 0.0
    %3542 = vmatprep.subr.mxu0 0.0
    %3543 = vmatpush1.msra.mxu0 0.0
    %3544 = vmatprep.subr.mxu0 0.0
    %3545 = vmatpush1.msra.mxu0 0.0
    %3546 = vmatprep.subr.mxu0 0.0
    %3547 = vmatpush1.msra.mxu0 0.0
    %3548 = vmatprep.subr.mxu0 0.0
    %3549 = vmatpush1.msra.mxu0 0.0
    %3550 = vmatprep.subr.mxu0 0.0
    %3551 = vmatpush1.msra.mxu0 0.0
    %3552 = vmatprep.subr.mxu0 0.0
    %3553 = vmatpush1.msra.mxu0 0.0
    %3554 = vmatprep.subr.mxu0 0.0
    %3555 = vmatpush1.msra.mxu0 0.0
    %3556 = vmatprep.subr.mxu0 0.0
    %3557 = vmatpush1.msra.mxu0 0.0
    %3558 = vmatprep.subr.mxu0 0.0
    %3559 = vmatpush1.msra.mxu0 0.0
    %3560 = vmatprep.subr.mxu0 0.0
    %3561 = vmatpush1.msra.mxu0 0.0
    %3562 = vmatprep.subr.mxu0 0.0
    %3563 = vmatpush1.msra.mxu0 0.0
    %3564 = vmatprep.subr.mxu0 0.0
    %3565 = vmatpush1.msra.mxu0 0.0
    %3566 = vmatprep.subr.mxu0 0.0
    %3567 = vmatpush1.msra.mxu0 0.0
    %3568 = vmatprep.subr.mxu0 0.0
    %3569 = vmatpush1.msra.mxu0 0.0
    %3570 = vmatprep.subr.mxu0 0.0
    %3571 = vmatpush1.msra.mxu0 0.0
    %3572 = vmatprep.subr.mxu0 0.0
    %3573 = vmatpush1.msra.mxu0 0.0
    %3574 = vmatprep.subr.mxu0 0.0
    %3575 = vmatpush1.msra.mxu0 0.0
    %3576 = vmatprep.subr.mxu0 0.0
    %3577 = vmatpush1.msra.mxu0 0.0
    %3578 = vmatprep.subr.mxu0 0.0
    %3579 = vmatpush1.msra.mxu0 0.0
    %3580 = vmatprep.subr.mxu0 0.0
    %3581 = vmatpush1.msra.mxu0 0.0
    %3582 = vmatprep.subr.mxu0 0.0
    %3583 = vmatpush1.msra.mxu0 0.0
    %3584 = vmatprep.subr.mxu0 0.0
    %3585 = vmatpush1.msra.mxu0 0.0
    %3586 = vmatprep.subr.mxu0 0.0
    %3587 = vmatpush1.msra.mxu0 0.0
    %3588 = vmatprep.subr.mxu0 0.0
    %3589 = vmatpush1.msra.mxu0 0.0
    %3590 = vmatprep.subr.mxu0 0.0
    %3591 = vmatpush1.msra.mxu0 0.0
    %3592 = vmatprep.subr.mxu0 0.0
    %3593 = vmatpush1.msra.mxu0 0.0
    %3594 = vmatprep.subr.mxu0 0.0
    %3595 = vmatpush1.msra.mxu0 0.0
    %3596 = vmatprep.mubr.f32.mxu0 0.0
    %3597 = vmatmul.mubr.f32.gmra.mrb[0].mxu0 %v3530
    %v3598 = vpop.f32.mrb[0].mxu0
    %v3599 = vadd.f32 %v1757, %v3598
    %v3600 = vpop.f32.mrb[0].mxu0
    %v3601 = vadd.f32 %v1761, %v3600
    %3602 = vdwg.mxu0
    %3603 = vmatprep.subr.mxu0 0.0
    %3604 = vmatpush1.msra.mxu0 %v1729
    %3605 = vmatprep.subr.mxu0 0.0
    %3606 = vmatpush1.msra.mxu0 %v1732
    %3607 = vmatprep.subr.mxu0 0.0
    %3608 = vmatpush1.msra.mxu0 %v1735
    %3609 = vmatprep.subr.mxu0 0.0
    %3610 = vmatpush1.msra.mxu0 %v1738
    %3611 = vmatprep.subr.mxu0 0.0
    %3612 = vmatpush1.msra.mxu0 0.0
    %3613 = vmatprep.subr.mxu0 0.0
    %3614 = vmatpush1.msra.mxu0 0.0
    %3615 = vmatprep.subr.mxu0 0.0
    %3616 = vmatpush1.msra.mxu0 0.0
    %3617 = vmatprep.subr.mxu0 0.0
    %3618 = vmatpush1.msra.mxu0 0.0
    %3619 = vmatprep.subr.mxu0 0.0
    %3620 = vmatpush1.msra.mxu0 0.0
    %3621 = vmatprep.subr.mxu0 0.0
    %3622 = vmatpush1.msra.mxu0 0.0
    %3623 = vmatprep.subr.mxu0 0.0
    %3624 = vmatpush1.msra.mxu0 0.0
    %3625 = vmatprep.subr.mxu0 0.0
    %3626 = vmatpush1.msra.mxu0 0.0
    %3627 = vmatprep.subr.mxu0 0.0
    %3628 = vmatpush1.msra.mxu0 0.0
    %3629 = vmatprep.subr.mxu0 0.0
    %3630 = vmatpush1.msra.mxu0 0.0
    %3631 = vmatprep.subr.mxu0 0.0
    %3632 = vmatpush1.msra.mxu0 0.0
    %3633 = vmatprep.subr.mxu0 0.0
    %3634 = vmatpush1.msra.mxu0 0.0
    %3635 = vmatprep.subr.mxu0 0.0
    %3636 = vmatpush1.msra.mxu0 0.0
    %3637 = vmatprep.subr.mxu0 0.0
    %3638 = vmatpush1.msra.mxu0 0.0
    %3639 = vmatprep.subr.mxu0 0.0
    %3640 = vmatpush1.msra.mxu0 0.0
    %3641 = vmatprep.subr.mxu0 0.0
    %3642 = vmatpush1.msra.mxu0 0.0
    %3643 = vmatprep.subr.mxu0 0.0
    %3644 = vmatpush1.msra.mxu0 0.0
    %3645 = vmatprep.subr.mxu0 0.0
    %3646 = vmatpush1.msra.mxu0 0.0
    %3647 = vmatprep.subr.mxu0 0.0
    %3648 = vmatpush1.msra.mxu0 0.0
    %3649 = vmatprep.subr.mxu0 0.0
    %3650 = vmatpush1.msra.mxu0 0.0
    %3651 = vmatprep.subr.mxu0 0.0
    %3652 = vmatpush1.msra.mxu0 0.0
    %3653 = vmatprep.subr.mxu0 0.0
    %3654 = vmatpush1.msra.mxu0 0.0
    %3655 = vmatprep.subr.mxu0 0.0
    %3656 = vmatpush1.msra.mxu0 0.0
    %3657 = vmatprep.subr.mxu0 0.0
    %3658 = vmatpush1.msra.mxu0 0.0
    %3659 = vmatprep.subr.mxu0 0.0
    %3660 = vmatpush1.msra.mxu0 0.0
    %3661 = vmatprep.subr.mxu0 0.0
    %3662 = vmatpush1.msra.mxu0 0.0
    %3663 = vmatprep.subr.mxu0 0.0
    %3664 = vmatpush1.msra.mxu0 0.0
    %3665 = vmatprep.subr.mxu0 0.0
    %3666 = vmatpush1.msra.mxu0 0.0
    %3667 = vmatprep.mubr.f32.mxu0 0.0
    %3668 = vmatmul.mubr.f32.gmra.mrb[0].mxu0 %v3530
    %v3669 = vpop.f32.mrb[0].mxu0
    %v3670 = vadd.f32 %v1765, %v3669
    %v3671 = vpop.f32.mrb[0].mxu0
    %3672 = vdwg.mxu0
    %v3675 = vrot.slane %v3599, 3
    %v3676 = vrot.slane %v3601, 3
    %v3679 = vadd.f32 %v1480, %v3675
    %v3680 = vadd.f32 %v1482, %v3676
    %v3681 = vxor.u32 %v3679, 2147483648
    %v3682 = vxor.u32 %v3680, 2147483648
    %v3683 = vmul.f32 %v3681, 1.442695
    %v3684 = vpow.pop %v3683
    %v3685 = vmul.f32 %v3682, 1.442695
    %v3686 = vpow.pop %v3685
    %v3687 = vadd.f32 %v3684, 1.0
    %v3688 = vadd.f32 %v3686, 1.0
    %v3689 = vrcp.pop %v3687
    %v3690 = vmul.f32 1.0, %v3689
    %v3691 = vrcp.pop %v3688
    %v3692 = vmul.f32 1.0, %v3691
    %v3694 = vrot.slane %v3670, 3
    %v3696 = vmul.f32 %v3690, %v3694
    %v3697 = vadd.f32 %v1551, %v3696
    %v3698 = vtanh.pop %v3697
    %v3700 = vrot.slane %v3698, 1
    %v3702 = vsub.f32 %v3527, %v3700
    %v3704 = vrot.slane %v3702, 7
    %v3706 = vmul.f32 %v3692, %v3704
    %v3707 = vadd.f32 %v3698, %v3706
    %v3709 = vrot.slane %v3707, 5
    %v3710 = vsel %vm135, %v3709, 0
    %3712 = vmatprep.subr.mxu0 %v1740
    %3713 = vmatpush1.msra.mxu0 %v1739
    %3714 = vmatprep.subr.mxu0 %v1743
    %3715 = vmatpush1.msra.mxu0 %v1742
    %3716 = vmatprep.subr.mxu0 %v1746
    %3717 = vmatpush1.msra.mxu0 %v1745
    %3718 = vmatprep.subr.mxu0 %v1749
    %3719 = vmatpush1.msra.mxu0 %v1748
    %3720 = vmatprep.subr.mxu0 0.0
    %3721 = vmatpush1.msra.mxu0 0.0
    %3722 = vmatprep.subr.mxu0 0.0
    %3723 = vmatpush1.msra.mxu0 0.0
    %3724 = vmatprep.subr.mxu0 0.0
    %3725 = vmatpush1.msra.mxu0 0.0
    %3726 = vmatprep.subr.mxu0 0.0
    %3727 = vmatpush1.msra.mxu0 0.0
    %3728 = vmatprep.subr.mxu0 0.0
    %3729 = vmatpush1.msra.mxu0 0.0
    %3730 = vmatprep.subr.mxu0 0.0
    %3731 = vmatpush1.msra.mxu0 0.0
    %3732 = vmatprep.subr.mxu0 0.0
    %3733 = vmatpush1.msra.mxu0 0.0
    %3734 = vmatprep.subr.mxu0 0.0
    %3735 = vmatpush1.msra.mxu0 0.0
    %3736 = vmatprep.subr.mxu0 0.0
    %3737 = vmatpush1.msra.mxu0 0.0
    %3738 = vmatprep.subr.mxu0 0.0
    %3739 = vmatpush1.msra.mxu0 0.0
    %3740 = vmatprep.subr.mxu0 0.0
    %3741 = vmatpush1.msra.mxu0 0.0
    %3742 = vmatprep.subr.mxu0 0.0
    %3743 = vmatpush1.msra.mxu0 0.0
    %3744 = vmatprep.subr.mxu0 0.0
    %3745 = vmatpush1.msra.mxu0 0.0
    %3746 = vmatprep.subr.mxu0 0.0
    %3747 = vmatpush1.msra.mxu0 0.0
    %3748 = vmatprep.subr.mxu0 0.0
    %3749 = vmatpush1.msra.mxu0 0.0
    %3750 = vmatprep.subr.mxu0 0.0
    %3751 = vmatpush1.msra.mxu0 0.0
    %3752 = vmatprep.subr.mxu0 0.0
    %3753 = vmatpush1.msra.mxu0 0.0
    %3754 = vmatprep.subr.mxu0 0.0
    %3755 = vmatpush1.msra.mxu0 0.0
    %3756 = vmatprep.subr.mxu0 0.0
    %3757 = vmatpush1.msra.mxu0 0.0
    %3758 = vmatprep.subr.mxu0 0.0
    %3759 = vmatpush1.msra.mxu0 0.0
    %3760 = vmatprep.subr.mxu0 0.0
    %3761 = vmatpush1.msra.mxu0 0.0
    %3762 = vmatprep.subr.mxu0 0.0
    %3763 = vmatpush1.msra.mxu0 0.0
    %3764 = vmatprep.subr.mxu0 0.0
    %3765 = vmatpush1.msra.mxu0 0.0
    %3766 = vmatprep.subr.mxu0 0.0
    %3767 = vmatpush1.msra.mxu0 0.0
    %3768 = vmatprep.subr.mxu0 0.0
    %3769 = vmatpush1.msra.mxu0 0.0
    %3770 = vmatprep.subr.mxu0 0.0
    %3771 = vmatpush1.msra.mxu0 0.0
    %3772 = vmatprep.subr.mxu0 0.0
    %3773 = vmatpush1.msra.mxu0 0.0
    %3774 = vmatprep.subr.mxu0 0.0
    %3775 = vmatpush1.msra.mxu0 0.0
    %3776 = vmatprep.mubr.f32.mxu0 0.0
    %3777 = vmatmul.mubr.f32.gmra.mrb[0].mxu0 %v3710
    %v3778 = vpop.f32.mrb[0].mxu0
    %v3779 = vadd.f32 %v1937, %v3778
    %v3780 = vpop.f32.mrb[0].mxu0
    %v3781 = vadd.f32 %v1941, %v3780
    %3782 = vdwg.mxu0
    %3783 = vmatprep.subr.mxu0 0.0
    %3784 = vmatpush1.msra.mxu0 %v1741
    %3785 = vmatprep.subr.mxu0 0.0
    %3786 = vmatpush1.msra.mxu0 %v1744
    %3787 = vmatprep.subr.mxu0 0.0
    %3788 = vmatpush1.msra.mxu0 %v1747
    %3789 = vmatprep.subr.mxu0 0.0
    %3790 = vmatpush1.msra.mxu0 %v1750
    %3791 = vmatprep.subr.mxu0 0.0
    %3792 = vmatpush1.msra.mxu0 0.0
    %3793 = vmatprep.subr.mxu0 0.0
    %3794 = vmatpush1.msra.mxu0 0.0
    %3795 = vmatprep.subr.mxu0 0.0
    %3796 = vmatpush1.msra.mxu0 0.0
    %3797 = vmatprep.subr.mxu0 0.0
    %3798 = vmatpush1.msra.mxu0 0.0
    %3799 = vmatprep.subr.mxu0 0.0
    %3800 = vmatpush1.msra.mxu0 0.0
    %3801 = vmatprep.subr.mxu0 0.0
    %3802 = vmatpush1.msra.mxu0 0.0
    %3803 = vmatprep.subr.mxu0 0.0
    %3804 = vmatpush1.msra.mxu0 0.0
    %3805 = vmatprep.subr.mxu0 0.0
    %3806 = vmatpush1.msra.mxu0 0.0
    %3807 = vmatprep.subr.mxu0 0.0
    %3808 = vmatpush1.msra.mxu0 0.0
    %3809 = vmatprep.subr.mxu0 0.0
    %3810 = vmatpush1.msra.mxu0 0.0
    %3811 = vmatprep.subr.mxu0 0.0
    %3812 = vmatpush1.msra.mxu0 0.0
    %3813 = vmatprep.subr.mxu0 0.0
    %3814 = vmatpush1.msra.mxu0 0.0
    %3815 = vmatprep.subr.mxu0 0.0
    %3816 = vmatpush1.msra.mxu0 0.0
    %3817 = vmatprep.subr.mxu0 0.0
    %3818 = vmatpush1.msra.mxu0 0.0
    %3819 = vmatprep.subr.mxu0 0.0
    %3820 = vmatpush1.msra.mxu0 0.0
    %3821 = vmatprep.subr.mxu0 0.0
    %3822 = vmatpush1.msra.mxu0 0.0
    %3823 = vmatprep.subr.mxu0 0.0
    %3824 = vmatpush1.msra.mxu0 0.0
    %3825 = vmatprep.subr.mxu0 0.0
    %3826 = vmatpush1.msra.mxu0 0.0
    %3827 = vmatprep.subr.mxu0 0.0
    %3828 = vmatpush1.msra.mxu0 0.0
    %3829 = vmatprep.subr.mxu0 0.0
    %3830 = vmatpush1.msra.mxu0 0.0
    %3831 = vmatprep.subr.mxu0 0.0
    %3832 = vmatpush1.msra.mxu0 0.0
    %3833 = vmatprep.subr.mxu0 0.0
    %3834 = vmatpush1.msra.mxu0 0.0
    %3835 = vmatprep.subr.mxu0 0.0
    %3836 = vmatpush1.msra.mxu0 0.0
    %3837 = vmatprep.subr.mxu0 0.0
    %3838 = vmatpush1.msra.mxu0 0.0
    %3839 = vmatprep.subr.mxu0 0.0
    %3840 = vmatpush1.msra.mxu0 0.0
    %3841 = vmatprep.subr.mxu0 0.0
    %3842 = vmatpush1.msra.mxu0 0.0
    %3843 = vmatprep.subr.mxu0 0.0
    %3844 = vmatpush1.msra.mxu0 0.0
    %3845 = vmatprep.subr.mxu0 0.0
    %3846 = vmatpush1.msra.mxu0 0.0
    %3847 = vmatprep.mubr.f32.mxu0 0.0
    %3848 = vmatmul.mubr.f32.gmra.mrb[0].mxu0 %v3710
    %v3849 = vpop.f32.mrb[0].mxu0
    %v3850 = vadd.f32 %v1945, %v3849
    %v3851 = vpop.f32.mrb[0].mxu0
    %3852 = vdwg.mxu0
    %v3855 = vrot.slane %v3779, 3
    %v3856 = vrot.slane %v3781, 3
    %v3859 = vadd.f32 %v1653, %v3855
    %v3860 = vadd.f32 %v1655, %v3856
    %v3861 = vxor.u32 %v3859, 2147483648
    %v3862 = vxor.u32 %v3860, 2147483648
    %v3863 = vmul.f32 %v3861, 1.442695
    %v3864 = vpow.pop %v3863
    %v3865 = vmul.f32 %v3862, 1.442695
    %v3866 = vpow.pop %v3865
    %v3867 = vadd.f32 %v3864, 1.0
    %v3868 = vadd.f32 %v3866, 1.0
    %v3869 = vrcp.pop %v3867
    %v3870 = vmul.f32 1.0, %v3869
    %v3871 = vrcp.pop %v3868
    %v3872 = vmul.f32 1.0, %v3871
    %v3874 = vrot.slane %v3850, 3
    %v3876 = vmul.f32 %v3870, %v3874
    %v3877 = vadd.f32 %v1724, %v3876
    %v3878 = vtanh.pop %v3877
    %v3879 = vsub.f32 %v3707, %v3878
    %v3880 = vmul.f32 %v3872, %v3879
    %v3881 = vadd.f32 %v3878, %v3880
    %v3883 = vrot.slane %v3881, 5
    %v3884 = vsel %vm135, %v3883, 0
    %3886 = vmatprep.subr.mxu0 %v1728
    %3887 = vmatpush1.msra.mxu0 %v1727
    %3888 = vmatprep.subr.mxu0 %v1731
    %3889 = vmatpush1.msra.mxu0 %v1730
    %3890 = vmatprep.subr.mxu0 %v1734
    %3891 = vmatpush1.msra.mxu0 %v1733
    %3892 = vmatprep.subr.mxu0 %v1737
    %3893 = vmatpush1.msra.mxu0 %v1736
    %3894 = vmatprep.subr.mxu0 0.0
    %3895 = vmatpush1.msra.mxu0 0.0
    %3896 = vmatprep.subr.mxu0 0.0
    %3897 = vmatpush1.msra.mxu0 0.0
    %3898 = vmatprep.subr.mxu0 0.0
    %3899 = vmatpush1.msra.mxu0 0.0
    %3900 = vmatprep.subr.mxu0 0.0
    %3901 = vmatpush1.msra.mxu0 0.0
    %3902 = vmatprep.subr.mxu0 0.0
    %3903 = vmatpush1.msra.mxu0 0.0
    %3904 = vmatprep.subr.mxu0 0.0
    %3905 = vmatpush1.msra.mxu0 0.0
    %3906 = vmatprep.subr.mxu0 0.0
    %3907 = vmatpush1.msra.mxu0 0.0
    %3908 = vmatprep.subr.mxu0 0.0
    %3909 = vmatpush1.msra.mxu0 0.0
    %3910 = vmatprep.subr.mxu0 0.0
    %3911 = vmatpush1.msra.mxu0 0.0
    %3912 = vmatprep.subr.mxu0 0.0
    %3913 = vmatpush1.msra.mxu0 0.0
    %3914 = vmatprep.subr.mxu0 0.0
    %3915 = vmatpush1.msra.mxu0 0.0
    %3916 = vmatprep.subr.mxu0 0.0
    %3917 = vmatpush1.msra.mxu0 0.0
    %3918 = vmatprep.subr.mxu0 0.0
    %3919 = vmatpush1.msra.mxu0 0.0
    %3920 = vmatprep.subr.mxu0 0.0
    %3921 = vmatpush1.msra.mxu0 0.0
    %3922 = vmatprep.subr.mxu0 0.0
    %3923 = vmatpush1.msra.mxu0 0.0
    %3924 = vmatprep.subr.mxu0 0.0
    %3925 = vmatpush1.msra.mxu0 0.0
    %3926 = vmatprep.subr.mxu0 0.0
    %3927 = vmatpush1.msra.mxu0 0.0
    %3928 = vmatprep.subr.mxu0 0.0
    %3929 = vmatpush1.msra.mxu0 0.0
    %3930 = vmatprep.subr.mxu0 0.0
    %3931 = vmatpush1.msra.mxu0 0.0
    %3932 = vmatprep.subr.mxu0 0.0
    %3933 = vmatpush1.msra.mxu0 0.0
    %3934 = vmatprep.subr.mxu0 0.0
    %3935 = vmatpush1.msra.mxu0 0.0
    %3936 = vmatprep.subr.mxu0 0.0
    %3937 = vmatpush1.msra.mxu0 0.0
    %3938 = vmatprep.subr.mxu0 0.0
    %3939 = vmatpush1.msra.mxu0 0.0
    %3940 = vmatprep.subr.mxu0 0.0
    %3941 = vmatpush1.msra.mxu0 0.0
    %3942 = vmatprep.subr.mxu0 0.0
    %3943 = vmatpush1.msra.mxu0 0.0
    %3944 = vmatprep.subr.mxu0 0.0
    %3945 = vmatpush1.msra.mxu0 0.0
    %3946 = vmatprep.subr.mxu0 0.0
    %3947 = vmatpush1.msra.mxu0 0.0
    %3948 = vmatprep.subr.mxu0 0.0
    %3949 = vmatpush1.msra.mxu0 0.0
    %3950 = vmatprep.mubr.f32.mxu0 0.0
    %3951 = vmatmul.mubr.f32.gmra.mrb[0].mxu0 %v3884
    %v3952 = vpop.f32.mrb[0].mxu0
    %v3953 = vadd.f32 %v1757, %v3952
    %v3954 = vpop.f32.mrb[0].mxu0
    %v3955 = vadd.f32 %v1761, %v3954
    %3956 = vdwg.mxu0
    %3957 = vmatprep.subr.mxu0 0.0
    %3958 = vmatpush1.msra.mxu0 %v1729
    %3959 = vmatprep.subr.mxu0 0.0
    %3960 = vmatpush1.msra.mxu0 %v1732
    %3961 = vmatprep.subr.mxu0 0.0
    %3962 = vmatpush1.msra.mxu0 %v1735
    %3963 = vmatprep.subr.mxu0 0.0
    %3964 = vmatpush1.msra.mxu0 %v1738
    %3965 = vmatprep.subr.mxu0 0.0
    %3966 = vmatpush1.msra.mxu0 0.0
    %3967 = vmatprep.subr.mxu0 0.0
    %3968 = vmatpush1.msra.mxu0 0.0
    %3969 = vmatprep.subr.mxu0 0.0
    %3970 = vmatpush1.msra.mxu0 0.0
    %3971 = vmatprep.subr.mxu0 0.0
    %3972 = vmatpush1.msra.mxu0 0.0
    %3973 = vmatprep.subr.mxu0 0.0
    %3974 = vmatpush1.msra.mxu0 0.0
    %3975 = vmatprep.subr.mxu0 0.0
    %3976 = vmatpush1.msra.mxu0 0.0
    %3977 = vmatprep.subr.mxu0 0.0
    %3978 = vmatpush1.msra.mxu0 0.0
    %3979 = vmatprep.subr.mxu0 0.0
    %3980 = vmatpush1.msra.mxu0 0.0
    %3981 = vmatprep.subr.mxu0 0.0
    %3982 = vmatpush1.msra.mxu0 0.0
    %3983 = vmatprep.subr.mxu0 0.0
    %3984 = vmatpush1.msra.mxu0 0.0
    %3985 = vmatprep.subr.mxu0 0.0
    %3986 = vmatpush1.msra.mxu0 0.0
    %3987 = vmatprep.subr.mxu0 0.0
    %3988 = vmatpush1.msra.mxu0 0.0
    %3989 = vmatprep.subr.mxu0 0.0
    %3990 = vmatpush1.msra.mxu0 0.0
    %3991 = vmatprep.subr.mxu0 0.0
    %3992 = vmatpush1.msra.mxu0 0.0
    %3993 = vmatprep.subr.mxu0 0.0
    %3994 = vmatpush1.msra.mxu0 0.0
    %3995 = vmatprep.subr.mxu0 0.0
    %3996 = vmatpush1.msra.mxu0 0.0
    %3997 = vmatprep.subr.mxu0 0.0
    %3998 = vmatpush1.msra.mxu0 0.0
    %3999 = vmatprep.subr.mxu0 0.0
    %4000 = vmatpush1.msra.mxu0 0.0
    %4001 = vmatprep.subr.mxu0 0.0
    %4002 = vmatpush1.msra.mxu0 0.0
    %4003 = vmatprep.subr.mxu0 0.0
    %4004 = vmatpush1.msra.mxu0 0.0
    %4005 = vmatprep.subr.mxu0 0.0
    %4006 = vmatpush1.msra.mxu0 0.0
    %4007 = vmatprep.subr.mxu0 0.0
    %4008 = vmatpush1.msra.mxu0 0.0
    %4009 = vmatprep.subr.mxu0 0.0
    %4010 = vmatpush1.msra.mxu0 0.0
    %4011 = vmatprep.subr.mxu0 0.0
    %4012 = vmatpush1.msra.mxu0 0.0
    %4013 = vmatprep.subr.mxu0 0.0
    %4014 = vmatpush1.msra.mxu0 0.0
    %4015 = vmatprep.subr.mxu0 0.0
    %4016 = vmatpush1.msra.mxu0 0.0
    %4017 = vmatprep.subr.mxu0 0.0
    %4018 = vmatpush1.msra.mxu0 0.0
    %4019 = vmatprep.subr.mxu0 0.0
    %4020 = vmatpush1.msra.mxu0 0.0
    %4021 = vmatprep.mubr.f32.mxu0 0.0
    %4022 = vmatmul.mubr.f32.gmra.mrb[0].mxu0 %v3884
    %v4023 = vpop.f32.mrb[0].mxu0
    %v4024 = vadd.f32 %v1765, %v4023
    %v4025 = vpop.f32.mrb[0].mxu0
    %4026 = vdwg.mxu0
    %v4029 = vrot.slane %v3953, 2
    %v4030 = vrot.slane %v3955, 2
    %v4033 = vadd.f32 %v1480, %v4029
    %v4034 = vadd.f32 %v1482, %v4030
    %v4035 = vxor.u32 %v4033, 2147483648
    %v4036 = vxor.u32 %v4034, 2147483648
    %v4037 = vmul.f32 %v4035, 1.442695
    %v4038 = vpow.pop %v4037
    %v4039 = vmul.f32 %v4036, 1.442695
    %v4040 = vpow.pop %v4039
    %v4041 = vadd.f32 %v4038, 1.0
    %v4042 = vadd.f32 %v4040, 1.0
    %v4043 = vrcp.pop %v4041
    %v4044 = vmul.f32 1.0, %v4043
    %v4045 = vrcp.pop %v4042
    %v4046 = vmul.f32 1.0, %v4045
    %v4048 = vrot.slane %v4024, 2
    %v4050 = vmul.f32 %v4044, %v4048
    %v4051 = vadd.f32 %v1551, %v4050
    %v4052 = vtanh.pop %v4051
    %v4054 = vrot.slane %v4052, 1
    %v4056 = vsub.f32 %v3881, %v4054
    %v4058 = vrot.slane %v4056, 7
    %v4060 = vmul.f32 %v4046, %v4058
    %v4061 = vadd.f32 %v4052, %v4060
    %v4063 = vrot.slane %v4061, 6
    %v4064 = vsel %vm135, %v4063, 0
    %4066 = vmatprep.subr.mxu0 %v1740
    %4067 = vmatpush1.msra.mxu0 %v1739
    %4068 = vmatprep.subr.mxu0 %v1743
    %4069 = vmatpush1.msra.mxu0 %v1742
    %4070 = vmatprep.subr.mxu0 %v1746
    %4071 = vmatpush1.msra.mxu0 %v1745
    %4072 = vmatprep.subr.mxu0 %v1749
    %4073 = vmatpush1.msra.mxu0 %v1748
    %4074 = vmatprep.subr.mxu0 0.0
    %4075 = vmatpush1.msra.mxu0 0.0
    %4076 = vmatprep.subr.mxu0 0.0
    %4077 = vmatpush1.msra.mxu0 0.0
    %4078 = vmatprep.subr.mxu0 0.0
    %4079 = vmatpush1.msra.mxu0 0.0
    %4080 = vmatprep.subr.mxu0 0.0
    %4081 = vmatpush1.msra.mxu0 0.0
    %4082 = vmatprep.subr.mxu0 0.0
    %4083 = vmatpush1.msra.mxu0 0.0
    %4084 = vmatprep.subr.mxu0 0.0
    %4085 = vmatpush1.msra.mxu0 0.0
    %4086 = vmatprep.subr.mxu0 0.0
    %4087 = vmatpush1.msra.mxu0 0.0
    %4088 = vmatprep.subr.mxu0 0.0
    %4089 = vmatpush1.msra.mxu0 0.0
    %4090 = vmatprep.subr.mxu0 0.0
    %4091 = vmatpush1.msra.mxu0 0.0
    %4092 = vmatprep.subr.mxu0 0.0
    %4093 = vmatpush1.msra.mxu0 0.0
    %4094 = vmatprep.subr.mxu0 0.0
    %4095 = vmatpush1.msra.mxu0 0.0
    %4096 = vmatprep.subr.mxu0 0.0
    %4097 = vmatpush1.msra.mxu0 0.0
    %4098 = vmatprep.subr.mxu0 0.0
    %4099 = vmatpush1.msra.mxu0 0.0
    %4100 = vmatprep.subr.mxu0 0.0
    %4101 = vmatpush1.msra.mxu0 0.0
    %4102 = vmatprep.subr.mxu0 0.0
    %4103 = vmatpush1.msra.mxu0 0.0
    %4104 = vmatprep.subr.mxu0 0.0
    %4105 = vmatpush1.msra.mxu0 0.0
    %4106 = vmatprep.subr.mxu0 0.0
    %4107 = vmatpush1.msra.mxu0 0.0
    %4108 = vmatprep.subr.mxu0 0.0
    %4109 = vmatpush1.msra.mxu0 0.0
    %4110 = vmatprep.subr.mxu0 0.0
    %4111 = vmatpush1.msra.mxu0 0.0
    %4112 = vmatprep.subr.mxu0 0.0
    %4113 = vmatpush1.msra.mxu0 0.0
    %4114 = vmatprep.subr.mxu0 0.0
    %4115 = vmatpush1.msra.mxu0 0.0
    %4116 = vmatprep.subr.mxu0 0.0
    %4117 = vmatpush1.msra.mxu0 0.0
    %4118 = vmatprep.subr.mxu0 0.0
    %4119 = vmatpush1.msra.mxu0 0.0
    %4120 = vmatprep.subr.mxu0 0.0
    %4121 = vmatpush1.msra.mxu0 0.0
    %4122 = vmatprep.subr.mxu0 0.0
    %4123 = vmatpush1.msra.mxu0 0.0
    %4124 = vmatprep.subr.mxu0 0.0
    %4125 = vmatpush1.msra.mxu0 0.0
    %4126 = vmatprep.subr.mxu0 0.0
    %4127 = vmatpush1.msra.mxu0 0.0
    %4128 = vmatprep.subr.mxu0 0.0
    %4129 = vmatpush1.msra.mxu0 0.0
    %4130 = vmatprep.mubr.f32.mxu0 0.0
    %4131 = vmatmul.mubr.f32.gmra.mrb[0].mxu0 %v4064
    %v4132 = vpop.f32.mrb[0].mxu0
    %v4133 = vadd.f32 %v1937, %v4132
    %v4134 = vpop.f32.mrb[0].mxu0
    %v4135 = vadd.f32 %v1941, %v4134
    %4136 = vdwg.mxu0
    %4137 = vmatprep.subr.mxu0 0.0
    %4138 = vmatpush1.msra.mxu0 %v1741
    %4139 = vmatprep.subr.mxu0 0.0
    %4140 = vmatpush1.msra.mxu0 %v1744
    %4141 = vmatprep.subr.mxu0 0.0
    %4142 = vmatpush1.msra.mxu0 %v1747
    %4143 = vmatprep.subr.mxu0 0.0
    %4144 = vmatpush1.msra.mxu0 %v1750
    %4145 = vmatprep.subr.mxu0 0.0
    %4146 = vmatpush1.msra.mxu0 0.0
    %4147 = vmatprep.subr.mxu0 0.0
    %4148 = vmatpush1.msra.mxu0 0.0
    %4149 = vmatprep.subr.mxu0 0.0
    %4150 = vmatpush1.msra.mxu0 0.0
    %4151 = vmatprep.subr.mxu0 0.0
    %4152 = vmatpush1.msra.mxu0 0.0
    %4153 = vmatprep.subr.mxu0 0.0
    %4154 = vmatpush1.msra.mxu0 0.0
    %4155 = vmatprep.subr.mxu0 0.0
    %4156 = vmatpush1.msra.mxu0 0.0
    %4157 = vmatprep.subr.mxu0 0.0
    %4158 = vmatpush1.msra.mxu0 0.0
    %4159 = vmatprep.subr.mxu0 0.0
    %4160 = vmatpush1.msra.mxu0 0.0
    %4161 = vmatprep.subr.mxu0 0.0
    %4162 = vmatpush1.msra.mxu0 0.0
    %4163 = vmatprep.subr.mxu0 0.0
    %4164 = vmatpush1.msra.mxu0 0.0
    %4165 = vmatprep.subr.mxu0 0.0
    %4166 = vmatpush1.msra.mxu0 0.0
    %4167 = vmatprep.subr.mxu0 0.0
    %4168 = vmatpush1.msra.mxu0 0.0
    %4169 = vmatprep.subr.mxu0 0.0
    %4170 = vmatpush1.msra.mxu0 0.0
    %4171 = vmatprep.subr.mxu0 0.0
    %4172 = vmatpush1.msra.mxu0 0.0
    %4173 = vmatprep.subr.mxu0 0.0
    %4174 = vmatpush1.msra.mxu0 0.0
    %4175 = vmatprep.subr.mxu0 0.0
    %4176 = vmatpush1.msra.mxu0 0.0
    %4177 = vmatprep.subr.mxu0 0.0
    %4178 = vmatpush1.msra.mxu0 0.0
    %4179 = vmatprep.subr.mxu0 0.0
    %4180 = vmatpush1.msra.mxu0 0.0
    %4181 = vmatprep.subr.mxu0 0.0
    %4182 = vmatpush1.msra.mxu0 0.0
    %4183 = vmatprep.subr.mxu0 0.0
    %4184 = vmatpush1.msra.mxu0 0.0
    %4185 = vmatprep.subr.mxu0 0.0
    %4186 = vmatpush1.msra.mxu0 0.0
    %4187 = vmatprep.subr.mxu0 0.0
    %4188 = vmatpush1.msra.mxu0 0.0
    %4189 = vmatprep.subr.mxu0 0.0
    %4190 = vmatpush1.msra.mxu0 0.0
    %4191 = vmatprep.subr.mxu0 0.0
    %4192 = vmatpush1.msra.mxu0 0.0
    %4193 = vmatprep.subr.mxu0 0.0
    %4194 = vmatpush1.msra.mxu0 0.0
    %4195 = vmatprep.subr.mxu0 0.0
    %4196 = vmatpush1.msra.mxu0 0.0
    %4197 = vmatprep.subr.mxu0 0.0
    %4198 = vmatpush1.msra.mxu0 0.0
    %4199 = vmatprep.subr.mxu0 0.0
    %4200 = vmatpush1.msra.mxu0 0.0
    %4201 = vmatprep.mubr.f32.mxu0 0.0
    %4202 = vmatmul.mubr.f32.gmra.mrb[0].mxu0 %v4064
    %v4203 = vpop.f32.mrb[0].mxu0
    %v4204 = vadd.f32 %v1945, %v4203
    %v4205 = vpop.f32.mrb[0].mxu0
    %4206 = vdwg.mxu0
    %v4209 = vrot.slane %v4133, 2
    %v4210 = vrot.slane %v4135, 2
    %v4213 = vadd.f32 %v1653, %v4209
    %v4214 = vadd.f32 %v1655, %v4210
    %v4215 = vxor.u32 %v4213, 2147483648
    %v4216 = vxor.u32 %v4214, 2147483648
    %v4217 = vmul.f32 %v4215, 1.442695
    %v4218 = vpow.pop %v4217
    %v4219 = vmul.f32 %v4216, 1.442695
    %v4220 = vpow.pop %v4219
    %v4221 = vadd.f32 %v4218, 1.0
    %v4222 = vadd.f32 %v4220, 1.0
    %v4223 = vrcp.pop %v4221
    %v4224 = vmul.f32 1.0, %v4223
    %v4225 = vrcp.pop %v4222
    %v4226 = vmul.f32 1.0, %v4225
    %v4228 = vrot.slane %v4204, 2
    %v4230 = vmul.f32 %v4224, %v4228
    %v4231 = vadd.f32 %v1724, %v4230
    %v4232 = vtanh.pop %v4231
    %v4233 = vsub.f32 %v4061, %v4232
    %v4234 = vmul.f32 %v4226, %v4233
    %v4235 = vadd.f32 %v4232, %v4234
    %v4237 = vrot.slane %v4235, 6
    %v4238 = vsel %vm135, %v4237, 0
    %4240 = vmatprep.subr.mxu0 %v1728
    %4241 = vmatpush1.msra.mxu0 %v1727
    %4242 = vmatprep.subr.mxu0 %v1731
    %4243 = vmatpush1.msra.mxu0 %v1730
    %4244 = vmatprep.subr.mxu0 %v1734
    %4245 = vmatpush1.msra.mxu0 %v1733
    %4246 = vmatprep.subr.mxu0 %v1737
    %4247 = vmatpush1.msra.mxu0 %v1736
    %4248 = vmatprep.subr.mxu0 0.0
    %4249 = vmatpush1.msra.mxu0 0.0
    %4250 = vmatprep.subr.mxu0 0.0
    %4251 = vmatpush1.msra.mxu0 0.0
    %4252 = vmatprep.subr.mxu0 0.0
    %4253 = vmatpush1.msra.mxu0 0.0
    %4254 = vmatprep.subr.mxu0 0.0
    %4255 = vmatpush1.msra.mxu0 0.0
    %4256 = vmatprep.subr.mxu0 0.0
    %4257 = vmatpush1.msra.mxu0 0.0
    %4258 = vmatprep.subr.mxu0 0.0
    %4259 = vmatpush1.msra.mxu0 0.0
    %4260 = vmatprep.subr.mxu0 0.0
    %4261 = vmatpush1.msra.mxu0 0.0
    %4262 = vmatprep.subr.mxu0 0.0
    %4263 = vmatpush1.msra.mxu0 0.0
    %4264 = vmatprep.subr.mxu0 0.0
    %4265 = vmatpush1.msra.mxu0 0.0
    %4266 = vmatprep.subr.mxu0 0.0
    %4267 = vmatpush1.msra.mxu0 0.0
    %4268 = vmatprep.subr.mxu0 0.0
    %4269 = vmatpush1.msra.mxu0 0.0
    %4270 = vmatprep.subr.mxu0 0.0
    %4271 = vmatpush1.msra.mxu0 0.0
    %4272 = vmatprep.subr.mxu0 0.0
    %4273 = vmatpush1.msra.mxu0 0.0
    %4274 = vmatprep.subr.mxu0 0.0
    %4275 = vmatpush1.msra.mxu0 0.0
    %4276 = vmatprep.subr.mxu0 0.0
    %4277 = vmatpush1.msra.mxu0 0.0
    %4278 = vmatprep.subr.mxu0 0.0
    %4279 = vmatpush1.msra.mxu0 0.0
    %4280 = vmatprep.subr.mxu0 0.0
    %4281 = vmatpush1.msra.mxu0 0.0
    %4282 = vmatprep.subr.mxu0 0.0
    %4283 = vmatpush1.msra.mxu0 0.0
    %4284 = vmatprep.subr.mxu0 0.0
    %4285 = vmatpush1.msra.mxu0 0.0
    %4286 = vmatprep.subr.mxu0 0.0
    %4287 = vmatpush1.msra.mxu0 0.0
    %4288 = vmatprep.subr.mxu0 0.0
    %4289 = vmatpush1.msra.mxu0 0.0
    %4290 = vmatprep.subr.mxu0 0.0
    %4291 = vmatpush1.msra.mxu0 0.0
    %4292 = vmatprep.subr.mxu0 0.0
    %4293 = vmatpush1.msra.mxu0 0.0
    %4294 = vmatprep.subr.mxu0 0.0
    %4295 = vmatpush1.msra.mxu0 0.0
    %4296 = vmatprep.subr.mxu0 0.0
    %4297 = vmatpush1.msra.mxu0 0.0
    %4298 = vmatprep.subr.mxu0 0.0
    %4299 = vmatpush1.msra.mxu0 0.0
    %4300 = vmatprep.subr.mxu0 0.0
    %4301 = vmatpush1.msra.mxu0 0.0
    %4302 = vmatprep.subr.mxu0 0.0
    %4303 = vmatpush1.msra.mxu0 0.0
    %4304 = vmatprep.mubr.f32.mxu0 0.0
    %4305 = vmatmul.mubr.f32.gmra.mrb[0].mxu0 %v4238
    %v4306 = vpop.f32.mrb[0].mxu0
    %v4307 = vadd.f32 %v1757, %v4306
    %v4308 = vpop.f32.mrb[0].mxu0
    %v4309 = vadd.f32 %v1761, %v4308
    %4310 = vdwg.mxu0
    %4311 = vmatprep.subr.mxu0 0.0
    %4312 = vmatpush1.msra.mxu0 %v1729
    %4313 = vmatprep.subr.mxu0 0.0
    %4314 = vmatpush1.msra.mxu0 %v1732
    %4315 = vmatprep.subr.mxu0 0.0
    %4316 = vmatpush1.msra.mxu0 %v1735
    %4317 = vmatprep.subr.mxu0 0.0
    %4318 = vmatpush1.msra.mxu0 %v1738
    %4319 = vmatprep.subr.mxu0 0.0
    %4320 = vmatpush1.msra.mxu0 0.0
    %4321 = vmatprep.subr.mxu0 0.0
    %4322 = vmatpush1.msra.mxu0 0.0
    %4323 = vmatprep.subr.mxu0 0.0
    %4324 = vmatpush1.msra.mxu0 0.0
    %4325 = vmatprep.subr.mxu0 0.0
    %4326 = vmatpush1.msra.mxu0 0.0
    %4327 = vmatprep.subr.mxu0 0.0
    %4328 = vmatpush1.msra.mxu0 0.0
    %4329 = vmatprep.subr.mxu0 0.0
    %4330 = vmatpush1.msra.mxu0 0.0
    %4331 = vmatprep.subr.mxu0 0.0
    %4332 = vmatpush1.msra.mxu0 0.0
    %4333 = vmatprep.subr.mxu0 0.0
    %4334 = vmatpush1.msra.mxu0 0.0
    %4335 = vmatprep.subr.mxu0 0.0
    %4336 = vmatpush1.msra.mxu0 0.0
    %4337 = vmatprep.subr.mxu0 0.0
    %4338 = vmatpush1.msra.mxu0 0.0
    %4339 = vmatprep.subr.mxu0 0.0
    %4340 = vmatpush1.msra.mxu0 0.0
    %4341 = vmatprep.subr.mxu0 0.0
    %4342 = vmatpush1.msra.mxu0 0.0
    %4343 = vmatprep.subr.mxu0 0.0
    %4344 = vmatpush1.msra.mxu0 0.0
    %4345 = vmatprep.subr.mxu0 0.0
    %4346 = vmatpush1.msra.mxu0 0.0
    %4347 = vmatprep.subr.mxu0 0.0
    %4348 = vmatpush1.msra.mxu0 0.0
    %4349 = vmatprep.subr.mxu0 0.0
    %4350 = vmatpush1.msra.mxu0 0.0
    %4351 = vmatprep.subr.mxu0 0.0
    %4352 = vmatpush1.msra.mxu0 0.0
    %4353 = vmatprep.subr.mxu0 0.0
    %4354 = vmatpush1.msra.mxu0 0.0
    %4355 = vmatprep.subr.mxu0 0.0
    %4356 = vmatpush1.msra.mxu0 0.0
    %4357 = vmatprep.subr.mxu0 0.0
    %4358 = vmatpush1.msra.mxu0 0.0
    %4359 = vmatprep.subr.mxu0 0.0
    %4360 = vmatpush1.msra.mxu0 0.0
    %4361 = vmatprep.subr.mxu0 0.0
    %4362 = vmatpush1.msra.mxu0 0.0
    %4363 = vmatprep.subr.mxu0 0.0
    %4364 = vmatpush1.msra.mxu0 0.0
    %4365 = vmatprep.subr.mxu0 0.0
    %4366 = vmatpush1.msra.mxu0 0.0
    %4367 = vmatprep.subr.mxu0 0.0
    %4368 = vmatpush1.msra.mxu0 0.0
    %4369 = vmatprep.subr.mxu0 0.0
    %4370 = vmatpush1.msra.mxu0 0.0
    %4371 = vmatprep.subr.mxu0 0.0
    %4372 = vmatpush1.msra.mxu0 0.0
    %4373 = vmatprep.subr.mxu0 0.0
    %4374 = vmatpush1.msra.mxu0 0.0
    %4375 = vmatprep.mubr.f32.mxu0 0.0
    %4376 = vmatmul.mubr.f32.gmra.mrb[0].mxu0 %v4238
    %v4377 = vpop.f32.mrb[0].mxu0
    %v4378 = vadd.f32 %v1765, %v4377
    %v4379 = vpop.f32.mrb[0].mxu0
    %4380 = vdwg.mxu0
    %v4383 = vrot.slane %v4307, 1
    %v4384 = vrot.slane %v4309, 1
    %v4387 = vadd.f32 %v1480, %v4383
    %v4388 = vadd.f32 %v1482, %v4384
    %v4389 = vxor.u32 %v4387, 2147483648
    %v4390 = vxor.u32 %v4388, 2147483648
    %v4391 = vmul.f32 %v4389, 1.442695
    %v4392 = vpow.pop %v4391
    %v4393 = vmul.f32 %v4390, 1.442695
    %v4394 = vpow.pop %v4393
    %v4395 = vadd.f32 %v4392, 1.0
    %v4396 = vadd.f32 %v4394, 1.0
    %v4397 = vrcp.pop %v4395
    %v4398 = vmul.f32 1.0, %v4397
    %v4399 = vrcp.pop %v4396
    %v4400 = vmul.f32 1.0, %v4399
    %v4402 = vrot.slane %v4378, 1
    %v4404 = vmul.f32 %v4398, %v4402
    %v4405 = vadd.f32 %v1551, %v4404
    %v4406 = vtanh.pop %v4405
    %v4408 = vrot.slane %v4406, 1
    %v4410 = vsub.f32 %v4235, %v4408
    %v4412 = vrot.slane %v4410, 7
    %v4414 = vmul.f32 %v4400, %v4412
    %v4415 = vadd.f32 %v4406, %v4414
    %v4417 = vrot.slane %v4415, 7
    %v4418 = vsel %vm135, %v4417, 0
    %4420 = vmatprep.subr.mxu0 %v1740
    %4421 = vmatpush1.msra.mxu0 %v1739
    %4422 = vmatprep.subr.mxu0 %v1743
    %4423 = vmatpush1.msra.mxu0 %v1742
    %4424 = vmatprep.subr.mxu0 %v1746
    %4425 = vmatpush1.msra.mxu0 %v1745
    %4426 = vmatprep.subr.mxu0 %v1749
    %4427 = vmatpush1.msra.mxu0 %v1748
    %4428 = vmatprep.subr.mxu0 0.0
    %4429 = vmatpush1.msra.mxu0 0.0
    %4430 = vmatprep.subr.mxu0 0.0
    %4431 = vmatpush1.msra.mxu0 0.0
    %4432 = vmatprep.subr.mxu0 0.0
    %4433 = vmatpush1.msra.mxu0 0.0
    %4434 = vmatprep.subr.mxu0 0.0
    %4435 = vmatpush1.msra.mxu0 0.0
    %4436 = vmatprep.subr.mxu0 0.0
    %4437 = vmatpush1.msra.mxu0 0.0
    %4438 = vmatprep.subr.mxu0 0.0
    %4439 = vmatpush1.msra.mxu0 0.0
    %4440 = vmatprep.subr.mxu0 0.0
    %4441 = vmatpush1.msra.mxu0 0.0
    %4442 = vmatprep.subr.mxu0 0.0
    %4443 = vmatpush1.msra.mxu0 0.0
    %4444 = vmatprep.subr.mxu0 0.0
    %4445 = vmatpush1.msra.mxu0 0.0
    %4446 = vmatprep.subr.mxu0 0.0
    %4447 = vmatpush1.msra.mxu0 0.0
    %4448 = vmatprep.subr.mxu0 0.0
    %4449 = vmatpush1.msra.mxu0 0.0
    %4450 = vmatprep.subr.mxu0 0.0
    %4451 = vmatpush1.msra.mxu0 0.0
    %4452 = vmatprep.subr.mxu0 0.0
    %4453 = vmatpush1.msra.mxu0 0.0
    %4454 = vmatprep.subr.mxu0 0.0
    %4455 = vmatpush1.msra.mxu0 0.0
    %4456 = vmatprep.subr.mxu0 0.0
    %4457 = vmatpush1.msra.mxu0 0.0
    %4458 = vmatprep.subr.mxu0 0.0
    %4459 = vmatpush1.msra.mxu0 0.0
    %4460 = vmatprep.subr.mxu0 0.0
    %4461 = vmatpush1.msra.mxu0 0.0
    %4462 = vmatprep.subr.mxu0 0.0
    %4463 = vmatpush1.msra.mxu0 0.0
    %4464 = vmatprep.subr.mxu0 0.0
    %4465 = vmatpush1.msra.mxu0 0.0
    %4466 = vmatprep.subr.mxu0 0.0
    %4467 = vmatpush1.msra.mxu0 0.0
    %4468 = vmatprep.subr.mxu0 0.0
    %4469 = vmatpush1.msra.mxu0 0.0
    %4470 = vmatprep.subr.mxu0 0.0
    %4471 = vmatpush1.msra.mxu0 0.0
    %4472 = vmatprep.subr.mxu0 0.0
    %4473 = vmatpush1.msra.mxu0 0.0
    %4474 = vmatprep.subr.mxu0 0.0
    %4475 = vmatpush1.msra.mxu0 0.0
    %4476 = vmatprep.subr.mxu0 0.0
    %4477 = vmatpush1.msra.mxu0 0.0
    %4478 = vmatprep.subr.mxu0 0.0
    %4479 = vmatpush1.msra.mxu0 0.0
    %4480 = vmatprep.subr.mxu0 0.0
    %4481 = vmatpush1.msra.mxu0 0.0
    %4482 = vmatprep.subr.mxu0 0.0
    %4483 = vmatpush1.msra.mxu0 0.0
    %4484 = vmatprep.mubr.f32.mxu0 0.0
    %4485 = vmatmul.mubr.f32.gmra.mrb[0].mxu0 %v4418
    %v4486 = vpop.f32.mrb[0].mxu0
    %v4487 = vadd.f32 %v1937, %v4486
    %v4488 = vpop.f32.mrb[0].mxu0
    %v4489 = vadd.f32 %v1941, %v4488
    %4490 = vdwg.mxu0
    %4491 = vmatprep.subr.mxu0 0.0
    %4492 = vmatpush1.msra.mxu0 %v1741
    %4493 = vmatprep.subr.mxu0 0.0
    %4494 = vmatpush1.msra.mxu0 %v1744
    %4495 = vmatprep.subr.mxu0 0.0
    %4496 = vmatpush1.msra.mxu0 %v1747
    %4497 = vmatprep.subr.mxu0 0.0
    %4498 = vmatpush1.msra.mxu0 %v1750
    %4499 = vmatprep.subr.mxu0 0.0
    %4500 = vmatpush1.msra.mxu0 0.0
    %4501 = vmatprep.subr.mxu0 0.0
    %4502 = vmatpush1.msra.mxu0 0.0
    %4503 = vmatprep.subr.mxu0 0.0
    %4504 = vmatpush1.msra.mxu0 0.0
    %4505 = vmatprep.subr.mxu0 0.0
    %4506 = vmatpush1.msra.mxu0 0.0
    %4507 = vmatprep.subr.mxu0 0.0
    %4508 = vmatpush1.msra.mxu0 0.0
    %4509 = vmatprep.subr.mxu0 0.0
    %4510 = vmatpush1.msra.mxu0 0.0
    %4511 = vmatprep.subr.mxu0 0.0
    %4512 = vmatpush1.msra.mxu0 0.0
    %4513 = vmatprep.subr.mxu0 0.0
    %4514 = vmatpush1.msra.mxu0 0.0
    %4515 = vmatprep.subr.mxu0 0.0
    %4516 = vmatpush1.msra.mxu0 0.0
    %4517 = vmatprep.subr.mxu0 0.0
    %4518 = vmatpush1.msra.mxu0 0.0
    %4519 = vmatprep.subr.mxu0 0.0
    %4520 = vmatpush1.msra.mxu0 0.0
    %4521 = vmatprep.subr.mxu0 0.0
    %4522 = vmatpush1.msra.mxu0 0.0
    %4523 = vmatprep.subr.mxu0 0.0
    %4524 = vmatpush1.msra.mxu0 0.0
    %4525 = vmatprep.subr.mxu0 0.0
    %4526 = vmatpush1.msra.mxu0 0.0
    %4527 = vmatprep.subr.mxu0 0.0
    %4528 = vmatpush1.msra.mxu0 0.0
    %4529 = vmatprep.subr.mxu0 0.0
    %4530 = vmatpush1.msra.mxu0 0.0
    %4531 = vmatprep.subr.mxu0 0.0
    %4532 = vmatpush1.msra.mxu0 0.0
    %4533 = vmatprep.subr.mxu0 0.0
    %4534 = vmatpush1.msra.mxu0 0.0
    %4535 = vmatprep.subr.mxu0 0.0
    %4536 = vmatpush1.msra.mxu0 0.0
    %4537 = vmatprep.subr.mxu0 0.0
    %4538 = vmatpush1.msra.mxu0 0.0
    %4539 = vmatprep.subr.mxu0 0.0
    %4540 = vmatpush1.msra.mxu0 0.0
    %4541 = vmatprep.subr.mxu0 0.0
    %4542 = vmatpush1.msra.mxu0 0.0
    %4543 = vmatprep.subr.mxu0 0.0
    %4544 = vmatpush1.msra.mxu0 0.0
    %4545 = vmatprep.subr.mxu0 0.0
    %4546 = vmatpush1.msra.mxu0 0.0
    %4547 = vmatprep.subr.mxu0 0.0
    %4548 = vmatpush1.msra.mxu0 0.0
    %4549 = vmatprep.subr.mxu0 0.0
    %4550 = vmatpush1.msra.mxu0 0.0
    %4551 = vmatprep.subr.mxu0 0.0
    %4552 = vmatpush1.msra.mxu0 0.0
    %4553 = vmatprep.subr.mxu0 0.0
    %4554 = vmatpush1.msra.mxu0 0.0
    %4555 = vmatprep.mubr.f32.mxu0 0.0
    %4556 = vmatmul.mubr.f32.gmra.mrb[0].mxu0 %v4418
    %v4557 = vpop.f32.mrb[0].mxu0
    %v4558 = vadd.f32 %v1945, %v4557
    %v4559 = vpop.f32.mrb[0].mxu0
    %4560 = vdwg.mxu0
    %v4563 = vrot.slane %v4487, 1
    %v4564 = vrot.slane %v4489, 1
    %v4567 = vadd.f32 %v1653, %v4563
    %v4568 = vadd.f32 %v1655, %v4564
    %v4569 = vxor.u32 %v4567, 2147483648
    %v4570 = vxor.u32 %v4568, 2147483648
    %v4571 = vmul.f32 %v4569, 1.442695
    %v4572 = vpow.pop %v4571
    %v4573 = vmul.f32 %v4570, 1.442695
    %v4574 = vpow.pop %v4573
    %v4575 = vadd.f32 %v4572, 1.0
    %v4576 = vadd.f32 %v4574, 1.0
    %v4577 = vrcp.pop %v4575
    %v4578 = vmul.f32 1.0, %v4577
    %v4579 = vrcp.pop %v4576
    %v4580 = vmul.f32 1.0, %v4579
    %v4582 = vrot.slane %v4558, 1
    %v4584 = vmul.f32 %v4578, %v4582
    %v4585 = vadd.f32 %v1724, %v4584
    %v4586 = vtanh.pop %v4585
    %v4587 = vsub.f32 %v4415, %v4586
    %v4588 = vmul.f32 %v4580, %v4587
    %v4589 = vadd.f32 %v4586, %v4588
    %v4590 = vsel %vm719, %v2112, %v2465
    %v4591 = vsel %vm721, %v4590, %v2819
    %v4592 = vsel %vm723, %v4591, %v3173
    %v4593 = vsel %vm725, %v4592, %v3527
    %v4594 = vsel %vm727, %v4593, %v3881
    %v4595 = vsel %vm729, %v4594, %v4235
    %v4596 = vsel %vm731, %v4595, %v4589
    %v4597 = vld [vmem:[#allocation8 + $0x60] sm:$0xff]
    %v4598 = vld [vmem:[#allocation8 + $0xc8] sm:$0xff]
    %v4599 = vld [vmem:[#allocation8 + $0x130] sm:$0xff]
    %v4600 = vld [vmem:[#allocation8 + $0x198] sm:$0xff]
    %v4601 = vld [vmem:[%s4 + $0xc] sm:$0x1]
    %v4603 = vlaneseq
    %v4604 = vshrl.u32 %v4603, 7
    %v4605 = vsub.s32 0, %v4604
    %v4606 = vrot.slane %v4601, %v4605
    %v4609 = vsel %vm135, %v4596, 0
    %4611 = vmatprep.subr.mxu0 0.0
    %4612 = vmatpush1.msra.mxu0 %v4597
    %4613 = vmatprep.subr.mxu0 0.0
    %4614 = vmatpush1.msra.mxu0 %v4598
    %4615 = vmatprep.subr.mxu0 0.0
    %4616 = vmatpush1.msra.mxu0 %v4599
    %4617 = vmatprep.subr.mxu0 0.0
    %4618 = vmatpush1.msra.mxu0 %v4600
    %4619 = vmatprep.subr.mxu0 0.0
    %4620 = vmatpush1.msra.mxu0 0.0
    %4621 = vmatprep.subr.mxu0 0.0
    %4622 = vmatpush1.msra.mxu0 0.0
    %4623 = vmatprep.subr.mxu0 0.0
    %4624 = vmatpush1.msra.mxu0 0.0
    %4625 = vmatprep.subr.mxu0 0.0
    %4626 = vmatpush1.msra.mxu0 0.0
    %4627 = vmatprep.subr.mxu0 0.0
    %4628 = vmatpush1.msra.mxu0 0.0
    %4629 = vmatprep.subr.mxu0 0.0
    %4630 = vmatpush1.msra.mxu0 0.0
    %4631 = vmatprep.subr.mxu0 0.0
    %4632 = vmatpush1.msra.mxu0 0.0
    %4633 = vmatprep.subr.mxu0 0.0
    %4634 = vmatpush1.msra.mxu0 0.0
    %4635 = vmatprep.subr.mxu0 0.0
    %4636 = vmatpush1.msra.mxu0 0.0
    %4637 = vmatprep.subr.mxu0 0.0
    %4638 = vmatpush1.msra.mxu0 0.0
    %4639 = vmatprep.subr.mxu0 0.0
    %4640 = vmatpush1.msra.mxu0 0.0
    %4641 = vmatprep.subr.mxu0 0.0
    %4642 = vmatpush1.msra.mxu0 0.0
    %4643 = vmatprep.subr.mxu0 0.0
    %4644 = vmatpush1.msra.mxu0 0.0
    %4645 = vmatprep.subr.mxu0 0.0
    %4646 = vmatpush1.msra.mxu0 0.0
    %4647 = vmatprep.subr.mxu0 0.0
    %4648 = vmatpush1.msra.mxu0 0.0
    %4649 = vmatprep.subr.mxu0 0.0
    %4650 = vmatpush1.msra.mxu0 0.0
    %4651 = vmatprep.subr.mxu0 0.0
    %4652 = vmatpush1.msra.mxu0 0.0
    %4653 = vmatprep.subr.mxu0 0.0
    %4654 = vmatpush1.msra.mxu0 0.0
    %4655 = vmatprep.subr.mxu0 0.0
    %4656 = vmatpush1.msra.mxu0 0.0
    %4657 = vmatprep.subr.mxu0 0.0
    %4658 = vmatpush1.msra.mxu0 0.0
    %4659 = vmatprep.subr.mxu0 0.0
    %4660 = vmatpush1.msra.mxu0 0.0
    %4661 = vmatprep.subr.mxu0 0.0
    %4662 = vmatpush1.msra.mxu0 0.0
    %4663 = vmatprep.subr.mxu0 0.0
    %4664 = vmatpush1.msra.mxu0 0.0
    %4665 = vmatprep.subr.mxu0 0.0
    %4666 = vmatpush1.msra.mxu0 0.0
    %4667 = vmatprep.subr.mxu0 0.0
    %4668 = vmatpush1.msra.mxu0 0.0
    %4669 = vmatprep.subr.mxu0 0.0
    %4670 = vmatpush1.msra.mxu0 0.0
    %4671 = vmatprep.subr.mxu0 0.0
    %4672 = vmatpush1.msra.mxu0 0.0
    %4673 = vmatprep.subr.mxu0 0.0
    %4674 = vmatpush1.msra.mxu0 0.0
    %4675 = vmatprep.mubr.f32.mxu0 0.0
    %4676 = vmatmul.mubr.f32.gmra.mrb[0].mxu0 %v4609
    %v4677 = vpop.f32.mrb[0].mxu0
    %v4678 = vadd.f32 %v4606, %v4677
    %v4679 = vpop.f32.mrb[0].mxu0
    %4680 = vdwg.mxu0
    %4681 = vmax.xlane.f32.xlu0 %v4678
    %v4682 = vpop.xlane.xlu0 %4681
    %v4683 = vsub.f32 %v4678, %v4682
    %v4684 = vmul.f32 %v4683, 1.442695
    %v4685 = vpow.pop %v4684
    %4686 = vadd.xlane.f32.xlu0 %v4685
    %v4687 = vpop.xlane.xlu0 %4686
    %v4688 = vlog2.pop %v4687
    %v4689 = vmul.f32 %v4688, 0.6931472
    %v4690 = vsub.f32 %v4683, %v4689
    %4691 = vst [vmem:[#allocation9] sm:$0xff] %v4690
    // Predicated region
    $region34: #{seq2seq_forward.1} parent=1 // pred_check
      _
    $region35: #{seq2seq_forward.1} parent=1 // pred_check_branch
      %4693 = sbr.rel (0) target = $region37
    $region36: #{seq2seq_forward.1} parent=1 // pred_region
      %s4695 = ssub.s32 128, 128
      %4696 = vsyncadd [#allocation4], %s4695
      %s4698 = sshll.u32 [#allocation9], 4
      %s4699 = int_to_ptr.vmem [resolvable:$true] %s4698
      %4701 = dma.vmem_to_hbm [thread:$0]  %s4699, 128, %s5, [#allocation4]
    $region37: #{seq2seq_forward.1} parent=1 // pred_fallthru
      _
    // Predicated region
    $region38: #{seq2seq_forward.1} parent=1 // pred_check
      _
    $region39: #{seq2seq_forward.1} parent=1 // pred_check_branch
      %4703 = sbr.rel (0) target = $region41
    $region40: #{seq2seq_forward.1} parent=1 // pred_region
      %4704 = dma.done [#allocation4], 128
    $region41: #{seq2seq_forward.1} parent=1 // pred_fallthru
      _
    %4705 = vsyncpa [#allocation3], 1
    %4706 = vsyncpa [#allocation4], 1
    %4707 = vsyncpa [#allocation5], 1
    %4708 = vsyncpa [#allocation7], 1

</llo_original>
